<compile_context>
chip_gen: v5e
topology: v5e:2x2
jax: 0.10.0
libtpu: 0.0.40
codegen_flags: <defaults>
</compile_context>

<pallas_src>
import jax
import jax.numpy as jnp
from jax.experimental import pallas as pl
from jax.experimental.pallas import tpu as pltpu


def _basic_block_kernel(x_ref, w1_ref, s1_ref, b1_ref, w2_ref, s2_ref, b2_ref,
                        o_ref, mid_ref):
    # x_ref  : (1, H+2, W+2, Cin)  spatially zero-padded input, NHWC, f32
    # w1_ref : (9, Cin, Cp)        conv1 taps, index = ky*3 + kx
    # w2_ref : (9, Cp,  Cp)        conv2 taps
    # s*/b*  : (1, Cp)             folded BatchNorm scale / bias
    # o_ref  : (1, H, W, Cp)       output block
    # mid_ref: (H+2, W+2, Cp)      VMEM scratch: padded conv1 activation
    _, hp2, wp2, cin = x_ref.shape
    H, W = hp2 - 2, wp2 - 2
    Cp = o_ref.shape[3]

    # ---- conv1 (3x3, stride 1, pad 1) as 9 shifted MXU matmuls -------------
    acc1 = jnp.zeros((H * W, Cp), jnp.float32)
    for t in range(9):
        dy, dx = t // 3, t % 3
        patch = x_ref[0, dy:dy + H, dx:dx + W, :].reshape(H * W, cin)
        acc1 += jnp.dot(patch, w1_ref[t], preferred_element_type=jnp.float32)

    # ---- BN1 (folded) + ReLU ------------------------------------------------
    h = jnp.maximum(acc1 * s1_ref[...] + b1_ref[...], 0.0)          # (H*W, Cp)

    # ---- stage zero-padded intermediate for conv2 ---------------------------
    mid_ref[...] = jnp.zeros(mid_ref.shape, mid_ref.dtype)
    mid_ref[1:H + 1, 1:W + 1, :] = h.reshape(H, W, Cp)

    # ---- conv2 ---------------------------------------------------------------
    acc2 = jnp.zeros((H * W, Cp), jnp.float32)
    for t in range(9):
        dy, dx = t // 3, t % 3
        patch = mid_ref[dy:dy + H, dx:dx + W, :].reshape(H * W, Cp)
        acc2 += jnp.dot(patch, w2_ref[t], preferred_element_type=jnp.float32)

    # ---- BN2 (folded) + residual add + ReLU ---------------------------------
    out = acc2 * s2_ref[...] + b2_ref[...]
    identity = x_ref[0, 1:H + 1, 1:W + 1, :].reshape(H * W, cin)
    out = jnp.maximum(out + identity, 0.0)

    o_ref[0] = out.reshape(H, W, Cp).astype(o_ref.dtype)


def basic_block(x_nchw, conv1_w, bn1, conv2_w, bn2, eps=1e-5):
    """BasicBlock forward (stride=1, no downsample), inference-mode BN.

    x_nchw  : (B, C, H, W) float32
    conv*_w : (Cout, Cin, 3, 3) PyTorch OIHW layout
    bn*     : dict(gamma, beta, mean, var), each shape (Cout,)
    """
    B, Cin, H, W = x_nchw.shape
    Cp = conv1_w.shape[0]
    assert conv1_w.shape == (Cp, Cin, 3, 3)
    assert conv2_w.shape == (Cp, Cp, 3, 3)
    assert Cin == Cp, "identity residual requires inplanes == planes"

    # NHWC + one-time spatial zero-pad (done in XLA, outside the kernel).
    x_nhwc = jnp.transpose(x_nchw, (0, 2, 3, 1))
    x_pad = jnp.pad(x_nhwc, ((0, 0), (1, 1), (1, 1), (0, 0)))

    # Conv taps: OIHW -> (ky*3+kx, Cin, Cout).
    w1 = jnp.transpose(conv1_w, (2, 3, 1, 0)).reshape(9, Cin, Cp)
    w2 = jnp.transpose(conv2_w, (2, 3, 1, 0)).reshape(9, Cp, Cp)

    # Fold inference BatchNorm into per-channel scale / bias.
    def fold(p):
        scale = p["gamma"] / jnp.sqrt(p["var"] + eps)
        bias = p["beta"] - p["mean"] * scale
        return (scale.reshape(1, Cp).astype(jnp.float32),
                bias.reshape(1, Cp).astype(jnp.float32))

    s1, b1 = fold(bn1)
    s2, b2 = fold(bn2)

    out_nhwc = pl.pallas_call(
        _basic_block_kernel,
        out_shape=jax.ShapeDtypeStruct((B, H, W, Cp), jnp.float32),
        grid_spec=pltpu.PrefetchScalarGridSpec(
            num_scalar_prefetch=0,
            grid=(B,),
            in_specs=[
                pl.BlockSpec((1, H + 2, W + 2, Cin), lambda b: (b, 0, 0, 0)),
                pl.BlockSpec((9, Cin, Cp), lambda b: (0, 0, 0)),
                pl.BlockSpec((1, Cp), lambda b: (0, 0)),
                pl.BlockSpec((1, Cp), lambda b: (0, 0)),
                pl.BlockSpec((9, Cp, Cp), lambda b: (0, 0, 0)),
                pl.BlockSpec((1, Cp), lambda b: (0, 0)),
                pl.BlockSpec((1, Cp), lambda b: (0, 0)),
            ],
            out_specs=pl.BlockSpec((1, H, W, Cp), lambda b: (b, 0, 0, 0)),
            scratch_shapes=[pltpu.VMEM((H + 2, W + 2, Cp), jnp.float32)],
        ),
        compiler_params=pltpu.CompilerParams(
            dimension_semantics=("parallel",)),
    )(x_pad, w1, s1, b1, w2, s2, b2)

    return jnp.transpose(out_nhwc, (0, 3, 1, 2))


def _reference(x, conv1_w, bn1, conv2_w, bn2, eps=1e-5):
    # Pure-JAX reference mirroring the PyTorch module (eval-mode BN).
    def conv(z, w):
        return jax.lax.conv_general_dilated(
            z, w, window_strides=(1, 1), padding=((1, 1), (1, 1)),
            dimension_numbers=("NCHW", "OIHW", "NCHW"))

    def bn(z, p):
        g = p["gamma"][None, :, None, None]
        b = p["beta"][None, :, None, None]
        m = p["mean"][None, :, None, None]
        v = p["var"][None, :, None, None]
        return (z - m) / jnp.sqrt(v + eps) * g + b

    out = jax.nn.relu(bn(conv(x, conv1_w), bn1))
    out = bn(conv(out, conv2_w), bn2)
    return jax.nn.relu(out + x)


if __name__ == "__main__":
    B, C, H, W = 2, 4, 16, 16
    key = jax.random.PRNGKey(0)
    ks = jax.random.split(key, 11)

    x = jax.random.normal(ks[0], (B, C, H, W), dtype=jnp.float32)
    conv1_w = jax.random.normal(ks[1], (C, C, 3, 3), dtype=jnp.float32) * 0.2
    conv2_w = jax.random.normal(ks[2], (C, C, 3, 3), dtype=jnp.float32) * 0.2
    bn1 = dict(
        gamma=jax.random.uniform(ks[3], (C,), jnp.float32, 0.5, 1.5),
        beta=jax.random.normal(ks[4], (C,), dtype=jnp.float32) * 0.1,
        mean=jax.random.normal(ks[5], (C,), dtype=jnp.float32) * 0.1,
        var=jax.random.uniform(ks[6], (C,), jnp.float32, 0.5, 1.5),
    )
    bn2 = dict(
        gamma=jax.random.uniform(ks[7], (C,), jnp.float32, 0.5, 1.5),
        beta=jax.random.normal(ks[8], (C,), dtype=jnp.float32) * 0.1,
        mean=jax.random.normal(ks[9], (C,), dtype=jnp.float32) * 0.1,
        var=jax.random.uniform(ks[10], (C,), jnp.float32, 0.5, 1.5),
    )

    y = basic_block(x, conv1_w, bn1, conv2_w, bn2)
    y = jax.block_until_ready(y)

    y_ref = _reference(x, conv1_w, bn1, conv2_w, bn2)
    assert y.shape == (B, C, H, W)
    err = float(jnp.max(jnp.abs(y - y_ref)))
    assert jnp.allclose(y, y_ref, atol=1e-4, rtol=1e-4), (
        "mismatch vs reference: max abs err = %e" % err)

    print("KERNEL_OK")
</pallas_src>

<mosaic_0001>
module attributes {stable_mosaic.version = 11 : i64} {
  func.func @_basic_block_kernel(%arg0: i32, %arg1: memref<1x18x18x4xf32, #tpu.memory_space<vmem>>, %arg2: memref<9x4x4xf32, #tpu.memory_space<vmem>>, %arg3: memref<1x4xf32, #tpu.memory_space<vmem>>, %arg4: memref<1x4xf32, #tpu.memory_space<vmem>>, %arg5: memref<9x4x4xf32, #tpu.memory_space<vmem>>, %arg6: memref<1x4xf32, #tpu.memory_space<vmem>>, %arg7: memref<1x4xf32, #tpu.memory_space<vmem>>, %arg8: memref<1x16x16x4xf32, #tpu.memory_space<vmem>>, %arg9: memref<18x18x4xf32, #tpu.memory_space<vmem>>) attributes {dimension_semantics = [#tpu.dimension_semantics<parallel>], iteration_bounds = array<i64: 2>, scalar_prefetch = 0 : i64, scratch_operands = 1 : i64, tpu.core_type = #tpu.core_type<tc>, window_params = [{transform_indices = @transform_0, window_bounds = array<i64: 1, 18, 18, 4>}, {pipeline_mode = #tpu.pipeline_mode<synchronous>, transform_indices = @transform_1, window_bounds = array<i64: 9, 4, 4>}, {pipeline_mode = #tpu.pipeline_mode<synchronous>, transform_indices = @transform_2, window_bounds = array<i64: 1, 4>}, {pipeline_mode = #tpu.pipeline_mode<synchronous>, transform_indices = @transform_3, window_bounds = array<i64: 1, 4>}, {pipeline_mode = #tpu.pipeline_mode<synchronous>, transform_indices = @transform_4, window_bounds = array<i64: 9, 4, 4>}, {pipeline_mode = #tpu.pipeline_mode<synchronous>, transform_indices = @transform_5, window_bounds = array<i64: 1, 4>}, {pipeline_mode = #tpu.pipeline_mode<synchronous>, transform_indices = @transform_6, window_bounds = array<i64: 1, 4>}, {transform_indices = @transform_7, window_bounds = array<i64: 1, 16, 16, 4>}]} {
    %cst = arith.constant 0.000000e+00 : f32
    %0 = vector.broadcast %cst : f32 to vector<256x4xf32>
    %c0 = arith.constant 0 : index
    %c0_0 = arith.constant 0 : index
    %c0_1 = arith.constant 0 : index
    %c0_2 = arith.constant 0 : index
    %1 = vector.load %arg1[%c0, %c0_0, %c0_1, %c0_2] : memref<1x18x18x4xf32, #tpu.memory_space<vmem>>, vector<1x16x16x4xf32>
    %2 = vector.shape_cast %1 : vector<1x16x16x4xf32> to vector<16x16x4xf32>
    %3 = vector.shape_cast %2 : vector<16x16x4xf32> to vector<256x4xf32>
    %c0_3 = arith.constant 0 : index
    %c0_4 = arith.constant 0 : index
    %c0_5 = arith.constant 0 : index
    %4 = vector.load %arg2[%c0_3, %c0_4, %c0_5] : memref<9x4x4xf32, #tpu.memory_space<vmem>>, vector<1x4x4xf32>
    %5 = vector.shape_cast %4 : vector<1x4x4xf32> to vector<4x4xf32>
    %cst_6 = arith.constant dense<0.000000e+00> : vector<256x4xf32>
    %6 = tpu.matmul %3, %5, %cst_6 {dimension_numbers = #tpu.dot_dimension_numbers<[1], [0], [0], [1], [0, 0, 1, 1], [], []>} : vector<256x4xf32>, vector<4x4xf32>, vector<256x4xf32> -> vector<256x4xf32>
    %7 = arith.addf %0, %6 : vector<256x4xf32>
    %c0_7 = arith.constant 0 : index
    %c0_8 = arith.constant 0 : index
    %c1 = arith.constant 1 : index
    %c0_9 = arith.constant 0 : index
    %8 = vector.load %arg1[%c0_7, %c0_8, %c1, %c0_9] : memref<1x18x18x4xf32, #tpu.memory_space<vmem>>, vector<1x16x16x4xf32>
    %9 = vector.shape_cast %8 : vector<1x16x16x4xf32> to vector<16x16x4xf32>
    %10 = vector.shape_cast %9 : vector<16x16x4xf32> to vector<256x4xf32>
    %c1_10 = arith.constant 1 : index
    %c0_11 = arith.constant 0 : index
    %c0_12 = arith.constant 0 : index
    %11 = vector.load %arg2[%c1_10, %c0_11, %c0_12] : memref<9x4x4xf32, #tpu.memory_space<vmem>>, vector<1x4x4xf32>
    %12 = vector.shape_cast %11 : vector<1x4x4xf32> to vector<4x4xf32>
    %cst_13 = arith.constant dense<0.000000e+00> : vector<256x4xf32>
    %13 = tpu.matmul %10, %12, %cst_13 {dimension_numbers = #tpu.dot_dimension_numbers<[1], [0], [0], [1], [0, 0, 1, 1], [], []>} : vector<256x4xf32>, vector<4x4xf32>, vector<256x4xf32> -> vector<256x4xf32>
    %14 = arith.addf %7, %13 : vector<256x4xf32>
    %c0_14 = arith.constant 0 : index
    %c0_15 = arith.constant 0 : index
    %c2 = arith.constant 2 : index
    %c0_16 = arith.constant 0 : index
    %15 = vector.load %arg1[%c0_14, %c0_15, %c2, %c0_16] : memref<1x18x18x4xf32, #tpu.memory_space<vmem>>, vector<1x16x16x4xf32>
    %16 = vector.shape_cast %15 : vector<1x16x16x4xf32> to vector<16x16x4xf32>
    %17 = vector.shape_cast %16 : vector<16x16x4xf32> to vector<256x4xf32>
    %c2_17 = arith.constant 2 : index
    %c0_18 = arith.constant 0 : index
    %c0_19 = arith.constant 0 : index
    %18 = vector.load %arg2[%c2_17, %c0_18, %c0_19] : memref<9x4x4xf32, #tpu.memory_space<vmem>>, vector<1x4x4xf32>
    %19 = vector.shape_cast %18 : vector<1x4x4xf32> to vector<4x4xf32>
    %cst_20 = arith.constant dense<0.000000e+00> : vector<256x4xf32>
    %20 = tpu.matmul %17, %19, %cst_20 {dimension_numbers = #tpu.dot_dimension_numbers<[1], [0], [0], [1], [0, 0, 1, 1], [], []>} : vector<256x4xf32>, vector<4x4xf32>, vector<256x4xf32> -> vector<256x4xf32>
    %21 = arith.addf %14, %20 : vector<256x4xf32>
    %c0_21 = arith.constant 0 : index
    %c1_22 = arith.constant 1 : index
    %c0_23 = arith.constant 0 : index
    %c0_24 = arith.constant 0 : index
    %22 = vector.load %arg1[%c0_21, %c1_22, %c0_23, %c0_24] : memref<1x18x18x4xf32, #tpu.memory_space<vmem>>, vector<1x16x16x4xf32>
    %23 = vector.shape_cast %22 : vector<1x16x16x4xf32> to vector<16x16x4xf32>
    %24 = vector.shape_cast %23 : vector<16x16x4xf32> to vector<256x4xf32>
    %c3 = arith.constant 3 : index
    %c0_25 = arith.constant 0 : index
    %c0_26 = arith.constant 0 : index
    %25 = vector.load %arg2[%c3, %c0_25, %c0_26] : memref<9x4x4xf32, #tpu.memory_space<vmem>>, vector<1x4x4xf32>
    %26 = vector.shape_cast %25 : vector<1x4x4xf32> to vector<4x4xf32>
    %cst_27 = arith.constant dense<0.000000e+00> : vector<256x4xf32>
    %27 = tpu.matmul %24, %26, %cst_27 {dimension_numbers = #tpu.dot_dimension_numbers<[1], [0], [0], [1], [0, 0, 1, 1], [], []>} : vector<256x4xf32>, vector<4x4xf32>, vector<256x4xf32> -> vector<256x4xf32>
    %28 = arith.addf %21, %27 : vector<256x4xf32>
    %c0_28 = arith.constant 0 : index
    %c1_29 = arith.constant 1 : index
    %c1_30 = arith.constant 1 : index
    %c0_31 = arith.constant 0 : index
    %29 = vector.load %arg1[%c0_28, %c1_29, %c1_30, %c0_31] : memref<1x18x18x4xf32, #tpu.memory_space<vmem>>, vector<1x16x16x4xf32>
    %30 = vector.shape_cast %29 : vector<1x16x16x4xf32> to vector<16x16x4xf32>
    %31 = vector.shape_cast %30 : vector<16x16x4xf32> to vector<256x4xf32>
    %c4 = arith.constant 4 : index
    %c0_32 = arith.constant 0 : index
    %c0_33 = arith.constant 0 : index
    %32 = vector.load %arg2[%c4, %c0_32, %c0_33] : memref<9x4x4xf32, #tpu.memory_space<vmem>>, vector<1x4x4xf32>
    %33 = vector.shape_cast %32 : vector<1x4x4xf32> to vector<4x4xf32>
    %cst_34 = arith.constant dense<0.000000e+00> : vector<256x4xf32>
    %34 = tpu.matmul %31, %33, %cst_34 {dimension_numbers = #tpu.dot_dimension_numbers<[1], [0], [0], [1], [0, 0, 1, 1], [], []>} : vector<256x4xf32>, vector<4x4xf32>, vector<256x4xf32> -> vector<256x4xf32>
    %35 = arith.addf %28, %34 : vector<256x4xf32>
    %c0_35 = arith.constant 0 : index
    %c1_36 = arith.constant 1 : index
    %c2_37 = arith.constant 2 : index
    %c0_38 = arith.constant 0 : index
    %36 = vector.load %arg1[%c0_35, %c1_36, %c2_37, %c0_38] : memref<1x18x18x4xf32, #tpu.memory_space<vmem>>, vector<1x16x16x4xf32>
    %37 = vector.shape_cast %36 : vector<1x16x16x4xf32> to vector<16x16x4xf32>
    %38 = vector.shape_cast %37 : vector<16x16x4xf32> to vector<256x4xf32>
    %c5 = arith.constant 5 : index
    %c0_39 = arith.constant 0 : index
    %c0_40 = arith.constant 0 : index
    %39 = vector.load %arg2[%c5, %c0_39, %c0_40] : memref<9x4x4xf32, #tpu.memory_space<vmem>>, vector<1x4x4xf32>
    %40 = vector.shape_cast %39 : vector<1x4x4xf32> to vector<4x4xf32>
    %cst_41 = arith.constant dense<0.000000e+00> : vector<256x4xf32>
    %41 = tpu.matmul %38, %40, %cst_41 {dimension_numbers = #tpu.dot_dimension_numbers<[1], [0], [0], [1], [0, 0, 1, 1], [], []>} : vector<256x4xf32>, vector<4x4xf32>, vector<256x4xf32> -> vector<256x4xf32>
    %42 = arith.addf %35, %41 : vector<256x4xf32>
    %c0_42 = arith.constant 0 : index
    %c2_43 = arith.constant 2 : index
    %c0_44 = arith.constant 0 : index
    %c0_45 = arith.constant 0 : index
    %43 = vector.load %arg1[%c0_42, %c2_43, %c0_44, %c0_45] : memref<1x18x18x4xf32, #tpu.memory_space<vmem>>, vector<1x16x16x4xf32>
    %44 = vector.shape_cast %43 : vector<1x16x16x4xf32> to vector<16x16x4xf32>
    %45 = vector.shape_cast %44 : vector<16x16x4xf32> to vector<256x4xf32>
    %c6 = arith.constant 6 : index
    %c0_46 = arith.constant 0 : index
    %c0_47 = arith.constant 0 : index
    %46 = vector.load %arg2[%c6, %c0_46, %c0_47] : memref<9x4x4xf32, #tpu.memory_space<vmem>>, vector<1x4x4xf32>
    %47 = vector.shape_cast %46 : vector<1x4x4xf32> to vector<4x4xf32>
    %cst_48 = arith.constant dense<0.000000e+00> : vector<256x4xf32>
    %48 = tpu.matmul %45, %47, %cst_48 {dimension_numbers = #tpu.dot_dimension_numbers<[1], [0], [0], [1], [0, 0, 1, 1], [], []>} : vector<256x4xf32>, vector<4x4xf32>, vector<256x4xf32> -> vector<256x4xf32>
    %49 = arith.addf %42, %48 : vector<256x4xf32>
    %c0_49 = arith.constant 0 : index
    %c2_50 = arith.constant 2 : index
    %c1_51 = arith.constant 1 : index
    %c0_52 = arith.constant 0 : index
    %50 = vector.load %arg1[%c0_49, %c2_50, %c1_51, %c0_52] : memref<1x18x18x4xf32, #tpu.memory_space<vmem>>, vector<1x16x16x4xf32>
    %51 = vector.shape_cast %50 : vector<1x16x16x4xf32> to vector<16x16x4xf32>
    %52 = vector.shape_cast %51 : vector<16x16x4xf32> to vector<256x4xf32>
    %c7 = arith.constant 7 : index
    %c0_53 = arith.constant 0 : index
    %c0_54 = arith.constant 0 : index
    %53 = vector.load %arg2[%c7, %c0_53, %c0_54] : memref<9x4x4xf32, #tpu.memory_space<vmem>>, vector<1x4x4xf32>
    %54 = vector.shape_cast %53 : vector<1x4x4xf32> to vector<4x4xf32>
    %cst_55 = arith.constant dense<0.000000e+00> : vector<256x4xf32>
    %55 = tpu.matmul %52, %54, %cst_55 {dimension_numbers = #tpu.dot_dimension_numbers<[1], [0], [0], [1], [0, 0, 1, 1], [], []>} : vector<256x4xf32>, vector<4x4xf32>, vector<256x4xf32> -> vector<256x4xf32>
    %56 = arith.addf %49, %55 : vector<256x4xf32>
    %c0_56 = arith.constant 0 : index
    %c2_57 = arith.constant 2 : index
    %c2_58 = arith.constant 2 : index
    %c0_59 = arith.constant 0 : index
    %57 = vector.load %arg1[%c0_56, %c2_57, %c2_58, %c0_59] : memref<1x18x18x4xf32, #tpu.memory_space<vmem>>, vector<1x16x16x4xf32>
    %58 = vector.shape_cast %57 : vector<1x16x16x4xf32> to vector<16x16x4xf32>
    %59 = vector.shape_cast %58 : vector<16x16x4xf32> to vector<256x4xf32>
    %c8 = arith.constant 8 : index
    %c0_60 = arith.constant 0 : index
    %c0_61 = arith.constant 0 : index
    %60 = vector.load %arg2[%c8, %c0_60, %c0_61] : memref<9x4x4xf32, #tpu.memory_space<vmem>>, vector<1x4x4xf32>
    %61 = vector.shape_cast %60 : vector<1x4x4xf32> to vector<4x4xf32>
    %cst_62 = arith.constant dense<0.000000e+00> : vector<256x4xf32>
    %62 = tpu.matmul %59, %61, %cst_62 {dimension_numbers = #tpu.dot_dimension_numbers<[1], [0], [0], [1], [0, 0, 1, 1], [], []>} : vector<256x4xf32>, vector<4x4xf32>, vector<256x4xf32> -> vector<256x4xf32>
    %63 = arith.addf %56, %62 : vector<256x4xf32>
    %c0_63 = arith.constant 0 : index
    %c0_64 = arith.constant 0 : index
    %64 = vector.load %arg3[%c0_63, %c0_64] : memref<1x4xf32, #tpu.memory_space<vmem>>, vector<1x4xf32>
    %65 = vector.broadcast %64 : vector<1x4xf32> to vector<256x4xf32>
    %66 = arith.mulf %63, %65 : vector<256x4xf32>
    %c0_65 = arith.constant 0 : index
    %c0_66 = arith.constant 0 : index
    %67 = vector.load %arg4[%c0_65, %c0_66] : memref<1x4xf32, #tpu.memory_space<vmem>>, vector<1x4xf32>
    %68 = vector.broadcast %67 : vector<1x4xf32> to vector<256x4xf32>
    %69 = arith.addf %66, %68 : vector<256x4xf32>
    %cst_67 = arith.constant 0.000000e+00 : f32
    %70 = vector.broadcast %cst_67 : f32 to vector<256x4xf32>
    %71 = arith.maximumf %69, %70 : vector<256x4xf32>
    %cst_68 = arith.constant 0.000000e+00 : f32
    %72 = vector.broadcast %cst_68 : f32 to vector<18x18x4xf32>
    %c0_69 = arith.constant 0 : index
    %c0_70 = arith.constant 0 : index
    %c0_71 = arith.constant 0 : index
    %73 = vector.load %arg9[%c0_69, %c0_70, %c0_71] : memref<18x18x4xf32, #tpu.memory_space<vmem>>, vector<18x18x4xf32>
    tpu.vector_store %arg9[%c0_69, %c0_70, %c0_71], %72 {strides = array<i32>} : memref<18x18x4xf32, #tpu.memory_space<vmem>>, vector<18x18x4xf32>,
    %74 = vector.shape_cast %71 : vector<256x4xf32> to vector<16x16x4xf32>
    %c1_72 = arith.constant 1 : index
    %c1_73 = arith.constant 1 : index
    %c0_74 = arith.constant 0 : index
    %75 = vector.load %arg9[%c1_72, %c1_73, %c0_74] : memref<18x18x4xf32, #tpu.memory_space<vmem>>, vector<16x16x4xf32>
    tpu.vector_store %arg9[%c1_72, %c1_73, %c0_74], %74 {strides = array<i32>} : memref<18x18x4xf32, #tpu.memory_space<vmem>>, vector<16x16x4xf32>,
    %cst_75 = arith.constant 0.000000e+00 : f32
    %76 = vector.broadcast %cst_75 : f32 to vector<256x4xf32>
    %c0_76 = arith.constant 0 : index
    %c0_77 = arith.constant 0 : index
    %c0_78 = arith.constant 0 : index
    %77 = vector.load %arg9[%c0_76, %c0_77, %c0_78] : memref<18x18x4xf32, #tpu.memory_space<vmem>>, vector<16x16x4xf32>
    %78 = vector.shape_cast %77 : vector<16x16x4xf32> to vector<256x4xf32>
    %c0_79 = arith.constant 0 : index
    %c0_80 = arith.constant 0 : index
    %c0_81 = arith.constant 0 : index
    %79 = vector.load %arg5[%c0_79, %c0_80, %c0_81] : memref<9x4x4xf32, #tpu.memory_space<vmem>>, vector<1x4x4xf32>
    %80 = vector.shape_cast %79 : vector<1x4x4xf32> to vector<4x4xf32>
    %cst_82 = arith.constant dense<0.000000e+00> : vector<256x4xf32>
    %81 = tpu.matmul %78, %80, %cst_82 {dimension_numbers = #tpu.dot_dimension_numbers<[1], [0], [0], [1], [0, 0, 1, 1], [], []>} : vector<256x4xf32>, vector<4x4xf32>, vector<256x4xf32> -> vector<256x4xf32>
    %82 = arith.addf %76, %81 : vector<256x4xf32>
    %c0_83 = arith.constant 0 : index
    %c1_84 = arith.constant 1 : index
    %c0_85 = arith.constant 0 : index
    %83 = vector.load %arg9[%c0_83, %c1_84, %c0_85] : memref<18x18x4xf32, #tpu.memory_space<vmem>>, vector<16x16x4xf32>
    %84 = vector.shape_cast %83 : vector<16x16x4xf32> to vector<256x4xf32>
    %c1_86 = arith.constant 1 : index
    %c0_87 = arith.constant 0 : index
    %c0_88 = arith.constant 0 : index
    %85 = vector.load %arg5[%c1_86, %c0_87, %c0_88] : memref<9x4x4xf32, #tpu.memory_space<vmem>>, vector<1x4x4xf32>
    %86 = vector.shape_cast %85 : vector<1x4x4xf32> to vector<4x4xf32>
    %cst_89 = arith.constant dense<0.000000e+00> : vector<256x4xf32>
    %87 = tpu.matmul %84, %86, %cst_89 {dimension_numbers = #tpu.dot_dimension_numbers<[1], [0], [0], [1], [0, 0, 1, 1], [], []>} : vector<256x4xf32>, vector<4x4xf32>, vector<256x4xf32> -> vector<256x4xf32>
    %88 = arith.addf %82, %87 : vector<256x4xf32>
    %c0_90 = arith.constant 0 : index
    %c2_91 = arith.constant 2 : index
    %c0_92 = arith.constant 0 : index
    %89 = vector.load %arg9[%c0_90, %c2_91, %c0_92] : memref<18x18x4xf32, #tpu.memory_space<vmem>>, vector<16x16x4xf32>
    %90 = vector.shape_cast %89 : vector<16x16x4xf32> to vector<256x4xf32>
    %c2_93 = arith.constant 2 : index
    %c0_94 = arith.constant 0 : index
    %c0_95 = arith.constant 0 : index
    %91 = vector.load %arg5[%c2_93, %c0_94, %c0_95] : memref<9x4x4xf32, #tpu.memory_space<vmem>>, vector<1x4x4xf32>
    %92 = vector.shape_cast %91 : vector<1x4x4xf32> to vector<4x4xf32>
    %cst_96 = arith.constant dense<0.000000e+00> : vector<256x4xf32>
    %93 = tpu.matmul %90, %92, %cst_96 {dimension_numbers = #tpu.dot_dimension_numbers<[1], [0], [0], [1], [0, 0, 1, 1], [], []>} : vector<256x4xf32>, vector<4x4xf32>, vector<256x4xf32> -> vector<256x4xf32>
    %94 = arith.addf %88, %93 : vector<256x4xf32>
    %c1_97 = arith.constant 1 : index
    %c0_98 = arith.constant 0 : index
    %c0_99 = arith.constant 0 : index
    %95 = vector.load %arg9[%c1_97, %c0_98, %c0_99] : memref<18x18x4xf32, #tpu.memory_space<vmem>>, vector<16x16x4xf32>
    %96 = vector.shape_cast %95 : vector<16x16x4xf32> to vector<256x4xf32>
    %c3_100 = arith.constant 3 : index
    %c0_101 = arith.constant 0 : index
    %c0_102 = arith.constant 0 : index
    %97 = vector.load %arg5[%c3_100, %c0_101, %c0_102] : memref<9x4x4xf32, #tpu.memory_space<vmem>>, vector<1x4x4xf32>
    %98 = vector.shape_cast %97 : vector<1x4x4xf32> to vector<4x4xf32>
    %cst_103 = arith.constant dense<0.000000e+00> : vector<256x4xf32>
    %99 = tpu.matmul %96, %98, %cst_103 {dimension_numbers = #tpu.dot_dimension_numbers<[1], [0], [0], [1], [0, 0, 1, 1], [], []>} : vector<256x4xf32>, vector<4x4xf32>, vector<256x4xf32> -> vector<256x4xf32>
    %100 = arith.addf %94, %99 : vector<256x4xf32>
    %c1_104 = arith.constant 1 : index
    %c1_105 = arith.constant 1 : index
    %c0_106 = arith.constant 0 : index
    %101 = vector.load %arg9[%c1_104, %c1_105, %c0_106] : memref<18x18x4xf32, #tpu.memory_space<vmem>>, vector<16x16x4xf32>
    %102 = vector.shape_cast %101 : vector<16x16x4xf32> to vector<256x4xf32>
    %c4_107 = arith.constant 4 : index
    %c0_108 = arith.constant 0 : index
    %c0_109 = arith.constant 0 : index
    %103 = vector.load %arg5[%c4_107, %c0_108, %c0_109] : memref<9x4x4xf32, #tpu.memory_space<vmem>>, vector<1x4x4xf32>
    %104 = vector.shape_cast %103 : vector<1x4x4xf32> to vector<4x4xf32>
    %cst_110 = arith.constant dense<0.000000e+00> : vector<256x4xf32>
    %105 = tpu.matmul %102, %104, %cst_110 {dimension_numbers = #tpu.dot_dimension_numbers<[1], [0], [0], [1], [0, 0, 1, 1], [], []>} : vector<256x4xf32>, vector<4x4xf32>, vector<256x4xf32> -> vector<256x4xf32>
    %106 = arith.addf %100, %105 : vector<256x4xf32>
    %c1_111 = arith.constant 1 : index
    %c2_112 = arith.constant 2 : index
    %c0_113 = arith.constant 0 : index
    %107 = vector.load %arg9[%c1_111, %c2_112, %c0_113] : memref<18x18x4xf32, #tpu.memory_space<vmem>>, vector<16x16x4xf32>
    %108 = vector.shape_cast %107 : vector<16x16x4xf32> to vector<256x4xf32>
    %c5_114 = arith.constant 5 : index
    %c0_115 = arith.constant 0 : index
    %c0_116 = arith.constant 0 : index
    %109 = vector.load %arg5[%c5_114, %c0_115, %c0_116] : memref<9x4x4xf32, #tpu.memory_space<vmem>>, vector<1x4x4xf32>
    %110 = vector.shape_cast %109 : vector<1x4x4xf32> to vector<4x4xf32>
    %cst_117 = arith.constant dense<0.000000e+00> : vector<256x4xf32>
    %111 = tpu.matmul %108, %110, %cst_117 {dimension_numbers = #tpu.dot_dimension_numbers<[1], [0], [0], [1], [0, 0, 1, 1], [], []>} : vector<256x4xf32>, vector<4x4xf32>, vector<256x4xf32> -> vector<256x4xf32>
    %112 = arith.addf %106, %111 : vector<256x4xf32>
    %c2_118 = arith.constant 2 : index
    %c0_119 = arith.constant 0 : index
    %c0_120 = arith.constant 0 : index
    %113 = vector.load %arg9[%c2_118, %c0_119, %c0_120] : memref<18x18x4xf32, #tpu.memory_space<vmem>>, vector<16x16x4xf32>
    %114 = vector.shape_cast %113 : vector<16x16x4xf32> to vector<256x4xf32>
    %c6_121 = arith.constant 6 : index
    %c0_122 = arith.constant 0 : index
    %c0_123 = arith.constant 0 : index
    %115 = vector.load %arg5[%c6_121, %c0_122, %c0_123] : memref<9x4x4xf32, #tpu.memory_space<vmem>>, vector<1x4x4xf32>
    %116 = vector.shape_cast %115 : vector<1x4x4xf32> to vector<4x4xf32>
    %cst_124 = arith.constant dense<0.000000e+00> : vector<256x4xf32>
    %117 = tpu.matmul %114, %116, %cst_124 {dimension_numbers = #tpu.dot_dimension_numbers<[1], [0], [0], [1], [0, 0, 1, 1], [], []>} : vector<256x4xf32>, vector<4x4xf32>, vector<256x4xf32> -> vector<256x4xf32>
    %118 = arith.addf %112, %117 : vector<256x4xf32>
    %c2_125 = arith.constant 2 : index
    %c1_126 = arith.constant 1 : index
    %c0_127 = arith.constant 0 : index
    %119 = vector.load %arg9[%c2_125, %c1_126, %c0_127] : memref<18x18x4xf32, #tpu.memory_space<vmem>>, vector<16x16x4xf32>
    %120 = vector.shape_cast %119 : vector<16x16x4xf32> to vector<256x4xf32>
    %c7_128 = arith.constant 7 : index
    %c0_129 = arith.constant 0 : index
    %c0_130 = arith.constant 0 : index
    %121 = vector.load %arg5[%c7_128, %c0_129, %c0_130] : memref<9x4x4xf32, #tpu.memory_space<vmem>>, vector<1x4x4xf32>
    %122 = vector.shape_cast %121 : vector<1x4x4xf32> to vector<4x4xf32>
    %cst_131 = arith.constant dense<0.000000e+00> : vector<256x4xf32>
    %123 = tpu.matmul %120, %122, %cst_131 {dimension_numbers = #tpu.dot_dimension_numbers<[1], [0], [0], [1], [0, 0, 1, 1], [], []>} : vector<256x4xf32>, vector<4x4xf32>, vector<256x4xf32> -> vector<256x4xf32>
    %124 = arith.addf %118, %123 : vector<256x4xf32>
    %c2_132 = arith.constant 2 : index
    %c2_133 = arith.constant 2 : index
    %c0_134 = arith.constant 0 : index
    %125 = vector.load %arg9[%c2_132, %c2_133, %c0_134] : memref<18x18x4xf32, #tpu.memory_space<vmem>>, vector<16x16x4xf32>
    %126 = vector.shape_cast %125 : vector<16x16x4xf32> to vector<256x4xf32>
    %c8_135 = arith.constant 8 : index
    %c0_136 = arith.constant 0 : index
    %c0_137 = arith.constant 0 : index
    %127 = vector.load %arg5[%c8_135, %c0_136, %c0_137] : memref<9x4x4xf32, #tpu.memory_space<vmem>>, vector<1x4x4xf32>
    %128 = vector.shape_cast %127 : vector<1x4x4xf32> to vector<4x4xf32>
    %cst_138 = arith.constant dense<0.000000e+00> : vector<256x4xf32>
    %129 = tpu.matmul %126, %128, %cst_138 {dimension_numbers = #tpu.dot_dimension_numbers<[1], [0], [0], [1], [0, 0, 1, 1], [], []>} : vector<256x4xf32>, vector<4x4xf32>, vector<256x4xf32> -> vector<256x4xf32>
    %130 = arith.addf %124, %129 : vector<256x4xf32>
    %c0_139 = arith.constant 0 : index
    %c0_140 = arith.constant 0 : index
    %131 = vector.load %arg6[%c0_139, %c0_140] : memref<1x4xf32, #tpu.memory_space<vmem>>, vector<1x4xf32>
    %132 = vector.broadcast %131 : vector<1x4xf32> to vector<256x4xf32>
    %133 = arith.mulf %130, %132 : vector<256x4xf32>
    %c0_141 = arith.constant 0 : index
    %c0_142 = arith.constant 0 : index
    %134 = vector.load %arg7[%c0_141, %c0_142] : memref<1x4xf32, #tpu.memory_space<vmem>>, vector<1x4xf32>
    %135 = vector.broadcast %134 : vector<1x4xf32> to vector<256x4xf32>
    %136 = arith.addf %133, %135 : vector<256x4xf32>
    %c0_143 = arith.constant 0 : index
    %c1_144 = arith.constant 1 : index
    %c1_145 = arith.constant 1 : index
    %c0_146 = arith.constant 0 : index
    %137 = vector.load %arg1[%c0_143, %c1_144, %c1_145, %c0_146] : memref<1x18x18x4xf32, #tpu.memory_space<vmem>>, vector<1x16x16x4xf32>
    %138 = vector.shape_cast %137 : vector<1x16x16x4xf32> to vector<16x16x4xf32>
    %139 = vector.shape_cast %138 : vector<16x16x4xf32> to vector<256x4xf32>
    %140 = arith.addf %136, %139 : vector<256x4xf32>
    %cst_147 = arith.constant 0.000000e+00 : f32
    %141 = vector.broadcast %cst_147 : f32 to vector<256x4xf32>
    %142 = arith.maximumf %140, %141 : vector<256x4xf32>
    %143 = vector.shape_cast %142 : vector<256x4xf32> to vector<16x16x4xf32>
    %c0_148 = arith.constant 0 : index
    %c0_149 = arith.constant 0 : index
    %c0_150 = arith.constant 0 : index
    %c0_151 = arith.constant 0 : index
    %144 = vector.load %arg8[%c0_148, %c0_149, %c0_150, %c0_151] : memref<1x16x16x4xf32, #tpu.memory_space<vmem>>, vector<1x16x16x4xf32>
    %145 = vector.shape_cast %144 : vector<1x16x16x4xf32> to vector<16x16x4xf32>
    %146 = vector.shape_cast %143 : vector<16x16x4xf32> to vector<1x16x16x4xf32>
    tpu.vector_store %arg8[%c0_148, %c0_149, %c0_150, %c0_151], %146 {strides = array<i32>} : memref<1x16x16x4xf32, #tpu.memory_space<vmem>>, vector<1x16x16x4xf32>,
    return
  }
  func.func @transform_0(%arg0: i32) -> (i32, i32, i32, i32) {
    %c0_i32 = arith.constant 0 : i32
    %c0_i32_0 = arith.constant 0 : i32
    %c0_i32_1 = arith.constant 0 : i32
    %c0_i32_2 = arith.constant 0 : i32
    return %arg0, %c0_i32, %c0_i32_0, %c0_i32_1 : i32, i32, i32, i32
  }
  func.func @transform_1(%arg0: i32) -> (i32, i32, i32) {
    %c0_i32 = arith.constant 0 : i32
    %c0_i32_0 = arith.constant 0 : i32
    %c0_i32_1 = arith.constant 0 : i32
    %c0_i32_2 = arith.constant 0 : i32
    return %c0_i32, %c0_i32_0, %c0_i32_1 : i32, i32, i32
  }
  func.func @transform_2(%arg0: i32) -> (i32, i32) {
    %c0_i32 = arith.constant 0 : i32
    %c0_i32_0 = arith.constant 0 : i32
    %c0_i32_1 = arith.constant 0 : i32
    return %c0_i32, %c0_i32_0 : i32, i32
  }
  func.func @transform_3(%arg0: i32) -> (i32, i32) {
    %c0_i32 = arith.constant 0 : i32
    %c0_i32_0 = arith.constant 0 : i32
    %c0_i32_1 = arith.constant 0 : i32
    return %c0_i32, %c0_i32_0 : i32, i32
  }
  func.func @transform_4(%arg0: i32) -> (i32, i32, i32) {
    %c0_i32 = arith.constant 0 : i32
    %c0_i32_0 = arith.constant 0 : i32
    %c0_i32_1 = arith.constant 0 : i32
    %c0_i32_2 = arith.constant 0 : i32
    return %c0_i32, %c0_i32_0, %c0_i32_1 : i32, i32, i32
  }
  func.func @transform_5(%arg0: i32) -> (i32, i32) {
    %c0_i32 = arith.constant 0 : i32
    %c0_i32_0 = arith.constant 0 : i32
    %c0_i32_1 = arith.constant 0 : i32
    return %c0_i32, %c0_i32_0 : i32, i32
  }
  func.func @transform_6(%arg0: i32) -> (i32, i32) {
    %c0_i32 = arith.constant 0 : i32
    %c0_i32_0 = arith.constant 0 : i32
    %c0_i32_1 = arith.constant 0 : i32
    return %c0_i32, %c0_i32_0 : i32, i32
  }
  func.func @transform_7(%arg0: i32) -> (i32, i32, i32, i32) {
    %c0_i32 = arith.constant 0 : i32
    %c0_i32_0 = arith.constant 0 : i32
    %c0_i32_1 = arith.constant 0 : i32
    %c0_i32_2 = arith.constant 0 : i32
    return %arg0, %c0_i32, %c0_i32_0, %c0_i32_1 : i32, i32, i32, i32
  }
}

</mosaic_0001>

<llo_original>
// kernel: tpu_custom_call.1
$region0: #{tpu_custom_call.1}
  #allocation0 [shape = 'u32[]', space=smem, size = 0x4, offset = 0x4, fixed_abs, tag = 'smem constant byte address 0x4 - core index']
  #allocation1 [shape = 'u32[72,128]{1,0:T(1,128)}', space=vmem, size = 0x9000, scoped, tag = 'internal scratch']
  #allocation2 [shape = 'f32[18,18,4]{2,1,0:T(8,128)}', space=vmem, size = 0x36000, scoped, tag = 'scratch operand']
  %s0 = inlined_call_operand.vmem [shape: f32[2,18,18,4], index: 0, kind: input, shape index: {}]
  %s1 = inlined_call_operand.vmem [shape: f32[9,4,4], index: 1, kind: input, shape index: {}]
  %s2 = inlined_call_operand.vmem [shape: f32[1,4], index: 2, kind: input, shape index: {}]
  %s3 = inlined_call_operand.vmem [shape: f32[1,4], index: 3, kind: input, shape index: {}]
  %s4 = inlined_call_operand.vmem [shape: f32[9,4,4], index: 4, kind: input, shape index: {}]
  %s5 = inlined_call_operand.vmem [shape: f32[1,4], index: 5, kind: input, shape index: {}]
  %s6 = inlined_call_operand.vmem [shape: f32[1,4], index: 6, kind: input, shape index: {}]
  %s7 = inlined_call_operand.vmem [shape: f32[2,16,16,4], index: 7, kind: output, shape index: {}]
  %s8 = sld [smem:[#allocation0]]
  $region61: #{tpu_custom_call.1} parent=0
    _
  %s10 = ssub.s32 1, %s8
  %s11 = scalar_select 0, %s10, %s8
  loop: start=0, step=1, limit=4
  $region2: #{tpu_custom_call.1} parent=0 // loop_pre_header
    _
  $region3: #{tpu_custom_call.1} parent=0 // loop_header
    %s13 = sphi 0, %s17
    %p14 = scmp.ge.s32.totalorder %s13, 4
    %s23 = sphi 0, %s25
    %s26 = sphi 0, %s23
    %s27 = sphi 0, %s26
    %s43 = sphi 0, %s27
    %s47 = sphi 0, %s47
    %s49 = sphi 0, %s47
    %s50 = sphi 0, %s49
    %s64 = sphi 0, %s50
    %s68 = sphi 0, %s68
    %s70 = sphi 0, %s68
    %s71 = sphi 0, %s70
    %s85 = sphi 0, %s71
    %s89 = sphi 0, %s89
    %s91 = sphi 0, %s89
    %s92 = sphi 0, %s91
    %s106 = sphi 0, %s92
    %s110 = sphi 0, %s110
    %s112 = sphi 0, %s110
    %s113 = sphi 0, %s112
    %s127 = sphi 0, %s113
    %s131 = sphi 0, %s131
    %s133 = sphi 0, %s131
    %s134 = sphi 0, %s133
    %s148 = sphi 0, %s134
    %s152 = sphi 0, %s152
    %s154 = sphi 0, %s152
    %s155 = sphi 0, %s154
    %s169 = sphi 0, %s155
    %s175 = sphi 0, %s177
    %s178 = sphi 0, %s175
    %s179 = sphi 0, %s178
    %s195 = sphi 0, %s179
  $region4: #{tpu_custom_call.1} parent=0 // loop_header_branch
    %16 = sbr.rel (%p14) target = $region8
  $region5: #{tpu_custom_call.1} parent=0 // loop_body
    %s18 = ssub.s32 %s13, 1
    %s19 = ssub.s32 %s13, 2
    %s20 = sadd.s32 %s13, 1
    %s21 = ssub.s32 %s13, %s20
    %p22 = scmp.eq.s32.totalorder %s21, 0
    %s24 = sadd.s32 %s23, 1
    %s25 = scalar_select %p22, %s23, %s24
    %p28 = pneg %p22
    %p29 = scmp.eq.s32.totalorder %s13, 1
    %p30 = por %p28, %p29
    %p31 = scmp.ne.s32.totalorder %s23, %s26
    %p32 = scmp.eq.s32.totalorder %s13, 0
    %p33 = por %p31, %p32
    %p34 = scmp.ne.s32.totalorder %s23, %s26
    %p35 = scmp.eq.s32.totalorder %s18, 1
    %p36 = por %p34, %p35
    %p37 = scmp.ne.s32.totalorder %s26, %s27
    %p38 = scmp.eq.s32.totalorder %s18, 0
    %p39 = por %p37, %p38
    %p40 = scmp.ne.s32.totalorder %s26, %s27
    %p41 = scmp.eq.s32.totalorder %s19, 1
    %p42 = por %p40, %p41
    %p44 = scmp.ne.s32.totalorder %s27, %s43
    %p45 = scmp.eq.s32.totalorder %s19, 0
    %p46 = por %p44, %p45
    %s48 = sadd.s32 %s47, 1
    %p51 = scmp.eq.s32.totalorder %s13, 1
    %p52 = scmp.ne.s32.totalorder %s47, %s49
    %p53 = scmp.eq.s32.totalorder %s13, 0
    %p54 = por %p52, %p53
    %p55 = scmp.ne.s32.totalorder %s47, %s49
    %p56 = scmp.eq.s32.totalorder %s18, 1
    %p57 = por %p55, %p56
    %p58 = scmp.ne.s32.totalorder %s49, %s50
    %p59 = scmp.eq.s32.totalorder %s18, 0
    %p60 = por %p58, %p59
    %p61 = scmp.ne.s32.totalorder %s49, %s50
    %p62 = scmp.eq.s32.totalorder %s19, 1
    %p63 = por %p61, %p62
    %p65 = scmp.ne.s32.totalorder %s50, %s64
    %p66 = scmp.eq.s32.totalorder %s19, 0
    %p67 = por %p65, %p66
    %s69 = sadd.s32 %s68, 1
    %p72 = scmp.eq.s32.totalorder %s13, 1
    %p73 = scmp.ne.s32.totalorder %s68, %s70
    %p74 = scmp.eq.s32.totalorder %s13, 0
    %p75 = por %p73, %p74
    %p76 = scmp.ne.s32.totalorder %s68, %s70
    %p77 = scmp.eq.s32.totalorder %s18, 1
    %p78 = por %p76, %p77
    %p79 = scmp.ne.s32.totalorder %s70, %s71
    %p80 = scmp.eq.s32.totalorder %s18, 0
    %p81 = por %p79, %p80
    %p82 = scmp.ne.s32.totalorder %s70, %s71
    %p83 = scmp.eq.s32.totalorder %s19, 1
    %p84 = por %p82, %p83
    %p86 = scmp.ne.s32.totalorder %s71, %s85
    %p87 = scmp.eq.s32.totalorder %s19, 0
    %p88 = por %p86, %p87
    %s90 = sadd.s32 %s89, 1
    %p93 = scmp.eq.s32.totalorder %s13, 1
    %p94 = scmp.ne.s32.totalorder %s89, %s91
    %p95 = scmp.eq.s32.totalorder %s13, 0
    %p96 = por %p94, %p95
    %p97 = scmp.ne.s32.totalorder %s89, %s91
    %p98 = scmp.eq.s32.totalorder %s18, 1
    %p99 = por %p97, %p98
    %p100 = scmp.ne.s32.totalorder %s91, %s92
    %p101 = scmp.eq.s32.totalorder %s18, 0
    %p102 = por %p100, %p101
    %p103 = scmp.ne.s32.totalorder %s91, %s92
    %p104 = scmp.eq.s32.totalorder %s19, 1
    %p105 = por %p103, %p104
    %p107 = scmp.ne.s32.totalorder %s92, %s106
    %p108 = scmp.eq.s32.totalorder %s19, 0
    %p109 = por %p107, %p108
    %s111 = sadd.s32 %s110, 1
    %p114 = scmp.eq.s32.totalorder %s13, 1
    %p115 = scmp.ne.s32.totalorder %s110, %s112
    %p116 = scmp.eq.s32.totalorder %s13, 0
    %p117 = por %p115, %p116
    %p118 = scmp.ne.s32.totalorder %s110, %s112
    %p119 = scmp.eq.s32.totalorder %s18, 1
    %p120 = por %p118, %p119
    %p121 = scmp.ne.s32.totalorder %s112, %s113
    %p122 = scmp.eq.s32.totalorder %s18, 0
    %p123 = por %p121, %p122
    %p124 = scmp.ne.s32.totalorder %s112, %s113
    %p125 = scmp.eq.s32.totalorder %s19, 1
    %p126 = por %p124, %p125
    %p128 = scmp.ne.s32.totalorder %s113, %s127
    %p129 = scmp.eq.s32.totalorder %s19, 0
    %p130 = por %p128, %p129
    %s132 = sadd.s32 %s131, 1
    %p135 = scmp.eq.s32.totalorder %s13, 1
    %p136 = scmp.ne.s32.totalorder %s131, %s133
    %p137 = scmp.eq.s32.totalorder %s13, 0
    %p138 = por %p136, %p137
    %p139 = scmp.ne.s32.totalorder %s131, %s133
    %p140 = scmp.eq.s32.totalorder %s18, 1
    %p141 = por %p139, %p140
    %p142 = scmp.ne.s32.totalorder %s133, %s134
    %p143 = scmp.eq.s32.totalorder %s18, 0
    %p144 = por %p142, %p143
    %p145 = scmp.ne.s32.totalorder %s133, %s134
    %p146 = scmp.eq.s32.totalorder %s19, 1
    %p147 = por %p145, %p146
    %p149 = scmp.ne.s32.totalorder %s134, %s148
    %p150 = scmp.eq.s32.totalorder %s19, 0
    %p151 = por %p149, %p150
    %s153 = sadd.s32 %s152, 1
    %p156 = scmp.eq.s32.totalorder %s13, 1
    %p157 = scmp.ne.s32.totalorder %s152, %s154
    %p158 = scmp.eq.s32.totalorder %s13, 0
    %p159 = por %p157, %p158
    %p160 = scmp.ne.s32.totalorder %s152, %s154
    %p161 = scmp.eq.s32.totalorder %s18, 1
    %p162 = por %p160, %p161
    %p163 = scmp.ne.s32.totalorder %s154, %s155
    %p164 = scmp.eq.s32.totalorder %s18, 0
    %p165 = por %p163, %p164
    %p166 = scmp.ne.s32.totalorder %s154, %s155
    %p167 = scmp.eq.s32.totalorder %s19, 1
    %p168 = por %p166, %p167
    %p170 = scmp.ne.s32.totalorder %s155, %s169
    %p171 = scmp.eq.s32.totalorder %s19, 0
    %p172 = por %p170, %p171
    %s173 = ssub.s32 %s13, %s20
    %p174 = scmp.eq.s32.totalorder %s173, 0
    %s176 = sadd.s32 %s175, 1
    %s177 = scalar_select %p174, %s175, %s176
    %p180 = pneg %p174
    %p181 = scmp.eq.s32.totalorder %s13, 1
    %p182 = por %p180, %p181
    %p183 = scmp.ne.s32.totalorder %s175, %s178
    %p184 = scmp.eq.s32.totalorder %s13, 0
    %p185 = por %p183, %p184
    %p186 = scmp.ne.s32.totalorder %s175, %s178
    %p187 = scmp.eq.s32.totalorder %s18, 1
    %p188 = por %p186, %p187
    %p189 = scmp.ne.s32.totalorder %s178, %s179
    %p190 = scmp.eq.s32.totalorder %s18, 0
    %p191 = por %p189, %p190
    %p192 = scmp.ne.s32.totalorder %s178, %s179
    %p193 = scmp.eq.s32.totalorder %s19, 1
    %p194 = por %p192, %p193
    %p196 = scmp.ne.s32.totalorder %s179, %s195
    %p197 = scmp.eq.s32.totalorder %s19, 0
    %p198 = por %p196, %p197
    %p199 = scmp.le.s32.totalorder 1, %s13
    %p200 = scmp.lt.s32.totalorder %s13, 3
    %p201 = pnand %p199, %p200
    %p202 = pneg %p201
    // Predicated region
    $region9: #{tpu_custom_call.1} parent=5 // pred_check
      _
    $region10: #{tpu_custom_call.1} parent=5 // pred_check_branch
      %204 = sbr.rel (%p201) target = $region12
    $region11: #{tpu_custom_call.1} parent=5 // pred_region
      %s205 = ssub.s32 %s13, 1
      // Predicated region
      $region13: #{tpu_custom_call.1} parent=11 // pred_check
        %p206 = pneg %p60
      $region14: #{tpu_custom_call.1} parent=11 // pred_check_branch
        %208 = sbr.rel (%p206) target = $region16
      $region15: #{tpu_custom_call.1} parent=11 // pred_region
        _
      $region16: #{tpu_custom_call.1} parent=11 // pred_fallthru
        _
      // Predicated region
      $region17: #{tpu_custom_call.1} parent=11 // pred_check
        %p209 = pneg %p81
      $region18: #{tpu_custom_call.1} parent=11 // pred_check_branch
        %211 = sbr.rel (%p209) target = $region20
      $region19: #{tpu_custom_call.1} parent=11 // pred_region
        _
      $region20: #{tpu_custom_call.1} parent=11 // pred_fallthru
        _
      // Predicated region
      $region21: #{tpu_custom_call.1} parent=11 // pred_check
        %p212 = pneg %p102
      $region22: #{tpu_custom_call.1} parent=11 // pred_check_branch
        %214 = sbr.rel (%p212) target = $region24
      $region23: #{tpu_custom_call.1} parent=11 // pred_region
        _
      $region24: #{tpu_custom_call.1} parent=11 // pred_fallthru
        _
      // Predicated region
      $region25: #{tpu_custom_call.1} parent=11 // pred_check
        %p215 = pneg %p123
      $region26: #{tpu_custom_call.1} parent=11 // pred_check_branch
        %217 = sbr.rel (%p215) target = $region28
      $region27: #{tpu_custom_call.1} parent=11 // pred_region
        _
      $region28: #{tpu_custom_call.1} parent=11 // pred_fallthru
        _
      // Predicated region
      $region29: #{tpu_custom_call.1} parent=11 // pred_check
        %p218 = pneg %p144
      $region30: #{tpu_custom_call.1} parent=11 // pred_check_branch
        %220 = sbr.rel (%p218) target = $region32
      $region31: #{tpu_custom_call.1} parent=11 // pred_region
        _
      $region32: #{tpu_custom_call.1} parent=11 // pred_fallthru
        _
      // Predicated region
      $region33: #{tpu_custom_call.1} parent=11 // pred_check
        %p221 = pneg %p165
      $region34: #{tpu_custom_call.1} parent=11 // pred_check_branch
        %223 = sbr.rel (%p221) target = $region36
      $region35: #{tpu_custom_call.1} parent=11 // pred_region
        _
      $region36: #{tpu_custom_call.1} parent=11 // pred_fallthru
        _
    $region12: #{tpu_custom_call.1} parent=5 // pred_fallthru
      _
    %p224 = scmp.lt.s32.totalorder %s13, 2
    // Predicated region
    $region37: #{tpu_custom_call.1} parent=5 // pred_check
      %p225 = pneg %p224
    $region38: #{tpu_custom_call.1} parent=5 // pred_check_branch
      %227 = sbr.rel (%p225) target = $region40
    $region39: #{tpu_custom_call.1} parent=5 // pred_region
      // Predicated region
      $region41: #{tpu_custom_call.1} parent=39 // pred_check
        %p228 = pneg %p33
      $region42: #{tpu_custom_call.1} parent=39 // pred_check_branch
        %230 = sbr.rel (%p228) target = $region44
      $region43: #{tpu_custom_call.1} parent=39 // pred_region
        %p231 = scmp.lt.s32.totalorder %s13, 1
        %s232 = scalar_select %p231, %s13, 1
        %s233 = smul.addr %s232, 54
        %s234 = smul.addr %s233, 8
        %s235 = scalar_lea.vmem %s0, %s234
      $region44: #{tpu_custom_call.1} parent=39 // pred_fallthru
        _
    $region40: #{tpu_custom_call.1} parent=5 // pred_fallthru
      _
    %p236 = scmp.le.s32.totalorder 1, %s13
    %p237 = scmp.lt.s32.totalorder %s13, 3
    %p238 = pnand %p236, %p237
    %p239 = pneg %p238
    // Predicated region
    $region45: #{tpu_custom_call.1} parent=5 // pred_check
      _
    $region46: #{tpu_custom_call.1} parent=5 // pred_check_branch
      %241 = sbr.rel (%p238) target = $region48
    $region47: #{tpu_custom_call.1} parent=5 // pred_region
      %s242 = ssub.s32 %s13, 1
      %p243 = scmp.lt.s32.totalorder %s18, 1
      %s244 = scalar_select %p243, %s18, 1
      %s245 = smul.addr %s244, 54
      %s246 = smul.addr %s245, 8
      %s247 = scalar_lea.vmem %s0, %s246
      %p248 = pneg %p39
      %p249 = pneg %p36
      %p250 = pneg %p60
      %p251 = pneg %p57
      %p252 = pneg %p81
      %p253 = pneg %p78
      %p254 = pneg %p102
      %p255 = pneg %p99
      %p256 = pneg %p123
      %p257 = pneg %p120
      %p258 = pneg %p144
      %p259 = pneg %p141
      %p260 = pneg %p165
      %p261 = pneg %p162
      %p262 = pneg %p191
      %p263 = pneg %p188
      %p264 = scmp.lt.s32.totalorder %s18, 1
      %s265 = scalar_select %p264, %s18, 1
      %s266 = smul.addr %s265, 32
      %s267 = smul.addr %s266, 8
      %s268 = scalar_lea.vmem %s7, %s267
      %p269 = scmp.lt.s32.totalorder %s18, 1
      %s270 = scalar_select %p269, %s18, 1
      %s271 = smul.addr %s270, 54
      %s272 = smul.addr %s271, 8
      %s273 = scalar_lea.vmem %s0, %s272
      %p274 = scmp.lt.s32.totalorder %s18, 1
      %s275 = scalar_select %p274, %s18, 1
      %s276 = smul.addr %s275, 32
      %s277 = smul.addr %s276, 8
      %s278 = scalar_lea.vmem %s7, %s277
      %v279 = vld [vmem:[%s273] sm:$0xff]
      %v280 = vld [vmem:[%s273 + $0x8] sm:$0xff]
      %v281 = vld [vmem:[%s273 + $0x18] sm:$0xff]
      %v282 = vld [vmem:[%s273 + $0x20] sm:$0xff]
      %v283 = vld [vmem:[%s273 + $0x30] sm:$0xff]
      %v284 = vld [vmem:[%s273 + $0x38] sm:$0xff]
      %v285 = vld [vmem:[%s273 + $0x48] sm:$0xff]
      %v286 = vld [vmem:[%s273 + $0x50] sm:$0xff]
      %v287 = vld [vmem:[%s273 + $0x60] sm:$0xff]
      %v288 = vld [vmem:[%s273 + $0x68] sm:$0xff]
      %v289 = vld [vmem:[%s273 + $0x78] sm:$0xff]
      %v290 = vld [vmem:[%s273 + $0x80] sm:$0xff]
      %v291 = vld [vmem:[%s273 + $0x90] sm:$0xff]
      %v292 = vld [vmem:[%s273 + $0x98] sm:$0xff]
      %v293 = vld [vmem:[%s273 + $0xa8] sm:$0xff]
      %v294 = vld [vmem:[%s273 + $0xb0] sm:$0xff]
      %v295 = vld [vmem:[%s273 + $0xc0] sm:$0xff]
      %v296 = vld [vmem:[%s273 + $0xc8] sm:$0xff]
      %v297 = vld [vmem:[%s273 + $0xd8] sm:$0xff]
      %v298 = vld [vmem:[%s273 + $0xe0] sm:$0xff]
      %v299 = vld [vmem:[%s273 + $0xf0] sm:$0xff]
      %v300 = vld [vmem:[%s273 + $0xf8] sm:$0xff]
      %v301 = vld [vmem:[%s273 + $0x108] sm:$0xff]
      %v302 = vld [vmem:[%s273 + $0x110] sm:$0xff]
      %v303 = vld [vmem:[%s273 + $0x120] sm:$0xff]
      %v304 = vld [vmem:[%s273 + $0x128] sm:$0xff]
      %v305 = vld [vmem:[%s273 + $0x138] sm:$0xff]
      %v306 = vld [vmem:[%s273 + $0x140] sm:$0xff]
      %v307 = vld [vmem:[%s273 + $0x150] sm:$0xff]
      %v308 = vld [vmem:[%s273 + $0x158] sm:$0xff]
      %v309 = vld [vmem:[%s273 + $0x168] sm:$0xff]
      %v310 = vld [vmem:[%s273 + $0x170] sm:$0xff]
      %v311 = vld [vmem:[%s1] sm:$0xf]
      %v312 = vld [vmem:[%s273 + $0x1] sm:$0xff]
      %v313 = vld [vmem:[%s273 + $0x9] sm:$0xff]
      %v314 = vld [vmem:[%s273 + $0x19] sm:$0xff]
      %v315 = vld [vmem:[%s273 + $0x21] sm:$0xff]
      %v316 = vld [vmem:[%s273 + $0x31] sm:$0xff]
      %v317 = vld [vmem:[%s273 + $0x39] sm:$0xff]
      %v318 = vld [vmem:[%s273 + $0x49] sm:$0xff]
      %v319 = vld [vmem:[%s273 + $0x51] sm:$0xff]
      %v320 = vld [vmem:[%s273 + $0x61] sm:$0xff]
      %v321 = vld [vmem:[%s273 + $0x69] sm:$0xff]
      %v322 = vld [vmem:[%s273 + $0x79] sm:$0xff]
      %v323 = vld [vmem:[%s273 + $0x81] sm:$0xff]
      %v324 = vld [vmem:[%s273 + $0x91] sm:$0xff]
      %v325 = vld [vmem:[%s273 + $0x99] sm:$0xff]
      %v326 = vld [vmem:[%s273 + $0xa9] sm:$0xff]
      %v327 = vld [vmem:[%s273 + $0xb1] sm:$0xff]
      %v328 = vld [vmem:[%s273 + $0xc1] sm:$0xff]
      %v329 = vld [vmem:[%s273 + $0xc9] sm:$0xff]
      %v330 = vld [vmem:[%s273 + $0xd9] sm:$0xff]
      %v331 = vld [vmem:[%s273 + $0xe1] sm:$0xff]
      %v332 = vld [vmem:[%s273 + $0xf1] sm:$0xff]
      %v333 = vld [vmem:[%s273 + $0xf9] sm:$0xff]
      %v334 = vld [vmem:[%s273 + $0x109] sm:$0xff]
      %v335 = vld [vmem:[%s273 + $0x111] sm:$0xff]
      %v336 = vld [vmem:[%s273 + $0x121] sm:$0xff]
      %v337 = vld [vmem:[%s273 + $0x129] sm:$0xff]
      %v338 = vld [vmem:[%s273 + $0x139] sm:$0xff]
      %v339 = vld [vmem:[%s273 + $0x141] sm:$0xff]
      %v340 = vld [vmem:[%s273 + $0x151] sm:$0xff]
      %v341 = vld [vmem:[%s273 + $0x159] sm:$0xff]
      %v342 = vld [vmem:[%s273 + $0x169] sm:$0xff]
      %v343 = vld [vmem:[%s273 + $0x171] sm:$0xff]
      %s344 = scalar_lea.vmem %s1, 4
      %v345 = vld [vmem:[%s344] sm:$0xf]
      %vm346 = vcmask 31744
      %v348 = vsel %vm346, %v312, 0
      %v351 = vsel %vm346, %v313, 0
      %v354 = vsel %vm346, %v314, 0
      %v357 = vsel %vm346, %v315, 0
      %v360 = vsel %vm346, %v316, 0
      %v363 = vsel %vm346, %v317, 0
      %v366 = vsel %vm346, %v318, 0
      %v369 = vsel %vm346, %v319, 0
      %v372 = vsel %vm346, %v320, 0
      %v375 = vsel %vm346, %v321, 0
      %v378 = vsel %vm346, %v322, 0
      %v381 = vsel %vm346, %v323, 0
      %v384 = vsel %vm346, %v324, 0
      %v387 = vsel %vm346, %v325, 0
      %v390 = vsel %vm346, %v326, 0
      %v393 = vsel %vm346, %v327, 0
      %v396 = vsel %vm346, %v328, 0
      %v399 = vsel %vm346, %v329, 0
      %v402 = vsel %vm346, %v330, 0
      %v405 = vsel %vm346, %v331, 0
      %v408 = vsel %vm346, %v332, 0
      %v411 = vsel %vm346, %v333, 0
      %v414 = vsel %vm346, %v334, 0
      %v417 = vsel %vm346, %v335, 0
      %v420 = vsel %vm346, %v336, 0
      %v423 = vsel %vm346, %v337, 0
      %v426 = vsel %vm346, %v338, 0
      %v429 = vsel %vm346, %v339, 0
      %v432 = vsel %vm346, %v340, 0
      %v435 = vsel %vm346, %v341, 0
      %v438 = vsel %vm346, %v342, 0
      %v441 = vsel %vm346, %v343, 0
      %vm443 = vcmask 1043456
      %v445 = vsel %vm443, %v345, 0
      %447 = vmatpush.msra.mxu0 0.0
      %448 = vmatpush.msra.mxu0 0.0
      %449 = vmatpush.msra.mxu0 0.0
      %450 = vmatpush.msra.mxu0 0.0
      %451 = vmatpush.msra.mxu0 0.0
      %452 = vmatpush.msra.mxu0 0.0
      %453 = vmatpush.msra.mxu0 0.0
      %454 = vmatpush.msra.mxu0 0.0
      %455 = vmatpush.msra.mxu0 0.0
      %456 = vmatpush.msra.mxu0 0.0
      %457 = vmatpush.msra.mxu0 0.0
      %458 = vmatpush.msra.mxu0 0.0
      %459 = vmatpush.msra.mxu0 0.0
      %460 = vmatpush.msra.mxu0 0.0
      %461 = vmatpush.msra.mxu0 0.0
      %462 = vmatpush.msra.mxu0 %v445
      %463 = vmatmul.f32.gmra.mxu0 %v348
      %v464 = vpop.f32.mrf.mxu0
      %v465 = vadd.f32 0.0, %v464
      %466 = vmatmul.f32.gmra.mxu0 %v351
      %v467 = vpop.f32.mrf.mxu0
      %v468 = vadd.f32 0.0, %v467
      %469 = vmatmul.f32.gmra.mxu0 %v354
      %v470 = vpop.f32.mrf.mxu0
      %v471 = vadd.f32 0.0, %v470
      %472 = vmatmul.f32.gmra.mxu0 %v357
      %v473 = vpop.f32.mrf.mxu0
      %v474 = vadd.f32 0.0, %v473
      %475 = vmatmul.f32.gmra.mxu0 %v360
      %v476 = vpop.f32.mrf.mxu0
      %v477 = vadd.f32 0.0, %v476
      %478 = vmatmul.f32.gmra.mxu0 %v363
      %v479 = vpop.f32.mrf.mxu0
      %v480 = vadd.f32 0.0, %v479
      %481 = vmatmul.f32.gmra.mxu0 %v366
      %v482 = vpop.f32.mrf.mxu0
      %v483 = vadd.f32 0.0, %v482
      %484 = vmatmul.f32.gmra.mxu0 %v369
      %v485 = vpop.f32.mrf.mxu0
      %v486 = vadd.f32 0.0, %v485
      %487 = vmatmul.f32.gmra.mxu0 %v372
      %v488 = vpop.f32.mrf.mxu0
      %v489 = vadd.f32 0.0, %v488
      %490 = vmatmul.f32.gmra.mxu0 %v375
      %v491 = vpop.f32.mrf.mxu0
      %v492 = vadd.f32 0.0, %v491
      %493 = vmatmul.f32.gmra.mxu0 %v378
      %v494 = vpop.f32.mrf.mxu0
      %v495 = vadd.f32 0.0, %v494
      %496 = vmatmul.f32.gmra.mxu0 %v381
      %v497 = vpop.f32.mrf.mxu0
      %v498 = vadd.f32 0.0, %v497
      %499 = vmatmul.f32.gmra.mxu0 %v384
      %v500 = vpop.f32.mrf.mxu0
      %v501 = vadd.f32 0.0, %v500
      %502 = vmatmul.f32.gmra.mxu0 %v387
      %v503 = vpop.f32.mrf.mxu0
      %v504 = vadd.f32 0.0, %v503
      %505 = vmatmul.f32.gmra.mxu0 %v390
      %v506 = vpop.f32.mrf.mxu0
      %v507 = vadd.f32 0.0, %v506
      %508 = vmatmul.f32.gmra.mxu0 %v393
      %v509 = vpop.f32.mrf.mxu0
      %v510 = vadd.f32 0.0, %v509
      %511 = vmatmul.f32.gmra.mxu0 %v396
      %v512 = vpop.f32.mrf.mxu0
      %v513 = vadd.f32 0.0, %v512
      %514 = vmatmul.f32.gmra.mxu0 %v399
      %v515 = vpop.f32.mrf.mxu0
      %v516 = vadd.f32 0.0, %v515
      %517 = vmatmul.f32.gmra.mxu0 %v402
      %v518 = vpop.f32.mrf.mxu0
      %v519 = vadd.f32 0.0, %v518
      %520 = vmatmul.f32.gmra.mxu0 %v405
      %v521 = vpop.f32.mrf.mxu0
      %v522 = vadd.f32 0.0, %v521
      %523 = vmatmul.f32.gmra.mxu0 %v408
      %v524 = vpop.f32.mrf.mxu0
      %v525 = vadd.f32 0.0, %v524
      %526 = vmatmul.f32.gmra.mxu0 %v411
      %v527 = vpop.f32.mrf.mxu0
      %v528 = vadd.f32 0.0, %v527
      %529 = vmatmul.f32.gmra.mxu0 %v414
      %v530 = vpop.f32.mrf.mxu0
      %v531 = vadd.f32 0.0, %v530
      %532 = vmatmul.f32.gmra.mxu0 %v417
      %v533 = vpop.f32.mrf.mxu0
      %v534 = vadd.f32 0.0, %v533
      %535 = vmatmul.f32.gmra.mxu0 %v420
      %v536 = vpop.f32.mrf.mxu0
      %v537 = vadd.f32 0.0, %v536
      %538 = vmatmul.f32.gmra.mxu0 %v423
      %v539 = vpop.f32.mrf.mxu0
      %v540 = vadd.f32 0.0, %v539
      %541 = vmatmul.f32.gmra.mxu0 %v426
      %v542 = vpop.f32.mrf.mxu0
      %v543 = vadd.f32 0.0, %v542
      %544 = vmatmul.f32.gmra.mxu0 %v429
      %v545 = vpop.f32.mrf.mxu0
      %v546 = vadd.f32 0.0, %v545
      %547 = vmatmul.f32.gmra.mxu0 %v432
      %v548 = vpop.f32.mrf.mxu0
      %v549 = vadd.f32 0.0, %v548
      %550 = vmatmul.f32.gmra.mxu0 %v435
      %v551 = vpop.f32.mrf.mxu0
      %v552 = vadd.f32 0.0, %v551
      %553 = vmatmul.f32.gmra.mxu0 %v438
      %v554 = vpop.f32.mrf.mxu0
      %v555 = vadd.f32 0.0, %v554
      %556 = vmatmul.f32.gmra.mxu0 %v441
      %v557 = vpop.f32.mrf.mxu0
      %v558 = vadd.f32 0.0, %v557
      %559 = vdwg.mxu0
      %v561 = vsel %vm346, %v279, 0
      %v564 = vsel %vm346, %v280, 0
      %v567 = vsel %vm346, %v281, 0
      %v570 = vsel %vm346, %v282, 0
      %v573 = vsel %vm346, %v283, 0
      %v576 = vsel %vm346, %v284, 0
      %v579 = vsel %vm346, %v285, 0
      %v582 = vsel %vm346, %v286, 0
      %v585 = vsel %vm346, %v287, 0
      %v588 = vsel %vm346, %v288, 0
      %v591 = vsel %vm346, %v289, 0
      %v594 = vsel %vm346, %v290, 0
      %v597 = vsel %vm346, %v291, 0
      %v600 = vsel %vm346, %v292, 0
      %v603 = vsel %vm346, %v293, 0
      %v606 = vsel %vm346, %v294, 0
      %v609 = vsel %vm346, %v295, 0
      %v612 = vsel %vm346, %v296, 0
      %v615 = vsel %vm346, %v297, 0
      %v618 = vsel %vm346, %v298, 0
      %v621 = vsel %vm346, %v299, 0
      %v624 = vsel %vm346, %v300, 0
      %v627 = vsel %vm346, %v301, 0
      %v630 = vsel %vm346, %v302, 0
      %v633 = vsel %vm346, %v303, 0
      %v636 = vsel %vm346, %v304, 0
      %v639 = vsel %vm346, %v305, 0
      %v642 = vsel %vm346, %v306, 0
      %v645 = vsel %vm346, %v307, 0
      %v648 = vsel %vm346, %v308, 0
      %v651 = vsel %vm346, %v309, 0
      %v654 = vsel %vm346, %v310, 0
      %v657 = vsel %vm443, %v311, 0
      %659 = vmatpush.msra.mxu0 0.0
      %660 = vmatpush.msra.mxu0 0.0
      %661 = vmatpush.msra.mxu0 0.0
      %662 = vmatpush.msra.mxu0 0.0
      %663 = vmatpush.msra.mxu0 0.0
      %664 = vmatpush.msra.mxu0 0.0
      %665 = vmatpush.msra.mxu0 0.0
      %666 = vmatpush.msra.mxu0 0.0
      %667 = vmatpush.msra.mxu0 0.0
      %668 = vmatpush.msra.mxu0 0.0
      %669 = vmatpush.msra.mxu0 0.0
      %670 = vmatpush.msra.mxu0 0.0
      %671 = vmatpush.msra.mxu0 0.0
      %672 = vmatpush.msra.mxu0 0.0
      %673 = vmatpush.msra.mxu0 0.0
      %674 = vmatpush.msra.mxu0 %v657
      %675 = vmatmul.f32.gmra.mxu0 %v561
      %v676 = vpop.f32.mrf.mxu0
      %v677 = vadd.f32 %v465, %v676
      %678 = vmatmul.f32.gmra.mxu0 %v564
      %v679 = vpop.f32.mrf.mxu0
      %v680 = vadd.f32 %v468, %v679
      %681 = vmatmul.f32.gmra.mxu0 %v567
      %v682 = vpop.f32.mrf.mxu0
      %v683 = vadd.f32 %v471, %v682
      %684 = vmatmul.f32.gmra.mxu0 %v570
      %v685 = vpop.f32.mrf.mxu0
      %v686 = vadd.f32 %v474, %v685
      %687 = vmatmul.f32.gmra.mxu0 %v573
      %v688 = vpop.f32.mrf.mxu0
      %v689 = vadd.f32 %v477, %v688
      %690 = vmatmul.f32.gmra.mxu0 %v576
      %v691 = vpop.f32.mrf.mxu0
      %v692 = vadd.f32 %v480, %v691
      %693 = vmatmul.f32.gmra.mxu0 %v579
      %v694 = vpop.f32.mrf.mxu0
      %v695 = vadd.f32 %v483, %v694
      %696 = vmatmul.f32.gmra.mxu0 %v582
      %v697 = vpop.f32.mrf.mxu0
      %v698 = vadd.f32 %v486, %v697
      %699 = vmatmul.f32.gmra.mxu0 %v585
      %v700 = vpop.f32.mrf.mxu0
      %v701 = vadd.f32 %v489, %v700
      %702 = vmatmul.f32.gmra.mxu0 %v588
      %v703 = vpop.f32.mrf.mxu0
      %v704 = vadd.f32 %v492, %v703
      %705 = vmatmul.f32.gmra.mxu0 %v591
      %v706 = vpop.f32.mrf.mxu0
      %v707 = vadd.f32 %v495, %v706
      %708 = vmatmul.f32.gmra.mxu0 %v594
      %v709 = vpop.f32.mrf.mxu0
      %v710 = vadd.f32 %v498, %v709
      %711 = vmatmul.f32.gmra.mxu0 %v597
      %v712 = vpop.f32.mrf.mxu0
      %v713 = vadd.f32 %v501, %v712
      %714 = vmatmul.f32.gmra.mxu0 %v600
      %v715 = vpop.f32.mrf.mxu0
      %v716 = vadd.f32 %v504, %v715
      %717 = vmatmul.f32.gmra.mxu0 %v603
      %v718 = vpop.f32.mrf.mxu0
      %v719 = vadd.f32 %v507, %v718
      %720 = vmatmul.f32.gmra.mxu0 %v606
      %v721 = vpop.f32.mrf.mxu0
      %v722 = vadd.f32 %v510, %v721
      %723 = vmatmul.f32.gmra.mxu0 %v609
      %v724 = vpop.f32.mrf.mxu0
      %v725 = vadd.f32 %v513, %v724
      %726 = vmatmul.f32.gmra.mxu0 %v612
      %v727 = vpop.f32.mrf.mxu0
      %v728 = vadd.f32 %v516, %v727
      %729 = vmatmul.f32.gmra.mxu0 %v615
      %v730 = vpop.f32.mrf.mxu0
      %v731 = vadd.f32 %v519, %v730
      %732 = vmatmul.f32.gmra.mxu0 %v618
      %v733 = vpop.f32.mrf.mxu0
      %v734 = vadd.f32 %v522, %v733
      %735 = vmatmul.f32.gmra.mxu0 %v621
      %v736 = vpop.f32.mrf.mxu0
      %v737 = vadd.f32 %v525, %v736
      %738 = vmatmul.f32.gmra.mxu0 %v624
      %v739 = vpop.f32.mrf.mxu0
      %v740 = vadd.f32 %v528, %v739
      %741 = vmatmul.f32.gmra.mxu0 %v627
      %v742 = vpop.f32.mrf.mxu0
      %v743 = vadd.f32 %v531, %v742
      %744 = vmatmul.f32.gmra.mxu0 %v630
      %v745 = vpop.f32.mrf.mxu0
      %v746 = vadd.f32 %v534, %v745
      %747 = vmatmul.f32.gmra.mxu0 %v633
      %v748 = vpop.f32.mrf.mxu0
      %v749 = vadd.f32 %v537, %v748
      %750 = vmatmul.f32.gmra.mxu0 %v636
      %v751 = vpop.f32.mrf.mxu0
      %v752 = vadd.f32 %v540, %v751
      %753 = vmatmul.f32.gmra.mxu0 %v639
      %v754 = vpop.f32.mrf.mxu0
      %v755 = vadd.f32 %v543, %v754
      %756 = vmatmul.f32.gmra.mxu0 %v642
      %v757 = vpop.f32.mrf.mxu0
      %v758 = vadd.f32 %v546, %v757
      %759 = vmatmul.f32.gmra.mxu0 %v645
      %v760 = vpop.f32.mrf.mxu0
      %v761 = vadd.f32 %v549, %v760
      %762 = vmatmul.f32.gmra.mxu0 %v648
      %v763 = vpop.f32.mrf.mxu0
      %v764 = vadd.f32 %v552, %v763
      %765 = vmatmul.f32.gmra.mxu0 %v651
      %v766 = vpop.f32.mrf.mxu0
      %v767 = vadd.f32 %v555, %v766
      %768 = vmatmul.f32.gmra.mxu0 %v654
      %v769 = vpop.f32.mrf.mxu0
      %v770 = vadd.f32 %v558, %v769
      %771 = vdwg.mxu0
      %v772 = vld [vmem:[%s273 + $0x2] sm:$0xff]
      %v773 = vld [vmem:[%s273 + $0xa] sm:$0xff]
      %v774 = vld [vmem:[%s273 + $0x1a] sm:$0xff]
      %v775 = vld [vmem:[%s273 + $0x22] sm:$0xff]
      %v776 = vld [vmem:[%s273 + $0x32] sm:$0xff]
      %v777 = vld [vmem:[%s273 + $0x3a] sm:$0xff]
      %v778 = vld [vmem:[%s273 + $0x4a] sm:$0xff]
      %v779 = vld [vmem:[%s273 + $0x52] sm:$0xff]
      %v780 = vld [vmem:[%s273 + $0x62] sm:$0xff]
      %v781 = vld [vmem:[%s273 + $0x6a] sm:$0xff]
      %v782 = vld [vmem:[%s273 + $0x7a] sm:$0xff]
      %v783 = vld [vmem:[%s273 + $0x82] sm:$0xff]
      %v784 = vld [vmem:[%s273 + $0x92] sm:$0xff]
      %v785 = vld [vmem:[%s273 + $0x9a] sm:$0xff]
      %v786 = vld [vmem:[%s273 + $0xaa] sm:$0xff]
      %v787 = vld [vmem:[%s273 + $0xb2] sm:$0xff]
      %v788 = vld [vmem:[%s273 + $0xc2] sm:$0xff]
      %v789 = vld [vmem:[%s273 + $0xca] sm:$0xff]
      %v790 = vld [vmem:[%s273 + $0xda] sm:$0xff]
      %v791 = vld [vmem:[%s273 + $0xe2] sm:$0xff]
      %v792 = vld [vmem:[%s273 + $0xf2] sm:$0xff]
      %v793 = vld [vmem:[%s273 + $0xfa] sm:$0xff]
      %v794 = vld [vmem:[%s273 + $0x10a] sm:$0xff]
      %v795 = vld [vmem:[%s273 + $0x112] sm:$0xff]
      %v796 = vld [vmem:[%s273 + $0x122] sm:$0xff]
      %v797 = vld [vmem:[%s273 + $0x12a] sm:$0xff]
      %v798 = vld [vmem:[%s273 + $0x13a] sm:$0xff]
      %v799 = vld [vmem:[%s273 + $0x142] sm:$0xff]
      %v800 = vld [vmem:[%s273 + $0x152] sm:$0xff]
      %v801 = vld [vmem:[%s273 + $0x15a] sm:$0xff]
      %v802 = vld [vmem:[%s273 + $0x16a] sm:$0xff]
      %v803 = vld [vmem:[%s273 + $0x172] sm:$0xff]
      %s804 = scalar_lea.vmem %s1, 8
      %v805 = vld [vmem:[%s804] sm:$0xf]
      %v807 = vsel %vm346, %v772, 0
      %v810 = vsel %vm346, %v773, 0
      %v813 = vsel %vm346, %v774, 0
      %v816 = vsel %vm346, %v775, 0
      %v819 = vsel %vm346, %v776, 0
      %v822 = vsel %vm346, %v777, 0
      %v825 = vsel %vm346, %v778, 0
      %v828 = vsel %vm346, %v779, 0
      %v831 = vsel %vm346, %v780, 0
      %v834 = vsel %vm346, %v781, 0
      %v837 = vsel %vm346, %v782, 0
      %v840 = vsel %vm346, %v783, 0
      %v843 = vsel %vm346, %v784, 0
      %v846 = vsel %vm346, %v785, 0
      %v849 = vsel %vm346, %v786, 0
      %v852 = vsel %vm346, %v787, 0
      %v855 = vsel %vm346, %v788, 0
      %v858 = vsel %vm346, %v789, 0
      %v861 = vsel %vm346, %v790, 0
      %v864 = vsel %vm346, %v791, 0
      %v867 = vsel %vm346, %v792, 0
      %v870 = vsel %vm346, %v793, 0
      %v873 = vsel %vm346, %v794, 0
      %v876 = vsel %vm346, %v795, 0
      %v879 = vsel %vm346, %v796, 0
      %v882 = vsel %vm346, %v797, 0
      %v885 = vsel %vm346, %v798, 0
      %v888 = vsel %vm346, %v799, 0
      %v891 = vsel %vm346, %v800, 0
      %v894 = vsel %vm346, %v801, 0
      %v897 = vsel %vm346, %v802, 0
      %v900 = vsel %vm346, %v803, 0
      %v903 = vsel %vm443, %v805, 0
      %905 = vmatpush.msra.mxu0 0.0
      %906 = vmatpush.msra.mxu0 0.0
      %907 = vmatpush.msra.mxu0 0.0
      %908 = vmatpush.msra.mxu0 0.0
      %909 = vmatpush.msra.mxu0 0.0
      %910 = vmatpush.msra.mxu0 0.0
      %911 = vmatpush.msra.mxu0 0.0
      %912 = vmatpush.msra.mxu0 0.0
      %913 = vmatpush.msra.mxu0 0.0
      %914 = vmatpush.msra.mxu0 0.0
      %915 = vmatpush.msra.mxu0 0.0
      %916 = vmatpush.msra.mxu0 0.0
      %917 = vmatpush.msra.mxu0 0.0
      %918 = vmatpush.msra.mxu0 0.0
      %919 = vmatpush.msra.mxu0 0.0
      %920 = vmatpush.msra.mxu0 %v903
      %921 = vmatmul.f32.gmra.mxu0 %v807
      %v922 = vpop.f32.mrf.mxu0
      %v923 = vadd.f32 0.0, %v922
      %924 = vmatmul.f32.gmra.mxu0 %v810
      %v925 = vpop.f32.mrf.mxu0
      %v926 = vadd.f32 0.0, %v925
      %927 = vmatmul.f32.gmra.mxu0 %v813
      %v928 = vpop.f32.mrf.mxu0
      %v929 = vadd.f32 0.0, %v928
      %930 = vmatmul.f32.gmra.mxu0 %v816
      %v931 = vpop.f32.mrf.mxu0
      %v932 = vadd.f32 0.0, %v931
      %933 = vmatmul.f32.gmra.mxu0 %v819
      %v934 = vpop.f32.mrf.mxu0
      %v935 = vadd.f32 0.0, %v934
      %936 = vmatmul.f32.gmra.mxu0 %v822
      %v937 = vpop.f32.mrf.mxu0
      %v938 = vadd.f32 0.0, %v937
      %939 = vmatmul.f32.gmra.mxu0 %v825
      %v940 = vpop.f32.mrf.mxu0
      %v941 = vadd.f32 0.0, %v940
      %942 = vmatmul.f32.gmra.mxu0 %v828
      %v943 = vpop.f32.mrf.mxu0
      %v944 = vadd.f32 0.0, %v943
      %945 = vmatmul.f32.gmra.mxu0 %v831
      %v946 = vpop.f32.mrf.mxu0
      %v947 = vadd.f32 0.0, %v946
      %948 = vmatmul.f32.gmra.mxu0 %v834
      %v949 = vpop.f32.mrf.mxu0
      %v950 = vadd.f32 0.0, %v949
      %951 = vmatmul.f32.gmra.mxu0 %v837
      %v952 = vpop.f32.mrf.mxu0
      %v953 = vadd.f32 0.0, %v952
      %954 = vmatmul.f32.gmra.mxu0 %v840
      %v955 = vpop.f32.mrf.mxu0
      %v956 = vadd.f32 0.0, %v955
      %957 = vmatmul.f32.gmra.mxu0 %v843
      %v958 = vpop.f32.mrf.mxu0
      %v959 = vadd.f32 0.0, %v958
      %960 = vmatmul.f32.gmra.mxu0 %v846
      %v961 = vpop.f32.mrf.mxu0
      %v962 = vadd.f32 0.0, %v961
      %963 = vmatmul.f32.gmra.mxu0 %v849
      %v964 = vpop.f32.mrf.mxu0
      %v965 = vadd.f32 0.0, %v964
      %966 = vmatmul.f32.gmra.mxu0 %v852
      %v967 = vpop.f32.mrf.mxu0
      %v968 = vadd.f32 0.0, %v967
      %969 = vmatmul.f32.gmra.mxu0 %v855
      %v970 = vpop.f32.mrf.mxu0
      %v971 = vadd.f32 0.0, %v970
      %972 = vmatmul.f32.gmra.mxu0 %v858
      %v973 = vpop.f32.mrf.mxu0
      %v974 = vadd.f32 0.0, %v973
      %975 = vmatmul.f32.gmra.mxu0 %v861
      %v976 = vpop.f32.mrf.mxu0
      %v977 = vadd.f32 0.0, %v976
      %978 = vmatmul.f32.gmra.mxu0 %v864
      %v979 = vpop.f32.mrf.mxu0
      %v980 = vadd.f32 0.0, %v979
      %981 = vmatmul.f32.gmra.mxu0 %v867
      %v982 = vpop.f32.mrf.mxu0
      %v983 = vadd.f32 0.0, %v982
      %984 = vmatmul.f32.gmra.mxu0 %v870
      %v985 = vpop.f32.mrf.mxu0
      %v986 = vadd.f32 0.0, %v985
      %987 = vmatmul.f32.gmra.mxu0 %v873
      %v988 = vpop.f32.mrf.mxu0
      %v989 = vadd.f32 0.0, %v988
      %990 = vmatmul.f32.gmra.mxu0 %v876
      %v991 = vpop.f32.mrf.mxu0
      %v992 = vadd.f32 0.0, %v991
      %993 = vmatmul.f32.gmra.mxu0 %v879
      %v994 = vpop.f32.mrf.mxu0
      %v995 = vadd.f32 0.0, %v994
      %996 = vmatmul.f32.gmra.mxu0 %v882
      %v997 = vpop.f32.mrf.mxu0
      %v998 = vadd.f32 0.0, %v997
      %999 = vmatmul.f32.gmra.mxu0 %v885
      %v1000 = vpop.f32.mrf.mxu0
      %v1001 = vadd.f32 0.0, %v1000
      %1002 = vmatmul.f32.gmra.mxu0 %v888
      %v1003 = vpop.f32.mrf.mxu0
      %v1004 = vadd.f32 0.0, %v1003
      %1005 = vmatmul.f32.gmra.mxu0 %v891
      %v1006 = vpop.f32.mrf.mxu0
      %v1007 = vadd.f32 0.0, %v1006
      %1008 = vmatmul.f32.gmra.mxu0 %v894
      %v1009 = vpop.f32.mrf.mxu0
      %v1010 = vadd.f32 0.0, %v1009
      %1011 = vmatmul.f32.gmra.mxu0 %v897
      %v1012 = vpop.f32.mrf.mxu0
      %v1013 = vadd.f32 0.0, %v1012
      %1014 = vmatmul.f32.gmra.mxu0 %v900
      %v1015 = vpop.f32.mrf.mxu0
      %v1016 = vadd.f32 0.0, %v1015
      %1017 = vdwg.mxu0
      %v1018 = vadd.f32 %v677, %v923
      %v1019 = vadd.f32 %v680, %v926
      %v1020 = vadd.f32 %v683, %v929
      %v1021 = vadd.f32 %v686, %v932
      %v1022 = vadd.f32 %v689, %v935
      %v1023 = vadd.f32 %v692, %v938
      %v1024 = vadd.f32 %v695, %v941
      %v1025 = vadd.f32 %v698, %v944
      %v1026 = vadd.f32 %v701, %v947
      %v1027 = vadd.f32 %v704, %v950
      %v1028 = vadd.f32 %v707, %v953
      %v1029 = vadd.f32 %v710, %v956
      %v1030 = vadd.f32 %v713, %v959
      %v1031 = vadd.f32 %v716, %v962
      %v1032 = vadd.f32 %v719, %v965
      %v1033 = vadd.f32 %v722, %v968
      %v1034 = vadd.f32 %v725, %v971
      %v1035 = vadd.f32 %v728, %v974
      %v1036 = vadd.f32 %v731, %v977
      %v1037 = vadd.f32 %v734, %v980
      %v1038 = vadd.f32 %v737, %v983
      %v1039 = vadd.f32 %v740, %v986
      %v1040 = vadd.f32 %v743, %v989
      %v1041 = vadd.f32 %v746, %v992
      %v1042 = vadd.f32 %v749, %v995
      %v1043 = vadd.f32 %v752, %v998
      %v1044 = vadd.f32 %v755, %v1001
      %v1045 = vadd.f32 %v758, %v1004
      %v1046 = vadd.f32 %v761, %v1007
      %v1047 = vadd.f32 %v764, %v1010
      %v1048 = vadd.f32 %v767, %v1013
      %v1049 = vadd.f32 %v770, %v1016
      %s1050 = scalar_lea.vmem %s273, 24
      %v1051 = vld [vmem:[%s1050] sm:$0xff]
      %v1052 = vld [vmem:[%s1050 + $0x8] sm:$0xff]
      %v1053 = vld [vmem:[%s1050 + $0x18] sm:$0xff]
      %v1054 = vld [vmem:[%s1050 + $0x20] sm:$0xff]
      %v1055 = vld [vmem:[%s1050 + $0x30] sm:$0xff]
      %v1056 = vld [vmem:[%s1050 + $0x38] sm:$0xff]
      %v1057 = vld [vmem:[%s1050 + $0x48] sm:$0xff]
      %v1058 = vld [vmem:[%s1050 + $0x50] sm:$0xff]
      %v1059 = vld [vmem:[%s1050 + $0x60] sm:$0xff]
      %v1060 = vld [vmem:[%s1050 + $0x68] sm:$0xff]
      %v1061 = vld [vmem:[%s1050 + $0x78] sm:$0xff]
      %v1062 = vld [vmem:[%s1050 + $0x80] sm:$0xff]
      %v1063 = vld [vmem:[%s1050 + $0x90] sm:$0xff]
      %v1064 = vld [vmem:[%s1050 + $0x98] sm:$0xff]
      %v1065 = vld [vmem:[%s1050 + $0xa8] sm:$0xff]
      %v1066 = vld [vmem:[%s1050 + $0xb0] sm:$0xff]
      %v1067 = vld [vmem:[%s1050 + $0xc0] sm:$0xff]
      %v1068 = vld [vmem:[%s1050 + $0xc8] sm:$0xff]
      %v1069 = vld [vmem:[%s1050 + $0xd8] sm:$0xff]
      %v1070 = vld [vmem:[%s1050 + $0xe0] sm:$0xff]
      %v1071 = vld [vmem:[%s1050 + $0xf0] sm:$0xff]
      %v1072 = vld [vmem:[%s1050 + $0xf8] sm:$0xff]
      %v1073 = vld [vmem:[%s1050 + $0x108] sm:$0xff]
      %v1074 = vld [vmem:[%s1050 + $0x110] sm:$0xff]
      %v1075 = vld [vmem:[%s1050 + $0x120] sm:$0xff]
      %v1076 = vld [vmem:[%s1050 + $0x128] sm:$0xff]
      %v1077 = vld [vmem:[%s1050 + $0x138] sm:$0xff]
      %v1078 = vld [vmem:[%s1050 + $0x140] sm:$0xff]
      %v1079 = vld [vmem:[%s1050 + $0x150] sm:$0xff]
      %v1080 = vld [vmem:[%s1050 + $0x158] sm:$0xff]
      %v1081 = vld [vmem:[%s1050 + $0x168] sm:$0xff]
      %v1082 = vld [vmem:[%s1050 + $0x170] sm:$0xff]
      %s1083 = scalar_lea.vmem %s1, 12
      %v1084 = vld [vmem:[%s1083] sm:$0xf]
      %v1086 = vsel %vm346, %v1051, 0
      %v1089 = vsel %vm346, %v1052, 0
      %v1092 = vsel %vm346, %v1053, 0
      %v1095 = vsel %vm346, %v1054, 0
      %v1098 = vsel %vm346, %v1055, 0
      %v1101 = vsel %vm346, %v1056, 0
      %v1104 = vsel %vm346, %v1057, 0
      %v1107 = vsel %vm346, %v1058, 0
      %v1110 = vsel %vm346, %v1059, 0
      %v1113 = vsel %vm346, %v1060, 0
      %v1116 = vsel %vm346, %v1061, 0
      %v1119 = vsel %vm346, %v1062, 0
      %v1122 = vsel %vm346, %v1063, 0
      %v1125 = vsel %vm346, %v1064, 0
      %v1128 = vsel %vm346, %v1065, 0
      %v1131 = vsel %vm346, %v1066, 0
      %v1134 = vsel %vm346, %v1067, 0
      %v1137 = vsel %vm346, %v1068, 0
      %v1140 = vsel %vm346, %v1069, 0
      %v1143 = vsel %vm346, %v1070, 0
      %v1146 = vsel %vm346, %v1071, 0
      %v1149 = vsel %vm346, %v1072, 0
      %v1152 = vsel %vm346, %v1073, 0
      %v1155 = vsel %vm346, %v1074, 0
      %v1158 = vsel %vm346, %v1075, 0
      %v1161 = vsel %vm346, %v1076, 0
      %v1164 = vsel %vm346, %v1077, 0
      %v1167 = vsel %vm346, %v1078, 0
      %v1170 = vsel %vm346, %v1079, 0
      %v1173 = vsel %vm346, %v1080, 0
      %v1176 = vsel %vm346, %v1081, 0
      %v1179 = vsel %vm346, %v1082, 0
      %v1182 = vsel %vm443, %v1084, 0
      %1184 = vmatpush.msra.mxu0 0.0
      %1185 = vmatpush.msra.mxu0 0.0
      %1186 = vmatpush.msra.mxu0 0.0
      %1187 = vmatpush.msra.mxu0 0.0
      %1188 = vmatpush.msra.mxu0 0.0
      %1189 = vmatpush.msra.mxu0 0.0
      %1190 = vmatpush.msra.mxu0 0.0
      %1191 = vmatpush.msra.mxu0 0.0
      %1192 = vmatpush.msra.mxu0 0.0
      %1193 = vmatpush.msra.mxu0 0.0
      %1194 = vmatpush.msra.mxu0 0.0
      %1195 = vmatpush.msra.mxu0 0.0
      %1196 = vmatpush.msra.mxu0 0.0
      %1197 = vmatpush.msra.mxu0 0.0
      %1198 = vmatpush.msra.mxu0 0.0
      %1199 = vmatpush.msra.mxu0 %v1182
      %1200 = vmatmul.f32.gmra.mxu0 %v1086
      %v1201 = vpop.f32.mrf.mxu0
      %v1202 = vadd.f32 0.0, %v1201
      %1203 = vmatmul.f32.gmra.mxu0 %v1089
      %v1204 = vpop.f32.mrf.mxu0
      %v1205 = vadd.f32 0.0, %v1204
      %1206 = vmatmul.f32.gmra.mxu0 %v1092
      %v1207 = vpop.f32.mrf.mxu0
      %v1208 = vadd.f32 0.0, %v1207
      %1209 = vmatmul.f32.gmra.mxu0 %v1095
      %v1210 = vpop.f32.mrf.mxu0
      %v1211 = vadd.f32 0.0, %v1210
      %1212 = vmatmul.f32.gmra.mxu0 %v1098
      %v1213 = vpop.f32.mrf.mxu0
      %v1214 = vadd.f32 0.0, %v1213
      %1215 = vmatmul.f32.gmra.mxu0 %v1101
      %v1216 = vpop.f32.mrf.mxu0
      %v1217 = vadd.f32 0.0, %v1216
      %1218 = vmatmul.f32.gmra.mxu0 %v1104
      %v1219 = vpop.f32.mrf.mxu0
      %v1220 = vadd.f32 0.0, %v1219
      %1221 = vmatmul.f32.gmra.mxu0 %v1107
      %v1222 = vpop.f32.mrf.mxu0
      %v1223 = vadd.f32 0.0, %v1222
      %1224 = vmatmul.f32.gmra.mxu0 %v1110
      %v1225 = vpop.f32.mrf.mxu0
      %v1226 = vadd.f32 0.0, %v1225
      %1227 = vmatmul.f32.gmra.mxu0 %v1113
      %v1228 = vpop.f32.mrf.mxu0
      %v1229 = vadd.f32 0.0, %v1228
      %1230 = vmatmul.f32.gmra.mxu0 %v1116
      %v1231 = vpop.f32.mrf.mxu0
      %v1232 = vadd.f32 0.0, %v1231
      %1233 = vmatmul.f32.gmra.mxu0 %v1119
      %v1234 = vpop.f32.mrf.mxu0
      %v1235 = vadd.f32 0.0, %v1234
      %1236 = vmatmul.f32.gmra.mxu0 %v1122
      %v1237 = vpop.f32.mrf.mxu0
      %v1238 = vadd.f32 0.0, %v1237
      %1239 = vmatmul.f32.gmra.mxu0 %v1125
      %v1240 = vpop.f32.mrf.mxu0
      %v1241 = vadd.f32 0.0, %v1240
      %1242 = vmatmul.f32.gmra.mxu0 %v1128
      %v1243 = vpop.f32.mrf.mxu0
      %v1244 = vadd.f32 0.0, %v1243
      %1245 = vmatmul.f32.gmra.mxu0 %v1131
      %v1246 = vpop.f32.mrf.mxu0
      %v1247 = vadd.f32 0.0, %v1246
      %1248 = vmatmul.f32.gmra.mxu0 %v1134
      %v1249 = vpop.f32.mrf.mxu0
      %v1250 = vadd.f32 0.0, %v1249
      %1251 = vmatmul.f32.gmra.mxu0 %v1137
      %v1252 = vpop.f32.mrf.mxu0
      %v1253 = vadd.f32 0.0, %v1252
      %1254 = vmatmul.f32.gmra.mxu0 %v1140
      %v1255 = vpop.f32.mrf.mxu0
      %v1256 = vadd.f32 0.0, %v1255
      %1257 = vmatmul.f32.gmra.mxu0 %v1143
      %v1258 = vpop.f32.mrf.mxu0
      %v1259 = vadd.f32 0.0, %v1258
      %1260 = vmatmul.f32.gmra.mxu0 %v1146
      %v1261 = vpop.f32.mrf.mxu0
      %v1262 = vadd.f32 0.0, %v1261
      %1263 = vmatmul.f32.gmra.mxu0 %v1149
      %v1264 = vpop.f32.mrf.mxu0
      %v1265 = vadd.f32 0.0, %v1264
      %1266 = vmatmul.f32.gmra.mxu0 %v1152
      %v1267 = vpop.f32.mrf.mxu0
      %v1268 = vadd.f32 0.0, %v1267
      %1269 = vmatmul.f32.gmra.mxu0 %v1155
      %v1270 = vpop.f32.mrf.mxu0
      %v1271 = vadd.f32 0.0, %v1270
      %1272 = vmatmul.f32.gmra.mxu0 %v1158
      %v1273 = vpop.f32.mrf.mxu0
      %v1274 = vadd.f32 0.0, %v1273
      %1275 = vmatmul.f32.gmra.mxu0 %v1161
      %v1276 = vpop.f32.mrf.mxu0
      %v1277 = vadd.f32 0.0, %v1276
      %1278 = vmatmul.f32.gmra.mxu0 %v1164
      %v1279 = vpop.f32.mrf.mxu0
      %v1280 = vadd.f32 0.0, %v1279
      %1281 = vmatmul.f32.gmra.mxu0 %v1167
      %v1282 = vpop.f32.mrf.mxu0
      %v1283 = vadd.f32 0.0, %v1282
      %1284 = vmatmul.f32.gmra.mxu0 %v1170
      %v1285 = vpop.f32.mrf.mxu0
      %v1286 = vadd.f32 0.0, %v1285
      %1287 = vmatmul.f32.gmra.mxu0 %v1173
      %v1288 = vpop.f32.mrf.mxu0
      %v1289 = vadd.f32 0.0, %v1288
      %1290 = vmatmul.f32.gmra.mxu0 %v1176
      %v1291 = vpop.f32.mrf.mxu0
      %v1292 = vadd.f32 0.0, %v1291
      %1293 = vmatmul.f32.gmra.mxu0 %v1179
      %v1294 = vpop.f32.mrf.mxu0
      %v1295 = vadd.f32 0.0, %v1294
      %1296 = vdwg.mxu0
      %v1297 = vadd.f32 %v1018, %v1202
      %v1298 = vadd.f32 %v1019, %v1205
      %v1299 = vadd.f32 %v1020, %v1208
      %v1300 = vadd.f32 %v1021, %v1211
      %v1301 = vadd.f32 %v1022, %v1214
      %v1302 = vadd.f32 %v1023, %v1217
      %v1303 = vadd.f32 %v1024, %v1220
      %v1304 = vadd.f32 %v1025, %v1223
      %v1305 = vadd.f32 %v1026, %v1226
      %v1306 = vadd.f32 %v1027, %v1229
      %v1307 = vadd.f32 %v1028, %v1232
      %v1308 = vadd.f32 %v1029, %v1235
      %v1309 = vadd.f32 %v1030, %v1238
      %v1310 = vadd.f32 %v1031, %v1241
      %v1311 = vadd.f32 %v1032, %v1244
      %v1312 = vadd.f32 %v1033, %v1247
      %v1313 = vadd.f32 %v1034, %v1250
      %v1314 = vadd.f32 %v1035, %v1253
      %v1315 = vadd.f32 %v1036, %v1256
      %v1316 = vadd.f32 %v1037, %v1259
      %v1317 = vadd.f32 %v1038, %v1262
      %v1318 = vadd.f32 %v1039, %v1265
      %v1319 = vadd.f32 %v1040, %v1268
      %v1320 = vadd.f32 %v1041, %v1271
      %v1321 = vadd.f32 %v1042, %v1274
      %v1322 = vadd.f32 %v1043, %v1277
      %v1323 = vadd.f32 %v1044, %v1280
      %v1324 = vadd.f32 %v1045, %v1283
      %v1325 = vadd.f32 %v1046, %v1286
      %v1326 = vadd.f32 %v1047, %v1289
      %v1327 = vadd.f32 %v1048, %v1292
      %v1328 = vadd.f32 %v1049, %v1295
      %v1329 = vld [vmem:[%s1050 + $0x1] sm:$0xff]
      %v1330 = vld [vmem:[%s1050 + $0x9] sm:$0xff]
      %v1331 = vld [vmem:[%s1050 + $0x19] sm:$0xff]
      %v1332 = vld [vmem:[%s1050 + $0x21] sm:$0xff]
      %v1333 = vld [vmem:[%s1050 + $0x31] sm:$0xff]
      %v1334 = vld [vmem:[%s1050 + $0x39] sm:$0xff]
      %v1335 = vld [vmem:[%s1050 + $0x49] sm:$0xff]
      %v1336 = vld [vmem:[%s1050 + $0x51] sm:$0xff]
      %v1337 = vld [vmem:[%s1050 + $0x61] sm:$0xff]
      %v1338 = vld [vmem:[%s1050 + $0x69] sm:$0xff]
      %v1339 = vld [vmem:[%s1050 + $0x79] sm:$0xff]
      %v1340 = vld [vmem:[%s1050 + $0x81] sm:$0xff]
      %v1341 = vld [vmem:[%s1050 + $0x91] sm:$0xff]
      %v1342 = vld [vmem:[%s1050 + $0x99] sm:$0xff]
      %v1343 = vld [vmem:[%s1050 + $0xa9] sm:$0xff]
      %v1344 = vld [vmem:[%s1050 + $0xb1] sm:$0xff]
      %v1345 = vld [vmem:[%s1050 + $0xc1] sm:$0xff]
      %v1346 = vld [vmem:[%s1050 + $0xc9] sm:$0xff]
      %v1347 = vld [vmem:[%s1050 + $0xd9] sm:$0xff]
      %v1348 = vld [vmem:[%s1050 + $0xe1] sm:$0xff]
      %v1349 = vld [vmem:[%s1050 + $0xf1] sm:$0xff]
      %v1350 = vld [vmem:[%s1050 + $0xf9] sm:$0xff]
      %v1351 = vld [vmem:[%s1050 + $0x109] sm:$0xff]
      %v1352 = vld [vmem:[%s1050 + $0x111] sm:$0xff]
      %v1353 = vld [vmem:[%s1050 + $0x121] sm:$0xff]
      %v1354 = vld [vmem:[%s1050 + $0x129] sm:$0xff]
      %v1355 = vld [vmem:[%s1050 + $0x139] sm:$0xff]
      %v1356 = vld [vmem:[%s1050 + $0x141] sm:$0xff]
      %v1357 = vld [vmem:[%s1050 + $0x151] sm:$0xff]
      %v1358 = vld [vmem:[%s1050 + $0x159] sm:$0xff]
      %v1359 = vld [vmem:[%s1050 + $0x169] sm:$0xff]
      %v1360 = vld [vmem:[%s1050 + $0x171] sm:$0xff]
      %s1361 = scalar_lea.vmem %s1, 16
      %v1362 = vld [vmem:[%s1361] sm:$0xf]
      %v1364 = vsel %vm346, %v1329, 0
      %v1367 = vsel %vm346, %v1330, 0
      %v1370 = vsel %vm346, %v1331, 0
      %v1373 = vsel %vm346, %v1332, 0
      %v1376 = vsel %vm346, %v1333, 0
      %v1379 = vsel %vm346, %v1334, 0
      %v1382 = vsel %vm346, %v1335, 0
      %v1385 = vsel %vm346, %v1336, 0
      %v1388 = vsel %vm346, %v1337, 0
      %v1391 = vsel %vm346, %v1338, 0
      %v1394 = vsel %vm346, %v1339, 0
      %v1397 = vsel %vm346, %v1340, 0
      %v1400 = vsel %vm346, %v1341, 0
      %v1403 = vsel %vm346, %v1342, 0
      %v1406 = vsel %vm346, %v1343, 0
      %v1409 = vsel %vm346, %v1344, 0
      %v1412 = vsel %vm346, %v1345, 0
      %v1415 = vsel %vm346, %v1346, 0
      %v1418 = vsel %vm346, %v1347, 0
      %v1421 = vsel %vm346, %v1348, 0
      %v1424 = vsel %vm346, %v1349, 0
      %v1427 = vsel %vm346, %v1350, 0
      %v1430 = vsel %vm346, %v1351, 0
      %v1433 = vsel %vm346, %v1352, 0
      %v1436 = vsel %vm346, %v1353, 0
      %v1439 = vsel %vm346, %v1354, 0
      %v1442 = vsel %vm346, %v1355, 0
      %v1445 = vsel %vm346, %v1356, 0
      %v1448 = vsel %vm346, %v1357, 0
      %v1451 = vsel %vm346, %v1358, 0
      %v1454 = vsel %vm346, %v1359, 0
      %v1457 = vsel %vm346, %v1360, 0
      %v1460 = vsel %vm443, %v1362, 0
      %1462 = vmatpush.msra.mxu0 0.0
      %1463 = vmatpush.msra.mxu0 0.0
      %1464 = vmatpush.msra.mxu0 0.0
      %1465 = vmatpush.msra.mxu0 0.0
      %1466 = vmatpush.msra.mxu0 0.0
      %1467 = vmatpush.msra.mxu0 0.0
      %1468 = vmatpush.msra.mxu0 0.0
      %1469 = vmatpush.msra.mxu0 0.0
      %1470 = vmatpush.msra.mxu0 0.0
      %1471 = vmatpush.msra.mxu0 0.0
      %1472 = vmatpush.msra.mxu0 0.0
      %1473 = vmatpush.msra.mxu0 0.0
      %1474 = vmatpush.msra.mxu0 0.0
      %1475 = vmatpush.msra.mxu0 0.0
      %1476 = vmatpush.msra.mxu0 0.0
      %1477 = vmatpush.msra.mxu0 %v1460
      %1478 = vmatmul.f32.gmra.mxu0 %v1364
      %v1479 = vpop.f32.mrf.mxu0
      %v1480 = vadd.f32 0.0, %v1479
      %1481 = vmatmul.f32.gmra.mxu0 %v1367
      %v1482 = vpop.f32.mrf.mxu0
      %v1483 = vadd.f32 0.0, %v1482
      %1484 = vmatmul.f32.gmra.mxu0 %v1370
      %v1485 = vpop.f32.mrf.mxu0
      %v1486 = vadd.f32 0.0, %v1485
      %1487 = vmatmul.f32.gmra.mxu0 %v1373
      %v1488 = vpop.f32.mrf.mxu0
      %v1489 = vadd.f32 0.0, %v1488
      %1490 = vmatmul.f32.gmra.mxu0 %v1376
      %v1491 = vpop.f32.mrf.mxu0
      %v1492 = vadd.f32 0.0, %v1491
      %1493 = vmatmul.f32.gmra.mxu0 %v1379
      %v1494 = vpop.f32.mrf.mxu0
      %v1495 = vadd.f32 0.0, %v1494
      %1496 = vmatmul.f32.gmra.mxu0 %v1382
      %v1497 = vpop.f32.mrf.mxu0
      %v1498 = vadd.f32 0.0, %v1497
      %1499 = vmatmul.f32.gmra.mxu0 %v1385
      %v1500 = vpop.f32.mrf.mxu0
      %v1501 = vadd.f32 0.0, %v1500
      %1502 = vmatmul.f32.gmra.mxu0 %v1388
      %v1503 = vpop.f32.mrf.mxu0
      %v1504 = vadd.f32 0.0, %v1503
      %1505 = vmatmul.f32.gmra.mxu0 %v1391
      %v1506 = vpop.f32.mrf.mxu0
      %v1507 = vadd.f32 0.0, %v1506
      %1508 = vmatmul.f32.gmra.mxu0 %v1394
      %v1509 = vpop.f32.mrf.mxu0
      %v1510 = vadd.f32 0.0, %v1509
      %1511 = vmatmul.f32.gmra.mxu0 %v1397
      %v1512 = vpop.f32.mrf.mxu0
      %v1513 = vadd.f32 0.0, %v1512
      %1514 = vmatmul.f32.gmra.mxu0 %v1400
      %v1515 = vpop.f32.mrf.mxu0
      %v1516 = vadd.f32 0.0, %v1515
      %1517 = vmatmul.f32.gmra.mxu0 %v1403
      %v1518 = vpop.f32.mrf.mxu0
      %v1519 = vadd.f32 0.0, %v1518
      %1520 = vmatmul.f32.gmra.mxu0 %v1406
      %v1521 = vpop.f32.mrf.mxu0
      %v1522 = vadd.f32 0.0, %v1521
      %1523 = vmatmul.f32.gmra.mxu0 %v1409
      %v1524 = vpop.f32.mrf.mxu0
      %v1525 = vadd.f32 0.0, %v1524
      %1526 = vmatmul.f32.gmra.mxu0 %v1412
      %v1527 = vpop.f32.mrf.mxu0
      %v1528 = vadd.f32 0.0, %v1527
      %1529 = vmatmul.f32.gmra.mxu0 %v1415
      %v1530 = vpop.f32.mrf.mxu0
      %v1531 = vadd.f32 0.0, %v1530
      %1532 = vmatmul.f32.gmra.mxu0 %v1418
      %v1533 = vpop.f32.mrf.mxu0
      %v1534 = vadd.f32 0.0, %v1533
      %1535 = vmatmul.f32.gmra.mxu0 %v1421
      %v1536 = vpop.f32.mrf.mxu0
      %v1537 = vadd.f32 0.0, %v1536
      %1538 = vmatmul.f32.gmra.mxu0 %v1424
      %v1539 = vpop.f32.mrf.mxu0
      %v1540 = vadd.f32 0.0, %v1539
      %1541 = vmatmul.f32.gmra.mxu0 %v1427
      %v1542 = vpop.f32.mrf.mxu0
      %v1543 = vadd.f32 0.0, %v1542
      %1544 = vmatmul.f32.gmra.mxu0 %v1430
      %v1545 = vpop.f32.mrf.mxu0
      %v1546 = vadd.f32 0.0, %v1545
      %1547 = vmatmul.f32.gmra.mxu0 %v1433
      %v1548 = vpop.f32.mrf.mxu0
      %v1549 = vadd.f32 0.0, %v1548
      %1550 = vmatmul.f32.gmra.mxu0 %v1436
      %v1551 = vpop.f32.mrf.mxu0
      %v1552 = vadd.f32 0.0, %v1551
      %1553 = vmatmul.f32.gmra.mxu0 %v1439
      %v1554 = vpop.f32.mrf.mxu0
      %v1555 = vadd.f32 0.0, %v1554
      %1556 = vmatmul.f32.gmra.mxu0 %v1442
      %v1557 = vpop.f32.mrf.mxu0
      %v1558 = vadd.f32 0.0, %v1557
      %1559 = vmatmul.f32.gmra.mxu0 %v1445
      %v1560 = vpop.f32.mrf.mxu0
      %v1561 = vadd.f32 0.0, %v1560
      %1562 = vmatmul.f32.gmra.mxu0 %v1448
      %v1563 = vpop.f32.mrf.mxu0
      %v1564 = vadd.f32 0.0, %v1563
      %1565 = vmatmul.f32.gmra.mxu0 %v1451
      %v1566 = vpop.f32.mrf.mxu0
      %v1567 = vadd.f32 0.0, %v1566
      %1568 = vmatmul.f32.gmra.mxu0 %v1454
      %v1569 = vpop.f32.mrf.mxu0
      %v1570 = vadd.f32 0.0, %v1569
      %1571 = vmatmul.f32.gmra.mxu0 %v1457
      %v1572 = vpop.f32.mrf.mxu0
      %v1573 = vadd.f32 0.0, %v1572
      %1574 = vdwg.mxu0
      %v1575 = vadd.f32 %v1297, %v1480
      %v1576 = vadd.f32 %v1298, %v1483
      %v1577 = vadd.f32 %v1299, %v1486
      %v1578 = vadd.f32 %v1300, %v1489
      %v1579 = vadd.f32 %v1301, %v1492
      %v1580 = vadd.f32 %v1302, %v1495
      %v1581 = vadd.f32 %v1303, %v1498
      %v1582 = vadd.f32 %v1304, %v1501
      %v1583 = vadd.f32 %v1305, %v1504
      %v1584 = vadd.f32 %v1306, %v1507
      %v1585 = vadd.f32 %v1307, %v1510
      %v1586 = vadd.f32 %v1308, %v1513
      %v1587 = vadd.f32 %v1309, %v1516
      %v1588 = vadd.f32 %v1310, %v1519
      %v1589 = vadd.f32 %v1311, %v1522
      %v1590 = vadd.f32 %v1312, %v1525
      %v1591 = vadd.f32 %v1313, %v1528
      %v1592 = vadd.f32 %v1314, %v1531
      %v1593 = vadd.f32 %v1315, %v1534
      %v1594 = vadd.f32 %v1316, %v1537
      %v1595 = vadd.f32 %v1317, %v1540
      %v1596 = vadd.f32 %v1318, %v1543
      %v1597 = vadd.f32 %v1319, %v1546
      %v1598 = vadd.f32 %v1320, %v1549
      %v1599 = vadd.f32 %v1321, %v1552
      %v1600 = vadd.f32 %v1322, %v1555
      %v1601 = vadd.f32 %v1323, %v1558
      %v1602 = vadd.f32 %v1324, %v1561
      %v1603 = vadd.f32 %v1325, %v1564
      %v1604 = vadd.f32 %v1326, %v1567
      %v1605 = vadd.f32 %v1327, %v1570
      %v1606 = vadd.f32 %v1328, %v1573
      %v1607 = vld [vmem:[%s1050 + $0x2] sm:$0xff]
      %v1608 = vld [vmem:[%s1050 + $0xa] sm:$0xff]
      %v1609 = vld [vmem:[%s1050 + $0x1a] sm:$0xff]
      %v1610 = vld [vmem:[%s1050 + $0x22] sm:$0xff]
      %v1611 = vld [vmem:[%s1050 + $0x32] sm:$0xff]
      %v1612 = vld [vmem:[%s1050 + $0x3a] sm:$0xff]
      %v1613 = vld [vmem:[%s1050 + $0x4a] sm:$0xff]
      %v1614 = vld [vmem:[%s1050 + $0x52] sm:$0xff]
      %v1615 = vld [vmem:[%s1050 + $0x62] sm:$0xff]
      %v1616 = vld [vmem:[%s1050 + $0x6a] sm:$0xff]
      %v1617 = vld [vmem:[%s1050 + $0x7a] sm:$0xff]
      %v1618 = vld [vmem:[%s1050 + $0x82] sm:$0xff]
      %v1619 = vld [vmem:[%s1050 + $0x92] sm:$0xff]
      %v1620 = vld [vmem:[%s1050 + $0x9a] sm:$0xff]
      %v1621 = vld [vmem:[%s1050 + $0xaa] sm:$0xff]
      %v1622 = vld [vmem:[%s1050 + $0xb2] sm:$0xff]
      %v1623 = vld [vmem:[%s1050 + $0xc2] sm:$0xff]
      %v1624 = vld [vmem:[%s1050 + $0xca] sm:$0xff]
      %v1625 = vld [vmem:[%s1050 + $0xda] sm:$0xff]
      %v1626 = vld [vmem:[%s1050 + $0xe2] sm:$0xff]
      %v1627 = vld [vmem:[%s1050 + $0xf2] sm:$0xff]
      %v1628 = vld [vmem:[%s1050 + $0xfa] sm:$0xff]
      %v1629 = vld [vmem:[%s1050 + $0x10a] sm:$0xff]
      %v1630 = vld [vmem:[%s1050 + $0x112] sm:$0xff]
      %v1631 = vld [vmem:[%s1050 + $0x122] sm:$0xff]
      %v1632 = vld [vmem:[%s1050 + $0x12a] sm:$0xff]
      %v1633 = vld [vmem:[%s1050 + $0x13a] sm:$0xff]
      %v1634 = vld [vmem:[%s1050 + $0x142] sm:$0xff]
      %v1635 = vld [vmem:[%s1050 + $0x152] sm:$0xff]
      %v1636 = vld [vmem:[%s1050 + $0x15a] sm:$0xff]
      %v1637 = vld [vmem:[%s1050 + $0x16a] sm:$0xff]
      %v1638 = vld [vmem:[%s1050 + $0x172] sm:$0xff]
      %s1639 = scalar_lea.vmem %s1, 20
      %v1640 = vld [vmem:[%s1639] sm:$0xf]
      %v1642 = vsel %vm346, %v1607, 0
      %v1645 = vsel %vm346, %v1608, 0
      %v1648 = vsel %vm346, %v1609, 0
      %v1651 = vsel %vm346, %v1610, 0
      %v1654 = vsel %vm346, %v1611, 0
      %v1657 = vsel %vm346, %v1612, 0
      %v1660 = vsel %vm346, %v1613, 0
      %v1663 = vsel %vm346, %v1614, 0
      %v1666 = vsel %vm346, %v1615, 0
      %v1669 = vsel %vm346, %v1616, 0
      %v1672 = vsel %vm346, %v1617, 0
      %v1675 = vsel %vm346, %v1618, 0
      %v1678 = vsel %vm346, %v1619, 0
      %v1681 = vsel %vm346, %v1620, 0
      %v1684 = vsel %vm346, %v1621, 0
      %v1687 = vsel %vm346, %v1622, 0
      %v1690 = vsel %vm346, %v1623, 0
      %v1693 = vsel %vm346, %v1624, 0
      %v1696 = vsel %vm346, %v1625, 0
      %v1699 = vsel %vm346, %v1626, 0
      %v1702 = vsel %vm346, %v1627, 0
      %v1705 = vsel %vm346, %v1628, 0
      %v1708 = vsel %vm346, %v1629, 0
      %v1711 = vsel %vm346, %v1630, 0
      %v1714 = vsel %vm346, %v1631, 0
      %v1717 = vsel %vm346, %v1632, 0
      %v1720 = vsel %vm346, %v1633, 0
      %v1723 = vsel %vm346, %v1634, 0
      %v1726 = vsel %vm346, %v1635, 0
      %v1729 = vsel %vm346, %v1636, 0
      %v1732 = vsel %vm346, %v1637, 0
      %v1735 = vsel %vm346, %v1638, 0
      %v1738 = vsel %vm443, %v1640, 0
      %1740 = vmatpush.msra.mxu0 0.0
      %1741 = vmatpush.msra.mxu0 0.0
      %1742 = vmatpush.msra.mxu0 0.0
      %1743 = vmatpush.msra.mxu0 0.0
      %1744 = vmatpush.msra.mxu0 0.0
      %1745 = vmatpush.msra.mxu0 0.0
      %1746 = vmatpush.msra.mxu0 0.0
      %1747 = vmatpush.msra.mxu0 0.0
      %1748 = vmatpush.msra.mxu0 0.0
      %1749 = vmatpush.msra.mxu0 0.0
      %1750 = vmatpush.msra.mxu0 0.0
      %1751 = vmatpush.msra.mxu0 0.0
      %1752 = vmatpush.msra.mxu0 0.0
      %1753 = vmatpush.msra.mxu0 0.0
      %1754 = vmatpush.msra.mxu0 0.0
      %1755 = vmatpush.msra.mxu0 %v1738
      %1756 = vmatmul.f32.gmra.mxu0 %v1642
      %v1757 = vpop.f32.mrf.mxu0
      %v1758 = vadd.f32 0.0, %v1757
      %1759 = vmatmul.f32.gmra.mxu0 %v1645
      %v1760 = vpop.f32.mrf.mxu0
      %v1761 = vadd.f32 0.0, %v1760
      %1762 = vmatmul.f32.gmra.mxu0 %v1648
      %v1763 = vpop.f32.mrf.mxu0
      %v1764 = vadd.f32 0.0, %v1763
      %1765 = vmatmul.f32.gmra.mxu0 %v1651
      %v1766 = vpop.f32.mrf.mxu0
      %v1767 = vadd.f32 0.0, %v1766
      %1768 = vmatmul.f32.gmra.mxu0 %v1654
      %v1769 = vpop.f32.mrf.mxu0
      %v1770 = vadd.f32 0.0, %v1769
      %1771 = vmatmul.f32.gmra.mxu0 %v1657
      %v1772 = vpop.f32.mrf.mxu0
      %v1773 = vadd.f32 0.0, %v1772
      %1774 = vmatmul.f32.gmra.mxu0 %v1660
      %v1775 = vpop.f32.mrf.mxu0
      %v1776 = vadd.f32 0.0, %v1775
      %1777 = vmatmul.f32.gmra.mxu0 %v1663
      %v1778 = vpop.f32.mrf.mxu0
      %v1779 = vadd.f32 0.0, %v1778
      %1780 = vmatmul.f32.gmra.mxu0 %v1666
      %v1781 = vpop.f32.mrf.mxu0
      %v1782 = vadd.f32 0.0, %v1781
      %1783 = vmatmul.f32.gmra.mxu0 %v1669
      %v1784 = vpop.f32.mrf.mxu0
      %v1785 = vadd.f32 0.0, %v1784
      %1786 = vmatmul.f32.gmra.mxu0 %v1672
      %v1787 = vpop.f32.mrf.mxu0
      %v1788 = vadd.f32 0.0, %v1787
      %1789 = vmatmul.f32.gmra.mxu0 %v1675
      %v1790 = vpop.f32.mrf.mxu0
      %v1791 = vadd.f32 0.0, %v1790
      %1792 = vmatmul.f32.gmra.mxu0 %v1678
      %v1793 = vpop.f32.mrf.mxu0
      %v1794 = vadd.f32 0.0, %v1793
      %1795 = vmatmul.f32.gmra.mxu0 %v1681
      %v1796 = vpop.f32.mrf.mxu0
      %v1797 = vadd.f32 0.0, %v1796
      %1798 = vmatmul.f32.gmra.mxu0 %v1684
      %v1799 = vpop.f32.mrf.mxu0
      %v1800 = vadd.f32 0.0, %v1799
      %1801 = vmatmul.f32.gmra.mxu0 %v1687
      %v1802 = vpop.f32.mrf.mxu0
      %v1803 = vadd.f32 0.0, %v1802
      %1804 = vmatmul.f32.gmra.mxu0 %v1690
      %v1805 = vpop.f32.mrf.mxu0
      %v1806 = vadd.f32 0.0, %v1805
      %1807 = vmatmul.f32.gmra.mxu0 %v1693
      %v1808 = vpop.f32.mrf.mxu0
      %v1809 = vadd.f32 0.0, %v1808
      %1810 = vmatmul.f32.gmra.mxu0 %v1696
      %v1811 = vpop.f32.mrf.mxu0
      %v1812 = vadd.f32 0.0, %v1811
      %1813 = vmatmul.f32.gmra.mxu0 %v1699
      %v1814 = vpop.f32.mrf.mxu0
      %v1815 = vadd.f32 0.0, %v1814
      %1816 = vmatmul.f32.gmra.mxu0 %v1702
      %v1817 = vpop.f32.mrf.mxu0
      %v1818 = vadd.f32 0.0, %v1817
      %1819 = vmatmul.f32.gmra.mxu0 %v1705
      %v1820 = vpop.f32.mrf.mxu0
      %v1821 = vadd.f32 0.0, %v1820
      %1822 = vmatmul.f32.gmra.mxu0 %v1708
      %v1823 = vpop.f32.mrf.mxu0
      %v1824 = vadd.f32 0.0, %v1823
      %1825 = vmatmul.f32.gmra.mxu0 %v1711
      %v1826 = vpop.f32.mrf.mxu0
      %v1827 = vadd.f32 0.0, %v1826
      %1828 = vmatmul.f32.gmra.mxu0 %v1714
      %v1829 = vpop.f32.mrf.mxu0
      %v1830 = vadd.f32 0.0, %v1829
      %1831 = vmatmul.f32.gmra.mxu0 %v1717
      %v1832 = vpop.f32.mrf.mxu0
      %v1833 = vadd.f32 0.0, %v1832
      %1834 = vmatmul.f32.gmra.mxu0 %v1720
      %v1835 = vpop.f32.mrf.mxu0
      %v1836 = vadd.f32 0.0, %v1835
      %1837 = vmatmul.f32.gmra.mxu0 %v1723
      %v1838 = vpop.f32.mrf.mxu0
      %v1839 = vadd.f32 0.0, %v1838
      %1840 = vmatmul.f32.gmra.mxu0 %v1726
      %v1841 = vpop.f32.mrf.mxu0
      %v1842 = vadd.f32 0.0, %v1841
      %1843 = vmatmul.f32.gmra.mxu0 %v1729
      %v1844 = vpop.f32.mrf.mxu0
      %v1845 = vadd.f32 0.0, %v1844
      %1846 = vmatmul.f32.gmra.mxu0 %v1732
      %v1847 = vpop.f32.mrf.mxu0
      %v1848 = vadd.f32 0.0, %v1847
      %1849 = vmatmul.f32.gmra.mxu0 %v1735
      %v1850 = vpop.f32.mrf.mxu0
      %v1851 = vadd.f32 0.0, %v1850
      %1852 = vdwg.mxu0
      %v1853 = vadd.f32 %v1575, %v1758
      %v1854 = vadd.f32 %v1576, %v1761
      %v1855 = vadd.f32 %v1577, %v1764
      %v1856 = vadd.f32 %v1578, %v1767
      %v1857 = vadd.f32 %v1579, %v1770
      %v1858 = vadd.f32 %v1580, %v1773
      %v1859 = vadd.f32 %v1581, %v1776
      %v1860 = vadd.f32 %v1582, %v1779
      %v1861 = vadd.f32 %v1583, %v1782
      %v1862 = vadd.f32 %v1584, %v1785
      %v1863 = vadd.f32 %v1585, %v1788
      %v1864 = vadd.f32 %v1586, %v1791
      %v1865 = vadd.f32 %v1587, %v1794
      %v1866 = vadd.f32 %v1588, %v1797
      %v1867 = vadd.f32 %v1589, %v1800
      %v1868 = vadd.f32 %v1590, %v1803
      %v1869 = vadd.f32 %v1591, %v1806
      %v1870 = vadd.f32 %v1592, %v1809
      %v1871 = vadd.f32 %v1593, %v1812
      %v1872 = vadd.f32 %v1594, %v1815
      %v1873 = vadd.f32 %v1595, %v1818
      %v1874 = vadd.f32 %v1596, %v1821
      %v1875 = vadd.f32 %v1597, %v1824
      %v1876 = vadd.f32 %v1598, %v1827
      %v1877 = vadd.f32 %v1599, %v1830
      %v1878 = vadd.f32 %v1600, %v1833
      %v1879 = vadd.f32 %v1601, %v1836
      %v1880 = vadd.f32 %v1602, %v1839
      %v1881 = vadd.f32 %v1603, %v1842
      %v1882 = vadd.f32 %v1604, %v1845
      %v1883 = vadd.f32 %v1605, %v1848
      %v1884 = vadd.f32 %v1606, %v1851
      %s1885 = scalar_lea.vmem %s273, 48
      %v1886 = vld [vmem:[%s1885] sm:$0xff]
      %v1887 = vld [vmem:[%s1885 + $0x8] sm:$0xff]
      %v1888 = vld [vmem:[%s1885 + $0x18] sm:$0xff]
      %v1889 = vld [vmem:[%s1885 + $0x20] sm:$0xff]
      %v1890 = vld [vmem:[%s1885 + $0x30] sm:$0xff]
      %v1891 = vld [vmem:[%s1885 + $0x38] sm:$0xff]
      %v1892 = vld [vmem:[%s1885 + $0x48] sm:$0xff]
      %v1893 = vld [vmem:[%s1885 + $0x50] sm:$0xff]
      %v1894 = vld [vmem:[%s1885 + $0x60] sm:$0xff]
      %v1895 = vld [vmem:[%s1885 + $0x68] sm:$0xff]
      %v1896 = vld [vmem:[%s1885 + $0x78] sm:$0xff]
      %v1897 = vld [vmem:[%s1885 + $0x80] sm:$0xff]
      %v1898 = vld [vmem:[%s1885 + $0x90] sm:$0xff]
      %v1899 = vld [vmem:[%s1885 + $0x98] sm:$0xff]
      %v1900 = vld [vmem:[%s1885 + $0xa8] sm:$0xff]
      %v1901 = vld [vmem:[%s1885 + $0xb0] sm:$0xff]
      %v1902 = vld [vmem:[%s1885 + $0xc0] sm:$0xff]
      %v1903 = vld [vmem:[%s1885 + $0xc8] sm:$0xff]
      %v1904 = vld [vmem:[%s1885 + $0xd8] sm:$0xff]
      %v1905 = vld [vmem:[%s1885 + $0xe0] sm:$0xff]
      %v1906 = vld [vmem:[%s1885 + $0xf0] sm:$0xff]
      %v1907 = vld [vmem:[%s1885 + $0xf8] sm:$0xff]
      %v1908 = vld [vmem:[%s1885 + $0x108] sm:$0xff]
      %v1909 = vld [vmem:[%s1885 + $0x110] sm:$0xff]
      %v1910 = vld [vmem:[%s1885 + $0x120] sm:$0xff]
      %v1911 = vld [vmem:[%s1885 + $0x128] sm:$0xff]
      %v1912 = vld [vmem:[%s1885 + $0x138] sm:$0xff]
      %v1913 = vld [vmem:[%s1885 + $0x140] sm:$0xff]
      %v1914 = vld [vmem:[%s1885 + $0x150] sm:$0xff]
      %v1915 = vld [vmem:[%s1885 + $0x158] sm:$0xff]
      %v1916 = vld [vmem:[%s1885 + $0x168] sm:$0xff]
      %v1917 = vld [vmem:[%s1885 + $0x170] sm:$0xff]
      %s1918 = scalar_lea.vmem %s1, 24
      %v1919 = vld [vmem:[%s1918] sm:$0xf]
      %v1921 = vsel %vm346, %v1886, 0
      %v1924 = vsel %vm346, %v1887, 0
      %v1927 = vsel %vm346, %v1888, 0
      %v1930 = vsel %vm346, %v1889, 0
      %v1933 = vsel %vm346, %v1890, 0
      %v1936 = vsel %vm346, %v1891, 0
      %v1939 = vsel %vm346, %v1892, 0
      %v1942 = vsel %vm346, %v1893, 0
      %v1945 = vsel %vm346, %v1894, 0
      %v1948 = vsel %vm346, %v1895, 0
      %v1951 = vsel %vm346, %v1896, 0
      %v1954 = vsel %vm346, %v1897, 0
      %v1957 = vsel %vm346, %v1898, 0
      %v1960 = vsel %vm346, %v1899, 0
      %v1963 = vsel %vm346, %v1900, 0
      %v1966 = vsel %vm346, %v1901, 0
      %v1969 = vsel %vm346, %v1902, 0
      %v1972 = vsel %vm346, %v1903, 0
      %v1975 = vsel %vm346, %v1904, 0
      %v1978 = vsel %vm346, %v1905, 0
      %v1981 = vsel %vm346, %v1906, 0
      %v1984 = vsel %vm346, %v1907, 0
      %v1987 = vsel %vm346, %v1908, 0
      %v1990 = vsel %vm346, %v1909, 0
      %v1993 = vsel %vm346, %v1910, 0
      %v1996 = vsel %vm346, %v1911, 0
      %v1999 = vsel %vm346, %v1912, 0
      %v2002 = vsel %vm346, %v1913, 0
      %v2005 = vsel %vm346, %v1914, 0
      %v2008 = vsel %vm346, %v1915, 0
      %v2011 = vsel %vm346, %v1916, 0
      %v2014 = vsel %vm346, %v1917, 0
      %v2017 = vsel %vm443, %v1919, 0
      %2019 = vmatpush.msra.mxu0 0.0
      %2020 = vmatpush.msra.mxu0 0.0
      %2021 = vmatpush.msra.mxu0 0.0
      %2022 = vmatpush.msra.mxu0 0.0
      %2023 = vmatpush.msra.mxu0 0.0
      %2024 = vmatpush.msra.mxu0 0.0
      %2025 = vmatpush.msra.mxu0 0.0
      %2026 = vmatpush.msra.mxu0 0.0
      %2027 = vmatpush.msra.mxu0 0.0
      %2028 = vmatpush.msra.mxu0 0.0
      %2029 = vmatpush.msra.mxu0 0.0
      %2030 = vmatpush.msra.mxu0 0.0
      %2031 = vmatpush.msra.mxu0 0.0
      %2032 = vmatpush.msra.mxu0 0.0
      %2033 = vmatpush.msra.mxu0 0.0
      %2034 = vmatpush.msra.mxu0 %v2017
      %2035 = vmatmul.f32.gmra.mxu0 %v1921
      %v2036 = vpop.f32.mrf.mxu0
      %v2037 = vadd.f32 0.0, %v2036
      %2038 = vmatmul.f32.gmra.mxu0 %v1924
      %v2039 = vpop.f32.mrf.mxu0
      %v2040 = vadd.f32 0.0, %v2039
      %2041 = vmatmul.f32.gmra.mxu0 %v1927
      %v2042 = vpop.f32.mrf.mxu0
      %v2043 = vadd.f32 0.0, %v2042
      %2044 = vmatmul.f32.gmra.mxu0 %v1930
      %v2045 = vpop.f32.mrf.mxu0
      %v2046 = vadd.f32 0.0, %v2045
      %2047 = vmatmul.f32.gmra.mxu0 %v1933
      %v2048 = vpop.f32.mrf.mxu0
      %v2049 = vadd.f32 0.0, %v2048
      %2050 = vmatmul.f32.gmra.mxu0 %v1936
      %v2051 = vpop.f32.mrf.mxu0
      %v2052 = vadd.f32 0.0, %v2051
      %2053 = vmatmul.f32.gmra.mxu0 %v1939
      %v2054 = vpop.f32.mrf.mxu0
      %v2055 = vadd.f32 0.0, %v2054
      %2056 = vmatmul.f32.gmra.mxu0 %v1942
      %v2057 = vpop.f32.mrf.mxu0
      %v2058 = vadd.f32 0.0, %v2057
      %2059 = vmatmul.f32.gmra.mxu0 %v1945
      %v2060 = vpop.f32.mrf.mxu0
      %v2061 = vadd.f32 0.0, %v2060
      %2062 = vmatmul.f32.gmra.mxu0 %v1948
      %v2063 = vpop.f32.mrf.mxu0
      %v2064 = vadd.f32 0.0, %v2063
      %2065 = vmatmul.f32.gmra.mxu0 %v1951
      %v2066 = vpop.f32.mrf.mxu0
      %v2067 = vadd.f32 0.0, %v2066
      %2068 = vmatmul.f32.gmra.mxu0 %v1954
      %v2069 = vpop.f32.mrf.mxu0
      %v2070 = vadd.f32 0.0, %v2069
      %2071 = vmatmul.f32.gmra.mxu0 %v1957
      %v2072 = vpop.f32.mrf.mxu0
      %v2073 = vadd.f32 0.0, %v2072
      %2074 = vmatmul.f32.gmra.mxu0 %v1960
      %v2075 = vpop.f32.mrf.mxu0
      %v2076 = vadd.f32 0.0, %v2075
      %2077 = vmatmul.f32.gmra.mxu0 %v1963
      %v2078 = vpop.f32.mrf.mxu0
      %v2079 = vadd.f32 0.0, %v2078
      %2080 = vmatmul.f32.gmra.mxu0 %v1966
      %v2081 = vpop.f32.mrf.mxu0
      %v2082 = vadd.f32 0.0, %v2081
      %2083 = vmatmul.f32.gmra.mxu0 %v1969
      %v2084 = vpop.f32.mrf.mxu0
      %v2085 = vadd.f32 0.0, %v2084
      %2086 = vmatmul.f32.gmra.mxu0 %v1972
      %v2087 = vpop.f32.mrf.mxu0
      %v2088 = vadd.f32 0.0, %v2087
      %2089 = vmatmul.f32.gmra.mxu0 %v1975
      %v2090 = vpop.f32.mrf.mxu0
      %v2091 = vadd.f32 0.0, %v2090
      %2092 = vmatmul.f32.gmra.mxu0 %v1978
      %v2093 = vpop.f32.mrf.mxu0
      %v2094 = vadd.f32 0.0, %v2093
      %2095 = vmatmul.f32.gmra.mxu0 %v1981
      %v2096 = vpop.f32.mrf.mxu0
      %v2097 = vadd.f32 0.0, %v2096
      %2098 = vmatmul.f32.gmra.mxu0 %v1984
      %v2099 = vpop.f32.mrf.mxu0
      %v2100 = vadd.f32 0.0, %v2099
      %2101 = vmatmul.f32.gmra.mxu0 %v1987
      %v2102 = vpop.f32.mrf.mxu0
      %v2103 = vadd.f32 0.0, %v2102
      %2104 = vmatmul.f32.gmra.mxu0 %v1990
      %v2105 = vpop.f32.mrf.mxu0
      %v2106 = vadd.f32 0.0, %v2105
      %2107 = vmatmul.f32.gmra.mxu0 %v1993
      %v2108 = vpop.f32.mrf.mxu0
      %v2109 = vadd.f32 0.0, %v2108
      %2110 = vmatmul.f32.gmra.mxu0 %v1996
      %v2111 = vpop.f32.mrf.mxu0
      %v2112 = vadd.f32 0.0, %v2111
      %2113 = vmatmul.f32.gmra.mxu0 %v1999
      %v2114 = vpop.f32.mrf.mxu0
      %v2115 = vadd.f32 0.0, %v2114
      %2116 = vmatmul.f32.gmra.mxu0 %v2002
      %v2117 = vpop.f32.mrf.mxu0
      %v2118 = vadd.f32 0.0, %v2117
      %2119 = vmatmul.f32.gmra.mxu0 %v2005
      %v2120 = vpop.f32.mrf.mxu0
      %v2121 = vadd.f32 0.0, %v2120
      %2122 = vmatmul.f32.gmra.mxu0 %v2008
      %v2123 = vpop.f32.mrf.mxu0
      %v2124 = vadd.f32 0.0, %v2123
      %2125 = vmatmul.f32.gmra.mxu0 %v2011
      %v2126 = vpop.f32.mrf.mxu0
      %v2127 = vadd.f32 0.0, %v2126
      %2128 = vmatmul.f32.gmra.mxu0 %v2014
      %v2129 = vpop.f32.mrf.mxu0
      %v2130 = vadd.f32 0.0, %v2129
      %2131 = vdwg.mxu0
      %v2132 = vadd.f32 %v1853, %v2037
      %v2133 = vadd.f32 %v1854, %v2040
      %v2134 = vadd.f32 %v1855, %v2043
      %v2135 = vadd.f32 %v1856, %v2046
      %v2136 = vadd.f32 %v1857, %v2049
      %v2137 = vadd.f32 %v1858, %v2052
      %v2138 = vadd.f32 %v1859, %v2055
      %v2139 = vadd.f32 %v1860, %v2058
      %v2140 = vadd.f32 %v1861, %v2061
      %v2141 = vadd.f32 %v1862, %v2064
      %v2142 = vadd.f32 %v1863, %v2067
      %v2143 = vadd.f32 %v1864, %v2070
      %v2144 = vadd.f32 %v1865, %v2073
      %v2145 = vadd.f32 %v1866, %v2076
      %v2146 = vadd.f32 %v1867, %v2079
      %v2147 = vadd.f32 %v1868, %v2082
      %v2148 = vadd.f32 %v1869, %v2085
      %v2149 = vadd.f32 %v1870, %v2088
      %v2150 = vadd.f32 %v1871, %v2091
      %v2151 = vadd.f32 %v1872, %v2094
      %v2152 = vadd.f32 %v1873, %v2097
      %v2153 = vadd.f32 %v1874, %v2100
      %v2154 = vadd.f32 %v1875, %v2103
      %v2155 = vadd.f32 %v1876, %v2106
      %v2156 = vadd.f32 %v1877, %v2109
      %v2157 = vadd.f32 %v1878, %v2112
      %v2158 = vadd.f32 %v1879, %v2115
      %v2159 = vadd.f32 %v1880, %v2118
      %v2160 = vadd.f32 %v1881, %v2121
      %v2161 = vadd.f32 %v1882, %v2124
      %v2162 = vadd.f32 %v1883, %v2127
      %v2163 = vadd.f32 %v1884, %v2130
      %v2164 = vld [vmem:[%s1885 + $0x1] sm:$0xff]
      %v2165 = vld [vmem:[%s1885 + $0x9] sm:$0xff]
      %v2166 = vld [vmem:[%s1885 + $0x19] sm:$0xff]
      %v2167 = vld [vmem:[%s1885 + $0x21] sm:$0xff]
      %v2168 = vld [vmem:[%s1885 + $0x31] sm:$0xff]
      %v2169 = vld [vmem:[%s1885 + $0x39] sm:$0xff]
      %v2170 = vld [vmem:[%s1885 + $0x49] sm:$0xff]
      %v2171 = vld [vmem:[%s1885 + $0x51] sm:$0xff]
      %v2172 = vld [vmem:[%s1885 + $0x61] sm:$0xff]
      %v2173 = vld [vmem:[%s1885 + $0x69] sm:$0xff]
      %v2174 = vld [vmem:[%s1885 + $0x79] sm:$0xff]
      %v2175 = vld [vmem:[%s1885 + $0x81] sm:$0xff]
      %v2176 = vld [vmem:[%s1885 + $0x91] sm:$0xff]
      %v2177 = vld [vmem:[%s1885 + $0x99] sm:$0xff]
      %v2178 = vld [vmem:[%s1885 + $0xa9] sm:$0xff]
      %v2179 = vld [vmem:[%s1885 + $0xb1] sm:$0xff]
      %v2180 = vld [vmem:[%s1885 + $0xc1] sm:$0xff]
      %v2181 = vld [vmem:[%s1885 + $0xc9] sm:$0xff]
      %v2182 = vld [vmem:[%s1885 + $0xd9] sm:$0xff]
      %v2183 = vld [vmem:[%s1885 + $0xe1] sm:$0xff]
      %v2184 = vld [vmem:[%s1885 + $0xf1] sm:$0xff]
      %v2185 = vld [vmem:[%s1885 + $0xf9] sm:$0xff]
      %v2186 = vld [vmem:[%s1885 + $0x109] sm:$0xff]
      %v2187 = vld [vmem:[%s1885 + $0x111] sm:$0xff]
      %v2188 = vld [vmem:[%s1885 + $0x121] sm:$0xff]
      %v2189 = vld [vmem:[%s1885 + $0x129] sm:$0xff]
      %v2190 = vld [vmem:[%s1885 + $0x139] sm:$0xff]
      %v2191 = vld [vmem:[%s1885 + $0x141] sm:$0xff]
      %v2192 = vld [vmem:[%s1885 + $0x151] sm:$0xff]
      %v2193 = vld [vmem:[%s1885 + $0x159] sm:$0xff]
      %v2194 = vld [vmem:[%s1885 + $0x169] sm:$0xff]
      %v2195 = vld [vmem:[%s1885 + $0x171] sm:$0xff]
      %s2196 = scalar_lea.vmem %s1, 28
      %v2197 = vld [vmem:[%s2196] sm:$0xf]
      %v2199 = vsel %vm346, %v2164, 0
      %v2202 = vsel %vm346, %v2165, 0
      %v2205 = vsel %vm346, %v2166, 0
      %v2208 = vsel %vm346, %v2167, 0
      %v2211 = vsel %vm346, %v2168, 0
      %v2214 = vsel %vm346, %v2169, 0
      %v2217 = vsel %vm346, %v2170, 0
      %v2220 = vsel %vm346, %v2171, 0
      %v2223 = vsel %vm346, %v2172, 0
      %v2226 = vsel %vm346, %v2173, 0
      %v2229 = vsel %vm346, %v2174, 0
      %v2232 = vsel %vm346, %v2175, 0
      %v2235 = vsel %vm346, %v2176, 0
      %v2238 = vsel %vm346, %v2177, 0
      %v2241 = vsel %vm346, %v2178, 0
      %v2244 = vsel %vm346, %v2179, 0
      %v2247 = vsel %vm346, %v2180, 0
      %v2250 = vsel %vm346, %v2181, 0
      %v2253 = vsel %vm346, %v2182, 0
      %v2256 = vsel %vm346, %v2183, 0
      %v2259 = vsel %vm346, %v2184, 0
      %v2262 = vsel %vm346, %v2185, 0
      %v2265 = vsel %vm346, %v2186, 0
      %v2268 = vsel %vm346, %v2187, 0
      %v2271 = vsel %vm346, %v2188, 0
      %v2274 = vsel %vm346, %v2189, 0
      %v2277 = vsel %vm346, %v2190, 0
      %v2280 = vsel %vm346, %v2191, 0
      %v2283 = vsel %vm346, %v2192, 0
      %v2286 = vsel %vm346, %v2193, 0
      %v2289 = vsel %vm346, %v2194, 0
      %v2292 = vsel %vm346, %v2195, 0
      %v2295 = vsel %vm443, %v2197, 0
      %2297 = vmatpush.msra.mxu0 0.0
      %2298 = vmatpush.msra.mxu0 0.0
      %2299 = vmatpush.msra.mxu0 0.0
      %2300 = vmatpush.msra.mxu0 0.0
      %2301 = vmatpush.msra.mxu0 0.0
      %2302 = vmatpush.msra.mxu0 0.0
      %2303 = vmatpush.msra.mxu0 0.0
      %2304 = vmatpush.msra.mxu0 0.0
      %2305 = vmatpush.msra.mxu0 0.0
      %2306 = vmatpush.msra.mxu0 0.0
      %2307 = vmatpush.msra.mxu0 0.0
      %2308 = vmatpush.msra.mxu0 0.0
      %2309 = vmatpush.msra.mxu0 0.0
      %2310 = vmatpush.msra.mxu0 0.0
      %2311 = vmatpush.msra.mxu0 0.0
      %2312 = vmatpush.msra.mxu0 %v2295
      %2313 = vmatmul.f32.gmra.mxu0 %v2199
      %v2314 = vpop.f32.mrf.mxu0
      %v2315 = vadd.f32 0.0, %v2314
      %2316 = vmatmul.f32.gmra.mxu0 %v2202
      %v2317 = vpop.f32.mrf.mxu0
      %v2318 = vadd.f32 0.0, %v2317
      %2319 = vmatmul.f32.gmra.mxu0 %v2205
      %v2320 = vpop.f32.mrf.mxu0
      %v2321 = vadd.f32 0.0, %v2320
      %2322 = vmatmul.f32.gmra.mxu0 %v2208
      %v2323 = vpop.f32.mrf.mxu0
      %v2324 = vadd.f32 0.0, %v2323
      %2325 = vmatmul.f32.gmra.mxu0 %v2211
      %v2326 = vpop.f32.mrf.mxu0
      %v2327 = vadd.f32 0.0, %v2326
      %2328 = vmatmul.f32.gmra.mxu0 %v2214
      %v2329 = vpop.f32.mrf.mxu0
      %v2330 = vadd.f32 0.0, %v2329
      %2331 = vmatmul.f32.gmra.mxu0 %v2217
      %v2332 = vpop.f32.mrf.mxu0
      %v2333 = vadd.f32 0.0, %v2332
      %2334 = vmatmul.f32.gmra.mxu0 %v2220
      %v2335 = vpop.f32.mrf.mxu0
      %v2336 = vadd.f32 0.0, %v2335
      %2337 = vmatmul.f32.gmra.mxu0 %v2223
      %v2338 = vpop.f32.mrf.mxu0
      %v2339 = vadd.f32 0.0, %v2338
      %2340 = vmatmul.f32.gmra.mxu0 %v2226
      %v2341 = vpop.f32.mrf.mxu0
      %v2342 = vadd.f32 0.0, %v2341
      %2343 = vmatmul.f32.gmra.mxu0 %v2229
      %v2344 = vpop.f32.mrf.mxu0
      %v2345 = vadd.f32 0.0, %v2344
      %2346 = vmatmul.f32.gmra.mxu0 %v2232
      %v2347 = vpop.f32.mrf.mxu0
      %v2348 = vadd.f32 0.0, %v2347
      %2349 = vmatmul.f32.gmra.mxu0 %v2235
      %v2350 = vpop.f32.mrf.mxu0
      %v2351 = vadd.f32 0.0, %v2350
      %2352 = vmatmul.f32.gmra.mxu0 %v2238
      %v2353 = vpop.f32.mrf.mxu0
      %v2354 = vadd.f32 0.0, %v2353
      %2355 = vmatmul.f32.gmra.mxu0 %v2241
      %v2356 = vpop.f32.mrf.mxu0
      %v2357 = vadd.f32 0.0, %v2356
      %2358 = vmatmul.f32.gmra.mxu0 %v2244
      %v2359 = vpop.f32.mrf.mxu0
      %v2360 = vadd.f32 0.0, %v2359
      %2361 = vmatmul.f32.gmra.mxu0 %v2247
      %v2362 = vpop.f32.mrf.mxu0
      %v2363 = vadd.f32 0.0, %v2362
      %2364 = vmatmul.f32.gmra.mxu0 %v2250
      %v2365 = vpop.f32.mrf.mxu0
      %v2366 = vadd.f32 0.0, %v2365
      %2367 = vmatmul.f32.gmra.mxu0 %v2253
      %v2368 = vpop.f32.mrf.mxu0
      %v2369 = vadd.f32 0.0, %v2368
      %2370 = vmatmul.f32.gmra.mxu0 %v2256
      %v2371 = vpop.f32.mrf.mxu0
      %v2372 = vadd.f32 0.0, %v2371
      %2373 = vmatmul.f32.gmra.mxu0 %v2259
      %v2374 = vpop.f32.mrf.mxu0
      %v2375 = vadd.f32 0.0, %v2374
      %2376 = vmatmul.f32.gmra.mxu0 %v2262
      %v2377 = vpop.f32.mrf.mxu0
      %v2378 = vadd.f32 0.0, %v2377
      %2379 = vmatmul.f32.gmra.mxu0 %v2265
      %v2380 = vpop.f32.mrf.mxu0
      %v2381 = vadd.f32 0.0, %v2380
      %2382 = vmatmul.f32.gmra.mxu0 %v2268
      %v2383 = vpop.f32.mrf.mxu0
      %v2384 = vadd.f32 0.0, %v2383
      %2385 = vmatmul.f32.gmra.mxu0 %v2271
      %v2386 = vpop.f32.mrf.mxu0
      %v2387 = vadd.f32 0.0, %v2386
      %2388 = vmatmul.f32.gmra.mxu0 %v2274
      %v2389 = vpop.f32.mrf.mxu0
      %v2390 = vadd.f32 0.0, %v2389
      %2391 = vmatmul.f32.gmra.mxu0 %v2277
      %v2392 = vpop.f32.mrf.mxu0
      %v2393 = vadd.f32 0.0, %v2392
      %2394 = vmatmul.f32.gmra.mxu0 %v2280
      %v2395 = vpop.f32.mrf.mxu0
      %v2396 = vadd.f32 0.0, %v2395
      %2397 = vmatmul.f32.gmra.mxu0 %v2283
      %v2398 = vpop.f32.mrf.mxu0
      %v2399 = vadd.f32 0.0, %v2398
      %2400 = vmatmul.f32.gmra.mxu0 %v2286
      %v2401 = vpop.f32.mrf.mxu0
      %v2402 = vadd.f32 0.0, %v2401
      %2403 = vmatmul.f32.gmra.mxu0 %v2289
      %v2404 = vpop.f32.mrf.mxu0
      %v2405 = vadd.f32 0.0, %v2404
      %2406 = vmatmul.f32.gmra.mxu0 %v2292
      %v2407 = vpop.f32.mrf.mxu0
      %v2408 = vadd.f32 0.0, %v2407
      %2409 = vdwg.mxu0
      %v2410 = vadd.f32 %v2132, %v2315
      %v2411 = vadd.f32 %v2133, %v2318
      %v2412 = vadd.f32 %v2134, %v2321
      %v2413 = vadd.f32 %v2135, %v2324
      %v2414 = vadd.f32 %v2136, %v2327
      %v2415 = vadd.f32 %v2137, %v2330
      %v2416 = vadd.f32 %v2138, %v2333
      %v2417 = vadd.f32 %v2139, %v2336
      %v2418 = vadd.f32 %v2140, %v2339
      %v2419 = vadd.f32 %v2141, %v2342
      %v2420 = vadd.f32 %v2142, %v2345
      %v2421 = vadd.f32 %v2143, %v2348
      %v2422 = vadd.f32 %v2144, %v2351
      %v2423 = vadd.f32 %v2145, %v2354
      %v2424 = vadd.f32 %v2146, %v2357
      %v2425 = vadd.f32 %v2147, %v2360
      %v2426 = vadd.f32 %v2148, %v2363
      %v2427 = vadd.f32 %v2149, %v2366
      %v2428 = vadd.f32 %v2150, %v2369
      %v2429 = vadd.f32 %v2151, %v2372
      %v2430 = vadd.f32 %v2152, %v2375
      %v2431 = vadd.f32 %v2153, %v2378
      %v2432 = vadd.f32 %v2154, %v2381
      %v2433 = vadd.f32 %v2155, %v2384
      %v2434 = vadd.f32 %v2156, %v2387
      %v2435 = vadd.f32 %v2157, %v2390
      %v2436 = vadd.f32 %v2158, %v2393
      %v2437 = vadd.f32 %v2159, %v2396
      %v2438 = vadd.f32 %v2160, %v2399
      %v2439 = vadd.f32 %v2161, %v2402
      %v2440 = vadd.f32 %v2162, %v2405
      %v2441 = vadd.f32 %v2163, %v2408
      %v2442 = vld [vmem:[%s1885 + $0x2] sm:$0xff]
      %v2443 = vld [vmem:[%s1885 + $0xa] sm:$0xff]
      %v2444 = vld [vmem:[%s1885 + $0x1a] sm:$0xff]
      %v2445 = vld [vmem:[%s1885 + $0x22] sm:$0xff]
      %v2446 = vld [vmem:[%s1885 + $0x32] sm:$0xff]
      %v2447 = vld [vmem:[%s1885 + $0x3a] sm:$0xff]
      %v2448 = vld [vmem:[%s1885 + $0x4a] sm:$0xff]
      %v2449 = vld [vmem:[%s1885 + $0x52] sm:$0xff]
      %v2450 = vld [vmem:[%s1885 + $0x62] sm:$0xff]
      %v2451 = vld [vmem:[%s1885 + $0x6a] sm:$0xff]
      %v2452 = vld [vmem:[%s1885 + $0x7a] sm:$0xff]
      %v2453 = vld [vmem:[%s1885 + $0x82] sm:$0xff]
      %v2454 = vld [vmem:[%s1885 + $0x92] sm:$0xff]
      %v2455 = vld [vmem:[%s1885 + $0x9a] sm:$0xff]
      %v2456 = vld [vmem:[%s1885 + $0xaa] sm:$0xff]
      %v2457 = vld [vmem:[%s1885 + $0xb2] sm:$0xff]
      %v2458 = vld [vmem:[%s1885 + $0xc2] sm:$0xff]
      %v2459 = vld [vmem:[%s1885 + $0xca] sm:$0xff]
      %v2460 = vld [vmem:[%s1885 + $0xda] sm:$0xff]
      %v2461 = vld [vmem:[%s1885 + $0xe2] sm:$0xff]
      %v2462 = vld [vmem:[%s1885 + $0xf2] sm:$0xff]
      %v2463 = vld [vmem:[%s1885 + $0xfa] sm:$0xff]
      %v2464 = vld [vmem:[%s1885 + $0x10a] sm:$0xff]
      %v2465 = vld [vmem:[%s1885 + $0x112] sm:$0xff]
      %v2466 = vld [vmem:[%s1885 + $0x122] sm:$0xff]
      %v2467 = vld [vmem:[%s1885 + $0x12a] sm:$0xff]
      %v2468 = vld [vmem:[%s1885 + $0x13a] sm:$0xff]
      %v2469 = vld [vmem:[%s1885 + $0x142] sm:$0xff]
      %v2470 = vld [vmem:[%s1885 + $0x152] sm:$0xff]
      %v2471 = vld [vmem:[%s1885 + $0x15a] sm:$0xff]
      %v2472 = vld [vmem:[%s1885 + $0x16a] sm:$0xff]
      %v2473 = vld [vmem:[%s1885 + $0x172] sm:$0xff]
      %s2474 = scalar_lea.vmem %s1, 32
      %v2475 = vld [vmem:[%s2474] sm:$0xf]
      %v2477 = vsel %vm346, %v2442, 0
      %v2480 = vsel %vm346, %v2443, 0
      %v2483 = vsel %vm346, %v2444, 0
      %v2486 = vsel %vm346, %v2445, 0
      %v2489 = vsel %vm346, %v2446, 0
      %v2492 = vsel %vm346, %v2447, 0
      %v2495 = vsel %vm346, %v2448, 0
      %v2498 = vsel %vm346, %v2449, 0
      %v2501 = vsel %vm346, %v2450, 0
      %v2504 = vsel %vm346, %v2451, 0
      %v2507 = vsel %vm346, %v2452, 0
      %v2510 = vsel %vm346, %v2453, 0
      %v2513 = vsel %vm346, %v2454, 0
      %v2516 = vsel %vm346, %v2455, 0
      %v2519 = vsel %vm346, %v2456, 0
      %v2522 = vsel %vm346, %v2457, 0
      %v2525 = vsel %vm346, %v2458, 0
      %v2528 = vsel %vm346, %v2459, 0
      %v2531 = vsel %vm346, %v2460, 0
      %v2534 = vsel %vm346, %v2461, 0
      %v2537 = vsel %vm346, %v2462, 0
      %v2540 = vsel %vm346, %v2463, 0
      %v2543 = vsel %vm346, %v2464, 0
      %v2546 = vsel %vm346, %v2465, 0
      %v2549 = vsel %vm346, %v2466, 0
      %v2552 = vsel %vm346, %v2467, 0
      %v2555 = vsel %vm346, %v2468, 0
      %v2558 = vsel %vm346, %v2469, 0
      %v2561 = vsel %vm346, %v2470, 0
      %v2564 = vsel %vm346, %v2471, 0
      %v2567 = vsel %vm346, %v2472, 0
      %v2570 = vsel %vm346, %v2473, 0
      %v2573 = vsel %vm443, %v2475, 0
      %2575 = vmatpush.msra.mxu0 0.0
      %2576 = vmatpush.msra.mxu0 0.0
      %2577 = vmatpush.msra.mxu0 0.0
      %2578 = vmatpush.msra.mxu0 0.0
      %2579 = vmatpush.msra.mxu0 0.0
      %2580 = vmatpush.msra.mxu0 0.0
      %2581 = vmatpush.msra.mxu0 0.0
      %2582 = vmatpush.msra.mxu0 0.0
      %2583 = vmatpush.msra.mxu0 0.0
      %2584 = vmatpush.msra.mxu0 0.0
      %2585 = vmatpush.msra.mxu0 0.0
      %2586 = vmatpush.msra.mxu0 0.0
      %2587 = vmatpush.msra.mxu0 0.0
      %2588 = vmatpush.msra.mxu0 0.0
      %2589 = vmatpush.msra.mxu0 0.0
      %2590 = vmatpush.msra.mxu0 %v2573
      %2591 = vmatmul.f32.gmra.mxu0 %v2477
      %v2592 = vpop.f32.mrf.mxu0
      %v2593 = vadd.f32 0.0, %v2592
      %2594 = vmatmul.f32.gmra.mxu0 %v2480
      %v2595 = vpop.f32.mrf.mxu0
      %v2596 = vadd.f32 0.0, %v2595
      %2597 = vmatmul.f32.gmra.mxu0 %v2483
      %v2598 = vpop.f32.mrf.mxu0
      %v2599 = vadd.f32 0.0, %v2598
      %2600 = vmatmul.f32.gmra.mxu0 %v2486
      %v2601 = vpop.f32.mrf.mxu0
      %v2602 = vadd.f32 0.0, %v2601
      %2603 = vmatmul.f32.gmra.mxu0 %v2489
      %v2604 = vpop.f32.mrf.mxu0
      %v2605 = vadd.f32 0.0, %v2604
      %2606 = vmatmul.f32.gmra.mxu0 %v2492
      %v2607 = vpop.f32.mrf.mxu0
      %v2608 = vadd.f32 0.0, %v2607
      %2609 = vmatmul.f32.gmra.mxu0 %v2495
      %v2610 = vpop.f32.mrf.mxu0
      %v2611 = vadd.f32 0.0, %v2610
      %2612 = vmatmul.f32.gmra.mxu0 %v2498
      %v2613 = vpop.f32.mrf.mxu0
      %v2614 = vadd.f32 0.0, %v2613
      %2615 = vmatmul.f32.gmra.mxu0 %v2501
      %v2616 = vpop.f32.mrf.mxu0
      %v2617 = vadd.f32 0.0, %v2616
      %2618 = vmatmul.f32.gmra.mxu0 %v2504
      %v2619 = vpop.f32.mrf.mxu0
      %v2620 = vadd.f32 0.0, %v2619
      %2621 = vmatmul.f32.gmra.mxu0 %v2507
      %v2622 = vpop.f32.mrf.mxu0
      %v2623 = vadd.f32 0.0, %v2622
      %2624 = vmatmul.f32.gmra.mxu0 %v2510
      %v2625 = vpop.f32.mrf.mxu0
      %v2626 = vadd.f32 0.0, %v2625
      %2627 = vmatmul.f32.gmra.mxu0 %v2513
      %v2628 = vpop.f32.mrf.mxu0
      %v2629 = vadd.f32 0.0, %v2628
      %2630 = vmatmul.f32.gmra.mxu0 %v2516
      %v2631 = vpop.f32.mrf.mxu0
      %v2632 = vadd.f32 0.0, %v2631
      %2633 = vmatmul.f32.gmra.mxu0 %v2519
      %v2634 = vpop.f32.mrf.mxu0
      %v2635 = vadd.f32 0.0, %v2634
      %2636 = vmatmul.f32.gmra.mxu0 %v2522
      %v2637 = vpop.f32.mrf.mxu0
      %v2638 = vadd.f32 0.0, %v2637
      %2639 = vmatmul.f32.gmra.mxu0 %v2525
      %v2640 = vpop.f32.mrf.mxu0
      %v2641 = vadd.f32 0.0, %v2640
      %2642 = vmatmul.f32.gmra.mxu0 %v2528
      %v2643 = vpop.f32.mrf.mxu0
      %v2644 = vadd.f32 0.0, %v2643
      %2645 = vmatmul.f32.gmra.mxu0 %v2531
      %v2646 = vpop.f32.mrf.mxu0
      %v2647 = vadd.f32 0.0, %v2646
      %2648 = vmatmul.f32.gmra.mxu0 %v2534
      %v2649 = vpop.f32.mrf.mxu0
      %v2650 = vadd.f32 0.0, %v2649
      %2651 = vmatmul.f32.gmra.mxu0 %v2537
      %v2652 = vpop.f32.mrf.mxu0
      %v2653 = vadd.f32 0.0, %v2652
      %2654 = vmatmul.f32.gmra.mxu0 %v2540
      %v2655 = vpop.f32.mrf.mxu0
      %v2656 = vadd.f32 0.0, %v2655
      %2657 = vmatmul.f32.gmra.mxu0 %v2543
      %v2658 = vpop.f32.mrf.mxu0
      %v2659 = vadd.f32 0.0, %v2658
      %2660 = vmatmul.f32.gmra.mxu0 %v2546
      %v2661 = vpop.f32.mrf.mxu0
      %v2662 = vadd.f32 0.0, %v2661
      %2663 = vmatmul.f32.gmra.mxu0 %v2549
      %v2664 = vpop.f32.mrf.mxu0
      %v2665 = vadd.f32 0.0, %v2664
      %2666 = vmatmul.f32.gmra.mxu0 %v2552
      %v2667 = vpop.f32.mrf.mxu0
      %v2668 = vadd.f32 0.0, %v2667
      %2669 = vmatmul.f32.gmra.mxu0 %v2555
      %v2670 = vpop.f32.mrf.mxu0
      %v2671 = vadd.f32 0.0, %v2670
      %2672 = vmatmul.f32.gmra.mxu0 %v2558
      %v2673 = vpop.f32.mrf.mxu0
      %v2674 = vadd.f32 0.0, %v2673
      %2675 = vmatmul.f32.gmra.mxu0 %v2561
      %v2676 = vpop.f32.mrf.mxu0
      %v2677 = vadd.f32 0.0, %v2676
      %2678 = vmatmul.f32.gmra.mxu0 %v2564
      %v2679 = vpop.f32.mrf.mxu0
      %v2680 = vadd.f32 0.0, %v2679
      %2681 = vmatmul.f32.gmra.mxu0 %v2567
      %v2682 = vpop.f32.mrf.mxu0
      %v2683 = vadd.f32 0.0, %v2682
      %2684 = vmatmul.f32.gmra.mxu0 %v2570
      %v2685 = vpop.f32.mrf.mxu0
      %v2686 = vadd.f32 0.0, %v2685
      %2687 = vdwg.mxu0
      %v2688 = vadd.f32 %v2410, %v2593
      %v2689 = vadd.f32 %v2411, %v2596
      %v2690 = vadd.f32 %v2412, %v2599
      %v2691 = vadd.f32 %v2413, %v2602
      %v2692 = vadd.f32 %v2414, %v2605
      %v2693 = vadd.f32 %v2415, %v2608
      %v2694 = vadd.f32 %v2416, %v2611
      %v2695 = vadd.f32 %v2417, %v2614
      %v2696 = vadd.f32 %v2418, %v2617
      %v2697 = vadd.f32 %v2419, %v2620
      %v2698 = vadd.f32 %v2420, %v2623
      %v2699 = vadd.f32 %v2421, %v2626
      %v2700 = vadd.f32 %v2422, %v2629
      %v2701 = vadd.f32 %v2423, %v2632
      %v2702 = vadd.f32 %v2424, %v2635
      %v2703 = vadd.f32 %v2425, %v2638
      %v2704 = vadd.f32 %v2426, %v2641
      %v2705 = vadd.f32 %v2427, %v2644
      %v2706 = vadd.f32 %v2428, %v2647
      %v2707 = vadd.f32 %v2429, %v2650
      %v2708 = vadd.f32 %v2430, %v2653
      %v2709 = vadd.f32 %v2431, %v2656
      %v2710 = vadd.f32 %v2432, %v2659
      %v2711 = vadd.f32 %v2433, %v2662
      %v2712 = vadd.f32 %v2434, %v2665
      %v2713 = vadd.f32 %v2435, %v2668
      %v2714 = vadd.f32 %v2436, %v2671
      %v2715 = vadd.f32 %v2437, %v2674
      %v2716 = vadd.f32 %v2438, %v2677
      %v2717 = vadd.f32 %v2439, %v2680
      %v2718 = vadd.f32 %v2440, %v2683
      %v2719 = vadd.f32 %v2441, %v2686
      %v2720 = vld [vmem:[%s2] sm:$0x1]
      %v2722 = vperm.slane %v2720, 0
      %v2724 = vmul.f32 %v2688, %v2722
      %v2725 = vmul.f32 %v2689, %v2722
      %v2726 = vmul.f32 %v2690, %v2722
      %v2727 = vmul.f32 %v2691, %v2722
      %v2728 = vmul.f32 %v2692, %v2722
      %v2729 = vmul.f32 %v2693, %v2722
      %v2730 = vmul.f32 %v2694, %v2722
      %v2731 = vmul.f32 %v2695, %v2722
      %v2732 = vmul.f32 %v2696, %v2722
      %v2733 = vmul.f32 %v2697, %v2722
      %v2734 = vmul.f32 %v2698, %v2722
      %v2735 = vmul.f32 %v2699, %v2722
      %v2736 = vmul.f32 %v2700, %v2722
      %v2737 = vmul.f32 %v2701, %v2722
      %v2738 = vmul.f32 %v2702, %v2722
      %v2739 = vmul.f32 %v2703, %v2722
      %v2740 = vmul.f32 %v2704, %v2722
      %v2741 = vmul.f32 %v2705, %v2722
      %v2742 = vmul.f32 %v2706, %v2722
      %v2743 = vmul.f32 %v2707, %v2722
      %v2744 = vmul.f32 %v2708, %v2722
      %v2745 = vmul.f32 %v2709, %v2722
      %v2746 = vmul.f32 %v2710, %v2722
      %v2747 = vmul.f32 %v2711, %v2722
      %v2748 = vmul.f32 %v2712, %v2722
      %v2749 = vmul.f32 %v2713, %v2722
      %v2750 = vmul.f32 %v2714, %v2722
      %v2751 = vmul.f32 %v2715, %v2722
      %v2752 = vmul.f32 %v2716, %v2722
      %v2753 = vmul.f32 %v2717, %v2722
      %v2754 = vmul.f32 %v2718, %v2722
      %v2755 = vmul.f32 %v2719, %v2722
      %v2756 = vld [vmem:[%s3] sm:$0x1]
      %v2758 = vperm.slane %v2756, 0
      %v2760 = vadd.f32 %v2724, %v2758
      %v2761 = vadd.f32 %v2725, %v2758
      %v2762 = vadd.f32 %v2726, %v2758
      %v2763 = vadd.f32 %v2727, %v2758
      %v2764 = vadd.f32 %v2728, %v2758
      %v2765 = vadd.f32 %v2729, %v2758
      %v2766 = vadd.f32 %v2730, %v2758
      %v2767 = vadd.f32 %v2731, %v2758
      %v2768 = vadd.f32 %v2732, %v2758
      %v2769 = vadd.f32 %v2733, %v2758
      %v2770 = vadd.f32 %v2734, %v2758
      %v2771 = vadd.f32 %v2735, %v2758
      %v2772 = vadd.f32 %v2736, %v2758
      %v2773 = vadd.f32 %v2737, %v2758
      %v2774 = vadd.f32 %v2738, %v2758
      %v2775 = vadd.f32 %v2739, %v2758
      %v2776 = vadd.f32 %v2740, %v2758
      %v2777 = vadd.f32 %v2741, %v2758
      %v2778 = vadd.f32 %v2742, %v2758
      %v2779 = vadd.f32 %v2743, %v2758
      %v2780 = vadd.f32 %v2744, %v2758
      %v2781 = vadd.f32 %v2745, %v2758
      %v2782 = vadd.f32 %v2746, %v2758
      %v2783 = vadd.f32 %v2747, %v2758
      %v2784 = vadd.f32 %v2748, %v2758
      %v2785 = vadd.f32 %v2749, %v2758
      %v2786 = vadd.f32 %v2750, %v2758
      %v2787 = vadd.f32 %v2751, %v2758
      %v2788 = vadd.f32 %v2752, %v2758
      %v2789 = vadd.f32 %v2753, %v2758
      %v2790 = vadd.f32 %v2754, %v2758
      %v2791 = vadd.f32 %v2755, %v2758
      %v2792 = vmax.f32 %v2760, 0.0
      %v2793 = vmax.f32 %v2761, 0.0
      %v2794 = vmax.f32 %v2762, 0.0
      %v2795 = vmax.f32 %v2763, 0.0
      %v2796 = vmax.f32 %v2764, 0.0
      %v2797 = vmax.f32 %v2765, 0.0
      %v2798 = vmax.f32 %v2766, 0.0
      %v2799 = vmax.f32 %v2767, 0.0
      %v2800 = vmax.f32 %v2768, 0.0
      %v2801 = vmax.f32 %v2769, 0.0
      %v2802 = vmax.f32 %v2770, 0.0
      %v2803 = vmax.f32 %v2771, 0.0
      %v2804 = vmax.f32 %v2772, 0.0
      %v2805 = vmax.f32 %v2773, 0.0
      %v2806 = vmax.f32 %v2774, 0.0
      %v2807 = vmax.f32 %v2775, 0.0
      %v2808 = vmax.f32 %v2776, 0.0
      %v2809 = vmax.f32 %v2777, 0.0
      %v2810 = vmax.f32 %v2778, 0.0
      %v2811 = vmax.f32 %v2779, 0.0
      %v2812 = vmax.f32 %v2780, 0.0
      %v2813 = vmax.f32 %v2781, 0.0
      %v2814 = vmax.f32 %v2782, 0.0
      %v2815 = vmax.f32 %v2783, 0.0
      %v2816 = vmax.f32 %v2784, 0.0
      %v2817 = vmax.f32 %v2785, 0.0
      %v2818 = vmax.f32 %v2786, 0.0
      %v2819 = vmax.f32 %v2787, 0.0
      %v2820 = vmax.f32 %v2788, 0.0
      %v2821 = vmax.f32 %v2789, 0.0
      %v2822 = vmax.f32 %v2790, 0.0
      %v2823 = vmax.f32 %v2791, 0.0
      %2824 = vst.msk [vmem:[#allocation2] sm:$0xff] %vm346, 0.0
      %2825 = vst.msk [vmem:[#allocation2 + $0x8] sm:$0xff] %vm346, 0.0
      %vm2826 = vcmask 25600
      %2827 = vst.msk [vmem:[#allocation2 + $0x10] sm:$0x3] %vm2826, 0.0
      %2828 = vst.msk [vmem:[#allocation2 + $0x18] sm:$0xff] %vm346, 0.0
      %2829 = vst.msk [vmem:[#allocation2 + $0x20] sm:$0xff] %vm346, 0.0
      %2830 = vst.msk [vmem:[#allocation2 + $0x28] sm:$0x3] %vm2826, 0.0
      %2831 = vst.msk [vmem:[#allocation2 + $0x30] sm:$0xff] %vm346, 0.0
      %2832 = vst.msk [vmem:[#allocation2 + $0x38] sm:$0xff] %vm346, 0.0
      %2833 = vst.msk [vmem:[#allocation2 + $0x40] sm:$0x3] %vm2826, 0.0
      %2834 = vst.msk [vmem:[#allocation2 + $0x48] sm:$0xff] %vm346, 0.0
      %2835 = vst.msk [vmem:[#allocation2 + $0x50] sm:$0xff] %vm346, 0.0
      %2836 = vst.msk [vmem:[#allocation2 + $0x58] sm:$0x3] %vm2826, 0.0
      %2837 = vst.msk [vmem:[#allocation2 + $0x60] sm:$0xff] %vm346, 0.0
      %2838 = vst.msk [vmem:[#allocation2 + $0x68] sm:$0xff] %vm346, 0.0
      %2839 = vst.msk [vmem:[#allocation2 + $0x70] sm:$0x3] %vm2826, 0.0
      %2840 = vst.msk [vmem:[#allocation2 + $0x78] sm:$0xff] %vm346, 0.0
      %2841 = vst.msk [vmem:[#allocation2 + $0x80] sm:$0xff] %vm346, 0.0
      %2842 = vst.msk [vmem:[#allocation2 + $0x88] sm:$0x3] %vm2826, 0.0
      %2843 = vst.msk [vmem:[#allocation2 + $0x90] sm:$0xff] %vm346, 0.0
      %2844 = vst.msk [vmem:[#allocation2 + $0x98] sm:$0xff] %vm346, 0.0
      %2845 = vst.msk [vmem:[#allocation2 + $0xa0] sm:$0x3] %vm2826, 0.0
      %2846 = vst.msk [vmem:[#allocation2 + $0xa8] sm:$0xff] %vm346, 0.0
      %2847 = vst.msk [vmem:[#allocation2 + $0xb0] sm:$0xff] %vm346, 0.0
      %2848 = vst.msk [vmem:[#allocation2 + $0xb8] sm:$0x3] %vm2826, 0.0
      %2849 = vst.msk [vmem:[#allocation2 + $0xc0] sm:$0xff] %vm346, 0.0
      %2850 = vst.msk [vmem:[#allocation2 + $0xc8] sm:$0xff] %vm346, 0.0
      %2851 = vst.msk [vmem:[#allocation2 + $0xd0] sm:$0x3] %vm2826, 0.0
      %2852 = vst.msk [vmem:[#allocation2 + $0xd8] sm:$0xff] %vm346, 0.0
      %2853 = vst.msk [vmem:[#allocation2 + $0xe0] sm:$0xff] %vm346, 0.0
      %2854 = vst.msk [vmem:[#allocation2 + $0xe8] sm:$0x3] %vm2826, 0.0
      %2855 = vst.msk [vmem:[#allocation2 + $0xf0] sm:$0xff] %vm346, 0.0
      %2856 = vst.msk [vmem:[#allocation2 + $0xf8] sm:$0xff] %vm346, 0.0
      %2857 = vst.msk [vmem:[#allocation2 + $0x100] sm:$0x3] %vm2826, 0.0
      %2858 = vst.msk [vmem:[#allocation2 + $0x108] sm:$0xff] %vm346, 0.0
      %2859 = vst.msk [vmem:[#allocation2 + $0x110] sm:$0xff] %vm346, 0.0
      %2860 = vst.msk [vmem:[#allocation2 + $0x118] sm:$0x3] %vm2826, 0.0
      %2861 = vst.msk [vmem:[#allocation2 + $0x120] sm:$0xff] %vm346, 0.0
      %2862 = vst.msk [vmem:[#allocation2 + $0x128] sm:$0xff] %vm346, 0.0
      %2863 = vst.msk [vmem:[#allocation2 + $0x130] sm:$0x3] %vm2826, 0.0
      %2864 = vst.msk [vmem:[#allocation2 + $0x138] sm:$0xff] %vm346, 0.0
      %2865 = vst.msk [vmem:[#allocation2 + $0x140] sm:$0xff] %vm346, 0.0
      %2866 = vst.msk [vmem:[#allocation2 + $0x148] sm:$0x3] %vm2826, 0.0
      %2867 = vst.msk [vmem:[#allocation2 + $0x150] sm:$0xff] %vm346, 0.0
      %2868 = vst.msk [vmem:[#allocation2 + $0x158] sm:$0xff] %vm346, 0.0
      %2869 = vst.msk [vmem:[#allocation2 + $0x160] sm:$0x3] %vm2826, 0.0
      %2870 = vst.msk [vmem:[#allocation2 + $0x168] sm:$0xff] %vm346, 0.0
      %2871 = vst.msk [vmem:[#allocation2 + $0x170] sm:$0xff] %vm346, 0.0
      %2872 = vst.msk [vmem:[#allocation2 + $0x178] sm:$0x3] %vm2826, 0.0
      %2873 = vst.msk [vmem:[#allocation2 + $0x180] sm:$0xff] %vm346, 0.0
      %2874 = vst.msk [vmem:[#allocation2 + $0x188] sm:$0xff] %vm346, 0.0
      %2875 = vst.msk [vmem:[#allocation2 + $0x190] sm:$0x3] %vm2826, 0.0
      %2876 = vst.msk [vmem:[#allocation2 + $0x198] sm:$0xff] %vm346, 0.0
      %2877 = vst.msk [vmem:[#allocation2 + $0x1a0] sm:$0xff] %vm346, 0.0
      %2878 = vst.msk [vmem:[#allocation2 + $0x1a8] sm:$0x3] %vm2826, 0.0
      %s2879 = scalar_lea.vmem [#allocation2], 24
      %2880 = vst.msk [vmem:[%s2879 + $0x1] sm:$0xff] %vm346, %v2792
      %2881 = vst.msk [vmem:[%s2879 + $0x9] sm:$0xff] %vm346, %v2793
      %2882 = vst.msk [vmem:[%s2879 + $0x19] sm:$0xff] %vm346, %v2794
      %2883 = vst.msk [vmem:[%s2879 + $0x21] sm:$0xff] %vm346, %v2795
      %2884 = vst.msk [vmem:[%s2879 + $0x31] sm:$0xff] %vm346, %v2796
      %2885 = vst.msk [vmem:[%s2879 + $0x39] sm:$0xff] %vm346, %v2797
      %2886 = vst.msk [vmem:[%s2879 + $0x49] sm:$0xff] %vm346, %v2798
      %2887 = vst.msk [vmem:[%s2879 + $0x51] sm:$0xff] %vm346, %v2799
      %2888 = vst.msk [vmem:[%s2879 + $0x61] sm:$0xff] %vm346, %v2800
      %2889 = vst.msk [vmem:[%s2879 + $0x69] sm:$0xff] %vm346, %v2801
      %2890 = vst.msk [vmem:[%s2879 + $0x79] sm:$0xff] %vm346, %v2802
      %2891 = vst.msk [vmem:[%s2879 + $0x81] sm:$0xff] %vm346, %v2803
      %2892 = vst.msk [vmem:[%s2879 + $0x91] sm:$0xff] %vm346, %v2804
      %2893 = vst.msk [vmem:[%s2879 + $0x99] sm:$0xff] %vm346, %v2805
      %2894 = vst.msk [vmem:[%s2879 + $0xa9] sm:$0xff] %vm346, %v2806
      %2895 = vst.msk [vmem:[%s2879 + $0xb1] sm:$0xff] %vm346, %v2807
      %2896 = vst.msk [vmem:[%s2879 + $0xc1] sm:$0xff] %vm346, %v2808
      %2897 = vst.msk [vmem:[%s2879 + $0xc9] sm:$0xff] %vm346, %v2809
      %2898 = vst.msk [vmem:[%s2879 + $0xd9] sm:$0xff] %vm346, %v2810
      %2899 = vst.msk [vmem:[%s2879 + $0xe1] sm:$0xff] %vm346, %v2811
      %2900 = vst.msk [vmem:[%s2879 + $0xf1] sm:$0xff] %vm346, %v2812
      %2901 = vst.msk [vmem:[%s2879 + $0xf9] sm:$0xff] %vm346, %v2813
      %2902 = vst.msk [vmem:[%s2879 + $0x109] sm:$0xff] %vm346, %v2814
      %2903 = vst.msk [vmem:[%s2879 + $0x111] sm:$0xff] %vm346, %v2815
      %2904 = vst.msk [vmem:[%s2879 + $0x121] sm:$0xff] %vm346, %v2816
      %2905 = vst.msk [vmem:[%s2879 + $0x129] sm:$0xff] %vm346, %v2817
      %2906 = vst.msk [vmem:[%s2879 + $0x139] sm:$0xff] %vm346, %v2818
      %2907 = vst.msk [vmem:[%s2879 + $0x141] sm:$0xff] %vm346, %v2819
      %2908 = vst.msk [vmem:[%s2879 + $0x151] sm:$0xff] %vm346, %v2820
      %2909 = vst.msk [vmem:[%s2879 + $0x159] sm:$0xff] %vm346, %v2821
      %2910 = vst.msk [vmem:[%s2879 + $0x169] sm:$0xff] %vm346, %v2822
      %2911 = vst.msk [vmem:[%s2879 + $0x171] sm:$0xff] %vm346, %v2823
      %v2912 = vld [vmem:[#allocation2] sm:$0xff]
      %v2913 = vld [vmem:[#allocation2 + $0x8] sm:$0xff]
      %v2914 = vld [vmem:[#allocation2 + $0x18] sm:$0xff]
      %v2915 = vld [vmem:[#allocation2 + $0x20] sm:$0xff]
      %v2916 = vld [vmem:[#allocation2 + $0x30] sm:$0xff]
      %v2917 = vld [vmem:[#allocation2 + $0x38] sm:$0xff]
      %v2918 = vld [vmem:[#allocation2 + $0x48] sm:$0xff]
      %v2919 = vld [vmem:[#allocation2 + $0x50] sm:$0xff]
      %v2920 = vld [vmem:[#allocation2 + $0x60] sm:$0xff]
      %v2921 = vld [vmem:[#allocation2 + $0x68] sm:$0xff]
      %v2922 = vld [vmem:[#allocation2 + $0x78] sm:$0xff]
      %v2923 = vld [vmem:[#allocation2 + $0x80] sm:$0xff]
      %v2924 = vld [vmem:[#allocation2 + $0x90] sm:$0xff]
      %v2925 = vld [vmem:[#allocation2 + $0x98] sm:$0xff]
      %v2926 = vld [vmem:[#allocation2 + $0xa8] sm:$0xff]
      %v2927 = vld [vmem:[#allocation2 + $0xb0] sm:$0xff]
      %v2928 = vld [vmem:[#allocation2 + $0xc0] sm:$0xff]
      %v2929 = vld [vmem:[#allocation2 + $0xc8] sm:$0xff]
      %v2930 = vld [vmem:[#allocation2 + $0xd8] sm:$0xff]
      %v2931 = vld [vmem:[#allocation2 + $0xe0] sm:$0xff]
      %v2932 = vld [vmem:[#allocation2 + $0xf0] sm:$0xff]
      %v2933 = vld [vmem:[#allocation2 + $0xf8] sm:$0xff]
      %v2934 = vld [vmem:[#allocation2 + $0x108] sm:$0xff]
      %v2935 = vld [vmem:[#allocation2 + $0x110] sm:$0xff]
      %v2936 = vld [vmem:[#allocation2 + $0x120] sm:$0xff]
      %v2937 = vld [vmem:[#allocation2 + $0x128] sm:$0xff]
      %v2938 = vld [vmem:[#allocation2 + $0x138] sm:$0xff]
      %v2939 = vld [vmem:[#allocation2 + $0x140] sm:$0xff]
      %v2940 = vld [vmem:[#allocation2 + $0x150] sm:$0xff]
      %v2941 = vld [vmem:[#allocation2 + $0x158] sm:$0xff]
      %v2942 = vld [vmem:[#allocation2 + $0x168] sm:$0xff]
      %v2943 = vld [vmem:[#allocation2 + $0x170] sm:$0xff]
      %v2944 = vld [vmem:[%s4] sm:$0xf]
      %v2945 = vld [vmem:[#allocation2 + $0x1] sm:$0xff]
      %v2946 = vld [vmem:[#allocation2 + $0x9] sm:$0xff]
      %v2947 = vld [vmem:[#allocation2 + $0x19] sm:$0xff]
      %v2948 = vld [vmem:[#allocation2 + $0x21] sm:$0xff]
      %v2949 = vld [vmem:[#allocation2 + $0x31] sm:$0xff]
      %v2950 = vld [vmem:[#allocation2 + $0x39] sm:$0xff]
      %v2951 = vld [vmem:[#allocation2 + $0x49] sm:$0xff]
      %v2952 = vld [vmem:[#allocation2 + $0x51] sm:$0xff]
      %v2953 = vld [vmem:[#allocation2 + $0x61] sm:$0xff]
      %v2954 = vld [vmem:[#allocation2 + $0x69] sm:$0xff]
      %v2955 = vld [vmem:[#allocation2 + $0x79] sm:$0xff]
      %v2956 = vld [vmem:[#allocation2 + $0x81] sm:$0xff]
      %v2957 = vld [vmem:[#allocation2 + $0x91] sm:$0xff]
      %v2958 = vld [vmem:[#allocation2 + $0x99] sm:$0xff]
      %v2959 = vld [vmem:[#allocation2 + $0xa9] sm:$0xff]
      %v2960 = vld [vmem:[#allocation2 + $0xb1] sm:$0xff]
      %v2961 = vld [vmem:[#allocation2 + $0xc1] sm:$0xff]
      %v2962 = vld [vmem:[#allocation2 + $0xc9] sm:$0xff]
      %v2963 = vld [vmem:[#allocation2 + $0xd9] sm:$0xff]
      %v2964 = vld [vmem:[#allocation2 + $0xe1] sm:$0xff]
      %v2965 = vld [vmem:[#allocation2 + $0xf1] sm:$0xff]
      %v2966 = vld [vmem:[#allocation2 + $0xf9] sm:$0xff]
      %v2967 = vld [vmem:[#allocation2 + $0x109] sm:$0xff]
      %v2968 = vld [vmem:[#allocation2 + $0x111] sm:$0xff]
      %v2969 = vld [vmem:[#allocation2 + $0x121] sm:$0xff]
      %v2970 = vld [vmem:[#allocation2 + $0x129] sm:$0xff]
      %v2971 = vld [vmem:[#allocation2 + $0x139] sm:$0xff]
      %v2972 = vld [vmem:[#allocation2 + $0x141] sm:$0xff]
      %v2973 = vld [vmem:[#allocation2 + $0x151] sm:$0xff]
      %v2974 = vld [vmem:[#allocation2 + $0x159] sm:$0xff]
      %v2975 = vld [vmem:[#allocation2 + $0x169] sm:$0xff]
      %v2976 = vld [vmem:[#allocation2 + $0x171] sm:$0xff]
      %s2977 = scalar_lea.vmem %s4, 4
      %v2978 = vld [vmem:[%s2977] sm:$0xf]
      %v2980 = vsel %vm346, %v2945, 0
      %v2983 = vsel %vm346, %v2946, 0
      %v2986 = vsel %vm346, %v2947, 0
      %v2989 = vsel %vm346, %v2948, 0
      %v2992 = vsel %vm346, %v2949, 0
      %v2995 = vsel %vm346, %v2950, 0
      %v2998 = vsel %vm346, %v2951, 0
      %v3001 = vsel %vm346, %v2952, 0
      %v3004 = vsel %vm346, %v2953, 0
      %v3007 = vsel %vm346, %v2954, 0
      %v3010 = vsel %vm346, %v2955, 0
      %v3013 = vsel %vm346, %v2956, 0
      %v3016 = vsel %vm346, %v2957, 0
      %v3019 = vsel %vm346, %v2958, 0
      %v3022 = vsel %vm346, %v2959, 0
      %v3025 = vsel %vm346, %v2960, 0
      %v3028 = vsel %vm346, %v2961, 0
      %v3031 = vsel %vm346, %v2962, 0
      %v3034 = vsel %vm346, %v2963, 0
      %v3037 = vsel %vm346, %v2964, 0
      %v3040 = vsel %vm346, %v2965, 0
      %v3043 = vsel %vm346, %v2966, 0
      %v3046 = vsel %vm346, %v2967, 0
      %v3049 = vsel %vm346, %v2968, 0
      %v3052 = vsel %vm346, %v2969, 0
      %v3055 = vsel %vm346, %v2970, 0
      %v3058 = vsel %vm346, %v2971, 0
      %v3061 = vsel %vm346, %v2972, 0
      %v3064 = vsel %vm346, %v2973, 0
      %v3067 = vsel %vm346, %v2974, 0
      %v3070 = vsel %vm346, %v2975, 0
      %v3073 = vsel %vm346, %v2976, 0
      %v3076 = vsel %vm443, %v2978, 0
      %3078 = vmatpush.msra.mxu0 0.0
      %3079 = vmatpush.msra.mxu0 0.0
      %3080 = vmatpush.msra.mxu0 0.0
      %3081 = vmatpush.msra.mxu0 0.0
      %3082 = vmatpush.msra.mxu0 0.0
      %3083 = vmatpush.msra.mxu0 0.0
      %3084 = vmatpush.msra.mxu0 0.0
      %3085 = vmatpush.msra.mxu0 0.0
      %3086 = vmatpush.msra.mxu0 0.0
      %3087 = vmatpush.msra.mxu0 0.0
      %3088 = vmatpush.msra.mxu0 0.0
      %3089 = vmatpush.msra.mxu0 0.0
      %3090 = vmatpush.msra.mxu0 0.0
      %3091 = vmatpush.msra.mxu0 0.0
      %3092 = vmatpush.msra.mxu0 0.0
      %3093 = vmatpush.msra.mxu0 %v3076
      %3094 = vmatmul.f32.gmra.mxu0 %v2980
      %v3095 = vpop.f32.mrf.mxu0
      %v3096 = vadd.f32 0.0, %v3095
      %3097 = vmatmul.f32.gmra.mxu0 %v2983
      %v3098 = vpop.f32.mrf.mxu0
      %v3099 = vadd.f32 0.0, %v3098
      %3100 = vmatmul.f32.gmra.mxu0 %v2986
      %v3101 = vpop.f32.mrf.mxu0
      %v3102 = vadd.f32 0.0, %v3101
      %3103 = vmatmul.f32.gmra.mxu0 %v2989
      %v3104 = vpop.f32.mrf.mxu0
      %v3105 = vadd.f32 0.0, %v3104
      %3106 = vmatmul.f32.gmra.mxu0 %v2992
      %v3107 = vpop.f32.mrf.mxu0
      %v3108 = vadd.f32 0.0, %v3107
      %3109 = vmatmul.f32.gmra.mxu0 %v2995
      %v3110 = vpop.f32.mrf.mxu0
      %v3111 = vadd.f32 0.0, %v3110
      %3112 = vmatmul.f32.gmra.mxu0 %v2998
      %v3113 = vpop.f32.mrf.mxu0
      %v3114 = vadd.f32 0.0, %v3113
      %3115 = vmatmul.f32.gmra.mxu0 %v3001
      %v3116 = vpop.f32.mrf.mxu0
      %v3117 = vadd.f32 0.0, %v3116
      %3118 = vmatmul.f32.gmra.mxu0 %v3004
      %v3119 = vpop.f32.mrf.mxu0
      %v3120 = vadd.f32 0.0, %v3119
      %3121 = vmatmul.f32.gmra.mxu0 %v3007
      %v3122 = vpop.f32.mrf.mxu0
      %v3123 = vadd.f32 0.0, %v3122
      %3124 = vmatmul.f32.gmra.mxu0 %v3010
      %v3125 = vpop.f32.mrf.mxu0
      %v3126 = vadd.f32 0.0, %v3125
      %3127 = vmatmul.f32.gmra.mxu0 %v3013
      %v3128 = vpop.f32.mrf.mxu0
      %v3129 = vadd.f32 0.0, %v3128
      %3130 = vmatmul.f32.gmra.mxu0 %v3016
      %v3131 = vpop.f32.mrf.mxu0
      %v3132 = vadd.f32 0.0, %v3131
      %3133 = vmatmul.f32.gmra.mxu0 %v3019
      %v3134 = vpop.f32.mrf.mxu0
      %v3135 = vadd.f32 0.0, %v3134
      %3136 = vmatmul.f32.gmra.mxu0 %v3022
      %v3137 = vpop.f32.mrf.mxu0
      %v3138 = vadd.f32 0.0, %v3137
      %3139 = vmatmul.f32.gmra.mxu0 %v3025
      %v3140 = vpop.f32.mrf.mxu0
      %v3141 = vadd.f32 0.0, %v3140
      %3142 = vmatmul.f32.gmra.mxu0 %v3028
      %v3143 = vpop.f32.mrf.mxu0
      %v3144 = vadd.f32 0.0, %v3143
      %3145 = vmatmul.f32.gmra.mxu0 %v3031
      %v3146 = vpop.f32.mrf.mxu0
      %v3147 = vadd.f32 0.0, %v3146
      %3148 = vmatmul.f32.gmra.mxu0 %v3034
      %v3149 = vpop.f32.mrf.mxu0
      %v3150 = vadd.f32 0.0, %v3149
      %3151 = vmatmul.f32.gmra.mxu0 %v3037
      %v3152 = vpop.f32.mrf.mxu0
      %v3153 = vadd.f32 0.0, %v3152
      %3154 = vmatmul.f32.gmra.mxu0 %v3040
      %v3155 = vpop.f32.mrf.mxu0
      %v3156 = vadd.f32 0.0, %v3155
      %3157 = vmatmul.f32.gmra.mxu0 %v3043
      %v3158 = vpop.f32.mrf.mxu0
      %v3159 = vadd.f32 0.0, %v3158
      %3160 = vmatmul.f32.gmra.mxu0 %v3046
      %v3161 = vpop.f32.mrf.mxu0
      %v3162 = vadd.f32 0.0, %v3161
      %3163 = vmatmul.f32.gmra.mxu0 %v3049
      %v3164 = vpop.f32.mrf.mxu0
      %v3165 = vadd.f32 0.0, %v3164
      %3166 = vmatmul.f32.gmra.mxu0 %v3052
      %v3167 = vpop.f32.mrf.mxu0
      %v3168 = vadd.f32 0.0, %v3167
      %3169 = vmatmul.f32.gmra.mxu0 %v3055
      %v3170 = vpop.f32.mrf.mxu0
      %v3171 = vadd.f32 0.0, %v3170
      %3172 = vmatmul.f32.gmra.mxu0 %v3058
      %v3173 = vpop.f32.mrf.mxu0
      %v3174 = vadd.f32 0.0, %v3173
      %3175 = vmatmul.f32.gmra.mxu0 %v3061
      %v3176 = vpop.f32.mrf.mxu0
      %v3177 = vadd.f32 0.0, %v3176
      %3178 = vmatmul.f32.gmra.mxu0 %v3064
      %v3179 = vpop.f32.mrf.mxu0
      %v3180 = vadd.f32 0.0, %v3179
      %3181 = vmatmul.f32.gmra.mxu0 %v3067
      %v3182 = vpop.f32.mrf.mxu0
      %v3183 = vadd.f32 0.0, %v3182
      %3184 = vmatmul.f32.gmra.mxu0 %v3070
      %v3185 = vpop.f32.mrf.mxu0
      %v3186 = vadd.f32 0.0, %v3185
      %3187 = vmatmul.f32.gmra.mxu0 %v3073
      %v3188 = vpop.f32.mrf.mxu0
      %v3189 = vadd.f32 0.0, %v3188
      %3190 = vdwg.mxu0
      %v3192 = vsel %vm346, %v2912, 0
      %v3195 = vsel %vm346, %v2913, 0
      %v3198 = vsel %vm346, %v2914, 0
      %v3201 = vsel %vm346, %v2915, 0
      %v3204 = vsel %vm346, %v2916, 0
      %v3207 = vsel %vm346, %v2917, 0
      %v3210 = vsel %vm346, %v2918, 0
      %v3213 = vsel %vm346, %v2919, 0
      %v3216 = vsel %vm346, %v2920, 0
      %v3219 = vsel %vm346, %v2921, 0
      %v3222 = vsel %vm346, %v2922, 0
      %v3225 = vsel %vm346, %v2923, 0
      %v3228 = vsel %vm346, %v2924, 0
      %v3231 = vsel %vm346, %v2925, 0
      %v3234 = vsel %vm346, %v2926, 0
      %v3237 = vsel %vm346, %v2927, 0
      %v3240 = vsel %vm346, %v2928, 0
      %v3243 = vsel %vm346, %v2929, 0
      %v3246 = vsel %vm346, %v2930, 0
      %v3249 = vsel %vm346, %v2931, 0
      %v3252 = vsel %vm346, %v2932, 0
      %v3255 = vsel %vm346, %v2933, 0
      %v3258 = vsel %vm346, %v2934, 0
      %v3261 = vsel %vm346, %v2935, 0
      %v3264 = vsel %vm346, %v2936, 0
      %v3267 = vsel %vm346, %v2937, 0
      %v3270 = vsel %vm346, %v2938, 0
      %v3273 = vsel %vm346, %v2939, 0
      %v3276 = vsel %vm346, %v2940, 0
      %v3279 = vsel %vm346, %v2941, 0
      %v3282 = vsel %vm346, %v2942, 0
      %v3285 = vsel %vm346, %v2943, 0
      %v3288 = vsel %vm443, %v2944, 0
      %3290 = vmatpush.msra.mxu0 0.0
      %3291 = vmatpush.msra.mxu0 0.0
      %3292 = vmatpush.msra.mxu0 0.0
      %3293 = vmatpush.msra.mxu0 0.0
      %3294 = vmatpush.msra.mxu0 0.0
      %3295 = vmatpush.msra.mxu0 0.0
      %3296 = vmatpush.msra.mxu0 0.0
      %3297 = vmatpush.msra.mxu0 0.0
      %3298 = vmatpush.msra.mxu0 0.0
      %3299 = vmatpush.msra.mxu0 0.0
      %3300 = vmatpush.msra.mxu0 0.0
      %3301 = vmatpush.msra.mxu0 0.0
      %3302 = vmatpush.msra.mxu0 0.0
      %3303 = vmatpush.msra.mxu0 0.0
      %3304 = vmatpush.msra.mxu0 0.0
      %3305 = vmatpush.msra.mxu0 %v3288
      %3306 = vmatmul.f32.gmra.mxu0 %v3192
      %v3307 = vpop.f32.mrf.mxu0
      %v3308 = vadd.f32 %v3096, %v3307
      %3309 = vmatmul.f32.gmra.mxu0 %v3195
      %v3310 = vpop.f32.mrf.mxu0
      %v3311 = vadd.f32 %v3099, %v3310
      %3312 = vmatmul.f32.gmra.mxu0 %v3198
      %v3313 = vpop.f32.mrf.mxu0
      %v3314 = vadd.f32 %v3102, %v3313
      %3315 = vmatmul.f32.gmra.mxu0 %v3201
      %v3316 = vpop.f32.mrf.mxu0
      %v3317 = vadd.f32 %v3105, %v3316
      %3318 = vmatmul.f32.gmra.mxu0 %v3204
      %v3319 = vpop.f32.mrf.mxu0
      %v3320 = vadd.f32 %v3108, %v3319
      %3321 = vmatmul.f32.gmra.mxu0 %v3207
      %v3322 = vpop.f32.mrf.mxu0
      %v3323 = vadd.f32 %v3111, %v3322
      %3324 = vmatmul.f32.gmra.mxu0 %v3210
      %v3325 = vpop.f32.mrf.mxu0
      %v3326 = vadd.f32 %v3114, %v3325
      %3327 = vmatmul.f32.gmra.mxu0 %v3213
      %v3328 = vpop.f32.mrf.mxu0
      %v3329 = vadd.f32 %v3117, %v3328
      %3330 = vmatmul.f32.gmra.mxu0 %v3216
      %v3331 = vpop.f32.mrf.mxu0
      %v3332 = vadd.f32 %v3120, %v3331
      %3333 = vmatmul.f32.gmra.mxu0 %v3219
      %v3334 = vpop.f32.mrf.mxu0
      %v3335 = vadd.f32 %v3123, %v3334
      %3336 = vmatmul.f32.gmra.mxu0 %v3222
      %v3337 = vpop.f32.mrf.mxu0
      %v3338 = vadd.f32 %v3126, %v3337
      %3339 = vmatmul.f32.gmra.mxu0 %v3225
      %v3340 = vpop.f32.mrf.mxu0
      %v3341 = vadd.f32 %v3129, %v3340
      %3342 = vmatmul.f32.gmra.mxu0 %v3228
      %v3343 = vpop.f32.mrf.mxu0
      %v3344 = vadd.f32 %v3132, %v3343
      %3345 = vmatmul.f32.gmra.mxu0 %v3231
      %v3346 = vpop.f32.mrf.mxu0
      %v3347 = vadd.f32 %v3135, %v3346
      %3348 = vmatmul.f32.gmra.mxu0 %v3234
      %v3349 = vpop.f32.mrf.mxu0
      %v3350 = vadd.f32 %v3138, %v3349
      %3351 = vmatmul.f32.gmra.mxu0 %v3237
      %v3352 = vpop.f32.mrf.mxu0
      %v3353 = vadd.f32 %v3141, %v3352
      %3354 = vmatmul.f32.gmra.mxu0 %v3240
      %v3355 = vpop.f32.mrf.mxu0
      %v3356 = vadd.f32 %v3144, %v3355
      %3357 = vmatmul.f32.gmra.mxu0 %v3243
      %v3358 = vpop.f32.mrf.mxu0
      %v3359 = vadd.f32 %v3147, %v3358
      %3360 = vmatmul.f32.gmra.mxu0 %v3246
      %v3361 = vpop.f32.mrf.mxu0
      %v3362 = vadd.f32 %v3150, %v3361
      %3363 = vmatmul.f32.gmra.mxu0 %v3249
      %v3364 = vpop.f32.mrf.mxu0
      %v3365 = vadd.f32 %v3153, %v3364
      %3366 = vmatmul.f32.gmra.mxu0 %v3252
      %v3367 = vpop.f32.mrf.mxu0
      %v3368 = vadd.f32 %v3156, %v3367
      %3369 = vmatmul.f32.gmra.mxu0 %v3255
      %v3370 = vpop.f32.mrf.mxu0
      %v3371 = vadd.f32 %v3159, %v3370
      %3372 = vmatmul.f32.gmra.mxu0 %v3258
      %v3373 = vpop.f32.mrf.mxu0
      %v3374 = vadd.f32 %v3162, %v3373
      %3375 = vmatmul.f32.gmra.mxu0 %v3261
      %v3376 = vpop.f32.mrf.mxu0
      %v3377 = vadd.f32 %v3165, %v3376
      %3378 = vmatmul.f32.gmra.mxu0 %v3264
      %v3379 = vpop.f32.mrf.mxu0
      %v3380 = vadd.f32 %v3168, %v3379
      %3381 = vmatmul.f32.gmra.mxu0 %v3267
      %v3382 = vpop.f32.mrf.mxu0
      %v3383 = vadd.f32 %v3171, %v3382
      %3384 = vmatmul.f32.gmra.mxu0 %v3270
      %v3385 = vpop.f32.mrf.mxu0
      %v3386 = vadd.f32 %v3174, %v3385
      %3387 = vmatmul.f32.gmra.mxu0 %v3273
      %v3388 = vpop.f32.mrf.mxu0
      %v3389 = vadd.f32 %v3177, %v3388
      %3390 = vmatmul.f32.gmra.mxu0 %v3276
      %v3391 = vpop.f32.mrf.mxu0
      %v3392 = vadd.f32 %v3180, %v3391
      %3393 = vmatmul.f32.gmra.mxu0 %v3279
      %v3394 = vpop.f32.mrf.mxu0
      %v3395 = vadd.f32 %v3183, %v3394
      %3396 = vmatmul.f32.gmra.mxu0 %v3282
      %v3397 = vpop.f32.mrf.mxu0
      %v3398 = vadd.f32 %v3186, %v3397
      %3399 = vmatmul.f32.gmra.mxu0 %v3285
      %v3400 = vpop.f32.mrf.mxu0
      %v3401 = vadd.f32 %v3189, %v3400
      %3402 = vdwg.mxu0
      %v3403 = vld [vmem:[#allocation2 + $0x2] sm:$0xff]
      %v3404 = vld [vmem:[#allocation2 + $0xa] sm:$0xff]
      %v3405 = vld [vmem:[#allocation2 + $0x1a] sm:$0xff]
      %v3406 = vld [vmem:[#allocation2 + $0x22] sm:$0xff]
      %v3407 = vld [vmem:[#allocation2 + $0x32] sm:$0xff]
      %v3408 = vld [vmem:[#allocation2 + $0x3a] sm:$0xff]
      %v3409 = vld [vmem:[#allocation2 + $0x4a] sm:$0xff]
      %v3410 = vld [vmem:[#allocation2 + $0x52] sm:$0xff]
      %v3411 = vld [vmem:[#allocation2 + $0x62] sm:$0xff]
      %v3412 = vld [vmem:[#allocation2 + $0x6a] sm:$0xff]
      %v3413 = vld [vmem:[#allocation2 + $0x7a] sm:$0xff]
      %v3414 = vld [vmem:[#allocation2 + $0x82] sm:$0xff]
      %v3415 = vld [vmem:[#allocation2 + $0x92] sm:$0xff]
      %v3416 = vld [vmem:[#allocation2 + $0x9a] sm:$0xff]
      %v3417 = vld [vmem:[#allocation2 + $0xaa] sm:$0xff]
      %v3418 = vld [vmem:[#allocation2 + $0xb2] sm:$0xff]
      %v3419 = vld [vmem:[#allocation2 + $0xc2] sm:$0xff]
      %v3420 = vld [vmem:[#allocation2 + $0xca] sm:$0xff]
      %v3421 = vld [vmem:[#allocation2 + $0xda] sm:$0xff]
      %v3422 = vld [vmem:[#allocation2 + $0xe2] sm:$0xff]
      %v3423 = vld [vmem:[#allocation2 + $0xf2] sm:$0xff]
      %v3424 = vld [vmem:[#allocation2 + $0xfa] sm:$0xff]
      %v3425 = vld [vmem:[#allocation2 + $0x10a] sm:$0xff]
      %v3426 = vld [vmem:[#allocation2 + $0x112] sm:$0xff]
      %v3427 = vld [vmem:[#allocation2 + $0x122] sm:$0xff]
      %v3428 = vld [vmem:[#allocation2 + $0x12a] sm:$0xff]
      %v3429 = vld [vmem:[#allocation2 + $0x13a] sm:$0xff]
      %v3430 = vld [vmem:[#allocation2 + $0x142] sm:$0xff]
      %v3431 = vld [vmem:[#allocation2 + $0x152] sm:$0xff]
      %v3432 = vld [vmem:[#allocation2 + $0x15a] sm:$0xff]
      %v3433 = vld [vmem:[#allocation2 + $0x16a] sm:$0xff]
      %v3434 = vld [vmem:[#allocation2 + $0x172] sm:$0xff]
      %s3435 = scalar_lea.vmem %s4, 8
      %v3436 = vld [vmem:[%s3435] sm:$0xf]
      %v3438 = vsel %vm346, %v3403, 0
      %v3441 = vsel %vm346, %v3404, 0
      %v3444 = vsel %vm346, %v3405, 0
      %v3447 = vsel %vm346, %v3406, 0
      %v3450 = vsel %vm346, %v3407, 0
      %v3453 = vsel %vm346, %v3408, 0
      %v3456 = vsel %vm346, %v3409, 0
      %v3459 = vsel %vm346, %v3410, 0
      %v3462 = vsel %vm346, %v3411, 0
      %v3465 = vsel %vm346, %v3412, 0
      %v3468 = vsel %vm346, %v3413, 0
      %v3471 = vsel %vm346, %v3414, 0
      %v3474 = vsel %vm346, %v3415, 0
      %v3477 = vsel %vm346, %v3416, 0
      %v3480 = vsel %vm346, %v3417, 0
      %v3483 = vsel %vm346, %v3418, 0
      %v3486 = vsel %vm346, %v3419, 0
      %v3489 = vsel %vm346, %v3420, 0
      %v3492 = vsel %vm346, %v3421, 0
      %v3495 = vsel %vm346, %v3422, 0
      %v3498 = vsel %vm346, %v3423, 0
      %v3501 = vsel %vm346, %v3424, 0
      %v3504 = vsel %vm346, %v3425, 0
      %v3507 = vsel %vm346, %v3426, 0
      %v3510 = vsel %vm346, %v3427, 0
      %v3513 = vsel %vm346, %v3428, 0
      %v3516 = vsel %vm346, %v3429, 0
      %v3519 = vsel %vm346, %v3430, 0
      %v3522 = vsel %vm346, %v3431, 0
      %v3525 = vsel %vm346, %v3432, 0
      %v3528 = vsel %vm346, %v3433, 0
      %v3531 = vsel %vm346, %v3434, 0
      %v3534 = vsel %vm443, %v3436, 0
      %3536 = vmatpush.msra.mxu0 0.0
      %3537 = vmatpush.msra.mxu0 0.0
      %3538 = vmatpush.msra.mxu0 0.0
      %3539 = vmatpush.msra.mxu0 0.0
      %3540 = vmatpush.msra.mxu0 0.0
      %3541 = vmatpush.msra.mxu0 0.0
      %3542 = vmatpush.msra.mxu0 0.0
      %3543 = vmatpush.msra.mxu0 0.0
      %3544 = vmatpush.msra.mxu0 0.0
      %3545 = vmatpush.msra.mxu0 0.0
      %3546 = vmatpush.msra.mxu0 0.0
      %3547 = vmatpush.msra.mxu0 0.0
      %3548 = vmatpush.msra.mxu0 0.0
      %3549 = vmatpush.msra.mxu0 0.0
      %3550 = vmatpush.msra.mxu0 0.0
      %3551 = vmatpush.msra.mxu0 %v3534
      %3552 = vmatmul.f32.gmra.mxu0 %v3438
      %v3553 = vpop.f32.mrf.mxu0
      %v3554 = vadd.f32 0.0, %v3553
      %3555 = vmatmul.f32.gmra.mxu0 %v3441
      %v3556 = vpop.f32.mrf.mxu0
      %v3557 = vadd.f32 0.0, %v3556
      %3558 = vmatmul.f32.gmra.mxu0 %v3444
      %v3559 = vpop.f32.mrf.mxu0
      %v3560 = vadd.f32 0.0, %v3559
      %3561 = vmatmul.f32.gmra.mxu0 %v3447
      %v3562 = vpop.f32.mrf.mxu0
      %v3563 = vadd.f32 0.0, %v3562
      %3564 = vmatmul.f32.gmra.mxu0 %v3450
      %v3565 = vpop.f32.mrf.mxu0
      %v3566 = vadd.f32 0.0, %v3565
      %3567 = vmatmul.f32.gmra.mxu0 %v3453
      %v3568 = vpop.f32.mrf.mxu0
      %v3569 = vadd.f32 0.0, %v3568
      %3570 = vmatmul.f32.gmra.mxu0 %v3456
      %v3571 = vpop.f32.mrf.mxu0
      %v3572 = vadd.f32 0.0, %v3571
      %3573 = vmatmul.f32.gmra.mxu0 %v3459
      %v3574 = vpop.f32.mrf.mxu0
      %v3575 = vadd.f32 0.0, %v3574
      %3576 = vmatmul.f32.gmra.mxu0 %v3462
      %v3577 = vpop.f32.mrf.mxu0
      %v3578 = vadd.f32 0.0, %v3577
      %3579 = vmatmul.f32.gmra.mxu0 %v3465
      %v3580 = vpop.f32.mrf.mxu0
      %v3581 = vadd.f32 0.0, %v3580
      %3582 = vmatmul.f32.gmra.mxu0 %v3468
      %v3583 = vpop.f32.mrf.mxu0
      %v3584 = vadd.f32 0.0, %v3583
      %3585 = vmatmul.f32.gmra.mxu0 %v3471
      %v3586 = vpop.f32.mrf.mxu0
      %v3587 = vadd.f32 0.0, %v3586
      %3588 = vmatmul.f32.gmra.mxu0 %v3474
      %v3589 = vpop.f32.mrf.mxu0
      %v3590 = vadd.f32 0.0, %v3589
      %3591 = vmatmul.f32.gmra.mxu0 %v3477
      %v3592 = vpop.f32.mrf.mxu0
      %v3593 = vadd.f32 0.0, %v3592
      %3594 = vmatmul.f32.gmra.mxu0 %v3480
      %v3595 = vpop.f32.mrf.mxu0
      %v3596 = vadd.f32 0.0, %v3595
      %3597 = vmatmul.f32.gmra.mxu0 %v3483
      %v3598 = vpop.f32.mrf.mxu0
      %v3599 = vadd.f32 0.0, %v3598
      %3600 = vmatmul.f32.gmra.mxu0 %v3486
      %v3601 = vpop.f32.mrf.mxu0
      %v3602 = vadd.f32 0.0, %v3601
      %3603 = vmatmul.f32.gmra.mxu0 %v3489
      %v3604 = vpop.f32.mrf.mxu0
      %v3605 = vadd.f32 0.0, %v3604
      %3606 = vmatmul.f32.gmra.mxu0 %v3492
      %v3607 = vpop.f32.mrf.mxu0
      %v3608 = vadd.f32 0.0, %v3607
      %3609 = vmatmul.f32.gmra.mxu0 %v3495
      %v3610 = vpop.f32.mrf.mxu0
      %v3611 = vadd.f32 0.0, %v3610
      %3612 = vmatmul.f32.gmra.mxu0 %v3498
      %v3613 = vpop.f32.mrf.mxu0
      %v3614 = vadd.f32 0.0, %v3613
      %3615 = vmatmul.f32.gmra.mxu0 %v3501
      %v3616 = vpop.f32.mrf.mxu0
      %v3617 = vadd.f32 0.0, %v3616
      %3618 = vmatmul.f32.gmra.mxu0 %v3504
      %v3619 = vpop.f32.mrf.mxu0
      %v3620 = vadd.f32 0.0, %v3619
      %3621 = vmatmul.f32.gmra.mxu0 %v3507
      %v3622 = vpop.f32.mrf.mxu0
      %v3623 = vadd.f32 0.0, %v3622
      %3624 = vmatmul.f32.gmra.mxu0 %v3510
      %v3625 = vpop.f32.mrf.mxu0
      %v3626 = vadd.f32 0.0, %v3625
      %3627 = vmatmul.f32.gmra.mxu0 %v3513
      %v3628 = vpop.f32.mrf.mxu0
      %v3629 = vadd.f32 0.0, %v3628
      %3630 = vmatmul.f32.gmra.mxu0 %v3516
      %v3631 = vpop.f32.mrf.mxu0
      %v3632 = vadd.f32 0.0, %v3631
      %3633 = vmatmul.f32.gmra.mxu0 %v3519
      %v3634 = vpop.f32.mrf.mxu0
      %v3635 = vadd.f32 0.0, %v3634
      %3636 = vmatmul.f32.gmra.mxu0 %v3522
      %v3637 = vpop.f32.mrf.mxu0
      %v3638 = vadd.f32 0.0, %v3637
      %3639 = vmatmul.f32.gmra.mxu0 %v3525
      %v3640 = vpop.f32.mrf.mxu0
      %v3641 = vadd.f32 0.0, %v3640
      %3642 = vmatmul.f32.gmra.mxu0 %v3528
      %v3643 = vpop.f32.mrf.mxu0
      %v3644 = vadd.f32 0.0, %v3643
      %3645 = vmatmul.f32.gmra.mxu0 %v3531
      %v3646 = vpop.f32.mrf.mxu0
      %v3647 = vadd.f32 0.0, %v3646
      %3648 = vdwg.mxu0
      %v3649 = vadd.f32 %v3308, %v3554
      %v3650 = vadd.f32 %v3311, %v3557
      %v3651 = vadd.f32 %v3314, %v3560
      %v3652 = vadd.f32 %v3317, %v3563
      %v3653 = vadd.f32 %v3320, %v3566
      %v3654 = vadd.f32 %v3323, %v3569
      %v3655 = vadd.f32 %v3326, %v3572
      %v3656 = vadd.f32 %v3329, %v3575
      %v3657 = vadd.f32 %v3332, %v3578
      %v3658 = vadd.f32 %v3335, %v3581
      %v3659 = vadd.f32 %v3338, %v3584
      %v3660 = vadd.f32 %v3341, %v3587
      %v3661 = vadd.f32 %v3344, %v3590
      %v3662 = vadd.f32 %v3347, %v3593
      %v3663 = vadd.f32 %v3350, %v3596
      %v3664 = vadd.f32 %v3353, %v3599
      %v3665 = vadd.f32 %v3356, %v3602
      %v3666 = vadd.f32 %v3359, %v3605
      %v3667 = vadd.f32 %v3362, %v3608
      %v3668 = vadd.f32 %v3365, %v3611
      %v3669 = vadd.f32 %v3368, %v3614
      %v3670 = vadd.f32 %v3371, %v3617
      %v3671 = vadd.f32 %v3374, %v3620
      %v3672 = vadd.f32 %v3377, %v3623
      %v3673 = vadd.f32 %v3380, %v3626
      %v3674 = vadd.f32 %v3383, %v3629
      %v3675 = vadd.f32 %v3386, %v3632
      %v3676 = vadd.f32 %v3389, %v3635
      %v3677 = vadd.f32 %v3392, %v3638
      %v3678 = vadd.f32 %v3395, %v3641
      %v3679 = vadd.f32 %v3398, %v3644
      %v3680 = vadd.f32 %v3401, %v3647
      %v3681 = vld [vmem:[%s2879] sm:$0xff]
      %v3682 = vld [vmem:[%s2879 + $0x8] sm:$0xff]
      %v3683 = vld [vmem:[%s2879 + $0x18] sm:$0xff]
      %v3684 = vld [vmem:[%s2879 + $0x20] sm:$0xff]
      %v3685 = vld [vmem:[%s2879 + $0x30] sm:$0xff]
      %v3686 = vld [vmem:[%s2879 + $0x38] sm:$0xff]
      %v3687 = vld [vmem:[%s2879 + $0x48] sm:$0xff]
      %v3688 = vld [vmem:[%s2879 + $0x50] sm:$0xff]
      %v3689 = vld [vmem:[%s2879 + $0x60] sm:$0xff]
      %v3690 = vld [vmem:[%s2879 + $0x68] sm:$0xff]
      %v3691 = vld [vmem:[%s2879 + $0x78] sm:$0xff]
      %v3692 = vld [vmem:[%s2879 + $0x80] sm:$0xff]
      %v3693 = vld [vmem:[%s2879 + $0x90] sm:$0xff]
      %v3694 = vld [vmem:[%s2879 + $0x98] sm:$0xff]
      %v3695 = vld [vmem:[%s2879 + $0xa8] sm:$0xff]
      %v3696 = vld [vmem:[%s2879 + $0xb0] sm:$0xff]
      %v3697 = vld [vmem:[%s2879 + $0xc0] sm:$0xff]
      %v3698 = vld [vmem:[%s2879 + $0xc8] sm:$0xff]
      %v3699 = vld [vmem:[%s2879 + $0xd8] sm:$0xff]
      %v3700 = vld [vmem:[%s2879 + $0xe0] sm:$0xff]
      %v3701 = vld [vmem:[%s2879 + $0xf0] sm:$0xff]
      %v3702 = vld [vmem:[%s2879 + $0xf8] sm:$0xff]
      %v3703 = vld [vmem:[%s2879 + $0x108] sm:$0xff]
      %v3704 = vld [vmem:[%s2879 + $0x110] sm:$0xff]
      %v3705 = vld [vmem:[%s2879 + $0x120] sm:$0xff]
      %v3706 = vld [vmem:[%s2879 + $0x128] sm:$0xff]
      %v3707 = vld [vmem:[%s2879 + $0x138] sm:$0xff]
      %v3708 = vld [vmem:[%s2879 + $0x140] sm:$0xff]
      %v3709 = vld [vmem:[%s2879 + $0x150] sm:$0xff]
      %v3710 = vld [vmem:[%s2879 + $0x158] sm:$0xff]
      %v3711 = vld [vmem:[%s2879 + $0x168] sm:$0xff]
      %v3712 = vld [vmem:[%s2879 + $0x170] sm:$0xff]
      %s3713 = scalar_lea.vmem %s4, 12
      %v3714 = vld [vmem:[%s3713] sm:$0xf]
      %v3716 = vsel %vm346, %v3681, 0
      %v3719 = vsel %vm346, %v3682, 0
      %v3722 = vsel %vm346, %v3683, 0
      %v3725 = vsel %vm346, %v3684, 0
      %v3728 = vsel %vm346, %v3685, 0
      %v3731 = vsel %vm346, %v3686, 0
      %v3734 = vsel %vm346, %v3687, 0
      %v3737 = vsel %vm346, %v3688, 0
      %v3740 = vsel %vm346, %v3689, 0
      %v3743 = vsel %vm346, %v3690, 0
      %v3746 = vsel %vm346, %v3691, 0
      %v3749 = vsel %vm346, %v3692, 0
      %v3752 = vsel %vm346, %v3693, 0
      %v3755 = vsel %vm346, %v3694, 0
      %v3758 = vsel %vm346, %v3695, 0
      %v3761 = vsel %vm346, %v3696, 0
      %v3764 = vsel %vm346, %v3697, 0
      %v3767 = vsel %vm346, %v3698, 0
      %v3770 = vsel %vm346, %v3699, 0
      %v3773 = vsel %vm346, %v3700, 0
      %v3776 = vsel %vm346, %v3701, 0
      %v3779 = vsel %vm346, %v3702, 0
      %v3782 = vsel %vm346, %v3703, 0
      %v3785 = vsel %vm346, %v3704, 0
      %v3788 = vsel %vm346, %v3705, 0
      %v3791 = vsel %vm346, %v3706, 0
      %v3794 = vsel %vm346, %v3707, 0
      %v3797 = vsel %vm346, %v3708, 0
      %v3800 = vsel %vm346, %v3709, 0
      %v3803 = vsel %vm346, %v3710, 0
      %v3806 = vsel %vm346, %v3711, 0
      %v3809 = vsel %vm346, %v3712, 0
      %v3812 = vsel %vm443, %v3714, 0
      %3814 = vmatpush.msra.mxu0 0.0
      %3815 = vmatpush.msra.mxu0 0.0
      %3816 = vmatpush.msra.mxu0 0.0
      %3817 = vmatpush.msra.mxu0 0.0
      %3818 = vmatpush.msra.mxu0 0.0
      %3819 = vmatpush.msra.mxu0 0.0
      %3820 = vmatpush.msra.mxu0 0.0
      %3821 = vmatpush.msra.mxu0 0.0
      %3822 = vmatpush.msra.mxu0 0.0
      %3823 = vmatpush.msra.mxu0 0.0
      %3824 = vmatpush.msra.mxu0 0.0
      %3825 = vmatpush.msra.mxu0 0.0
      %3826 = vmatpush.msra.mxu0 0.0
      %3827 = vmatpush.msra.mxu0 0.0
      %3828 = vmatpush.msra.mxu0 0.0
      %3829 = vmatpush.msra.mxu0 %v3812
      %3830 = vmatmul.f32.gmra.mxu0 %v3716
      %v3831 = vpop.f32.mrf.mxu0
      %v3832 = vadd.f32 0.0, %v3831
      %3833 = vmatmul.f32.gmra.mxu0 %v3719
      %v3834 = vpop.f32.mrf.mxu0
      %v3835 = vadd.f32 0.0, %v3834
      %3836 = vmatmul.f32.gmra.mxu0 %v3722
      %v3837 = vpop.f32.mrf.mxu0
      %v3838 = vadd.f32 0.0, %v3837
      %3839 = vmatmul.f32.gmra.mxu0 %v3725
      %v3840 = vpop.f32.mrf.mxu0
      %v3841 = vadd.f32 0.0, %v3840
      %3842 = vmatmul.f32.gmra.mxu0 %v3728
      %v3843 = vpop.f32.mrf.mxu0
      %v3844 = vadd.f32 0.0, %v3843
      %3845 = vmatmul.f32.gmra.mxu0 %v3731
      %v3846 = vpop.f32.mrf.mxu0
      %v3847 = vadd.f32 0.0, %v3846
      %3848 = vmatmul.f32.gmra.mxu0 %v3734
      %v3849 = vpop.f32.mrf.mxu0
      %v3850 = vadd.f32 0.0, %v3849
      %3851 = vmatmul.f32.gmra.mxu0 %v3737
      %v3852 = vpop.f32.mrf.mxu0
      %v3853 = vadd.f32 0.0, %v3852
      %3854 = vmatmul.f32.gmra.mxu0 %v3740
      %v3855 = vpop.f32.mrf.mxu0
      %v3856 = vadd.f32 0.0, %v3855
      %3857 = vmatmul.f32.gmra.mxu0 %v3743
      %v3858 = vpop.f32.mrf.mxu0
      %v3859 = vadd.f32 0.0, %v3858
      %3860 = vmatmul.f32.gmra.mxu0 %v3746
      %v3861 = vpop.f32.mrf.mxu0
      %v3862 = vadd.f32 0.0, %v3861
      %3863 = vmatmul.f32.gmra.mxu0 %v3749
      %v3864 = vpop.f32.mrf.mxu0
      %v3865 = vadd.f32 0.0, %v3864
      %3866 = vmatmul.f32.gmra.mxu0 %v3752
      %v3867 = vpop.f32.mrf.mxu0
      %v3868 = vadd.f32 0.0, %v3867
      %3869 = vmatmul.f32.gmra.mxu0 %v3755
      %v3870 = vpop.f32.mrf.mxu0
      %v3871 = vadd.f32 0.0, %v3870
      %3872 = vmatmul.f32.gmra.mxu0 %v3758
      %v3873 = vpop.f32.mrf.mxu0
      %v3874 = vadd.f32 0.0, %v3873
      %3875 = vmatmul.f32.gmra.mxu0 %v3761
      %v3876 = vpop.f32.mrf.mxu0
      %v3877 = vadd.f32 0.0, %v3876
      %3878 = vmatmul.f32.gmra.mxu0 %v3764
      %v3879 = vpop.f32.mrf.mxu0
      %v3880 = vadd.f32 0.0, %v3879
      %3881 = vmatmul.f32.gmra.mxu0 %v3767
      %v3882 = vpop.f32.mrf.mxu0
      %v3883 = vadd.f32 0.0, %v3882
      %3884 = vmatmul.f32.gmra.mxu0 %v3770
      %v3885 = vpop.f32.mrf.mxu0
      %v3886 = vadd.f32 0.0, %v3885
      %3887 = vmatmul.f32.gmra.mxu0 %v3773
      %v3888 = vpop.f32.mrf.mxu0
      %v3889 = vadd.f32 0.0, %v3888
      %3890 = vmatmul.f32.gmra.mxu0 %v3776
      %v3891 = vpop.f32.mrf.mxu0
      %v3892 = vadd.f32 0.0, %v3891
      %3893 = vmatmul.f32.gmra.mxu0 %v3779
      %v3894 = vpop.f32.mrf.mxu0
      %v3895 = vadd.f32 0.0, %v3894
      %3896 = vmatmul.f32.gmra.mxu0 %v3782
      %v3897 = vpop.f32.mrf.mxu0
      %v3898 = vadd.f32 0.0, %v3897
      %3899 = vmatmul.f32.gmra.mxu0 %v3785
      %v3900 = vpop.f32.mrf.mxu0
      %v3901 = vadd.f32 0.0, %v3900
      %3902 = vmatmul.f32.gmra.mxu0 %v3788
      %v3903 = vpop.f32.mrf.mxu0
      %v3904 = vadd.f32 0.0, %v3903
      %3905 = vmatmul.f32.gmra.mxu0 %v3791
      %v3906 = vpop.f32.mrf.mxu0
      %v3907 = vadd.f32 0.0, %v3906
      %3908 = vmatmul.f32.gmra.mxu0 %v3794
      %v3909 = vpop.f32.mrf.mxu0
      %v3910 = vadd.f32 0.0, %v3909
      %3911 = vmatmul.f32.gmra.mxu0 %v3797
      %v3912 = vpop.f32.mrf.mxu0
      %v3913 = vadd.f32 0.0, %v3912
      %3914 = vmatmul.f32.gmra.mxu0 %v3800
      %v3915 = vpop.f32.mrf.mxu0
      %v3916 = vadd.f32 0.0, %v3915
      %3917 = vmatmul.f32.gmra.mxu0 %v3803
      %v3918 = vpop.f32.mrf.mxu0
      %v3919 = vadd.f32 0.0, %v3918
      %3920 = vmatmul.f32.gmra.mxu0 %v3806
      %v3921 = vpop.f32.mrf.mxu0
      %v3922 = vadd.f32 0.0, %v3921
      %3923 = vmatmul.f32.gmra.mxu0 %v3809
      %v3924 = vpop.f32.mrf.mxu0
      %v3925 = vadd.f32 0.0, %v3924
      %3926 = vdwg.mxu0
      %v3927 = vadd.f32 %v3649, %v3832
      %v3928 = vadd.f32 %v3650, %v3835
      %v3929 = vadd.f32 %v3651, %v3838
      %v3930 = vadd.f32 %v3652, %v3841
      %v3931 = vadd.f32 %v3653, %v3844
      %v3932 = vadd.f32 %v3654, %v3847
      %v3933 = vadd.f32 %v3655, %v3850
      %v3934 = vadd.f32 %v3656, %v3853
      %v3935 = vadd.f32 %v3657, %v3856
      %v3936 = vadd.f32 %v3658, %v3859
      %v3937 = vadd.f32 %v3659, %v3862
      %v3938 = vadd.f32 %v3660, %v3865
      %v3939 = vadd.f32 %v3661, %v3868
      %v3940 = vadd.f32 %v3662, %v3871
      %v3941 = vadd.f32 %v3663, %v3874
      %v3942 = vadd.f32 %v3664, %v3877
      %v3943 = vadd.f32 %v3665, %v3880
      %v3944 = vadd.f32 %v3666, %v3883
      %v3945 = vadd.f32 %v3667, %v3886
      %v3946 = vadd.f32 %v3668, %v3889
      %v3947 = vadd.f32 %v3669, %v3892
      %v3948 = vadd.f32 %v3670, %v3895
      %v3949 = vadd.f32 %v3671, %v3898
      %v3950 = vadd.f32 %v3672, %v3901
      %v3951 = vadd.f32 %v3673, %v3904
      %v3952 = vadd.f32 %v3674, %v3907
      %v3953 = vadd.f32 %v3675, %v3910
      %v3954 = vadd.f32 %v3676, %v3913
      %v3955 = vadd.f32 %v3677, %v3916
      %v3956 = vadd.f32 %v3678, %v3919
      %v3957 = vadd.f32 %v3679, %v3922
      %v3958 = vadd.f32 %v3680, %v3925
      %v3959 = vld [vmem:[%s2879 + $0x1] sm:$0xff]
      %v3960 = vld [vmem:[%s2879 + $0x9] sm:$0xff]
      %v3961 = vld [vmem:[%s2879 + $0x19] sm:$0xff]
      %v3962 = vld [vmem:[%s2879 + $0x21] sm:$0xff]
      %v3963 = vld [vmem:[%s2879 + $0x31] sm:$0xff]
      %v3964 = vld [vmem:[%s2879 + $0x39] sm:$0xff]
      %v3965 = vld [vmem:[%s2879 + $0x49] sm:$0xff]
      %v3966 = vld [vmem:[%s2879 + $0x51] sm:$0xff]
      %v3967 = vld [vmem:[%s2879 + $0x61] sm:$0xff]
      %v3968 = vld [vmem:[%s2879 + $0x69] sm:$0xff]
      %v3969 = vld [vmem:[%s2879 + $0x79] sm:$0xff]
      %v3970 = vld [vmem:[%s2879 + $0x81] sm:$0xff]
      %v3971 = vld [vmem:[%s2879 + $0x91] sm:$0xff]
      %v3972 = vld [vmem:[%s2879 + $0x99] sm:$0xff]
      %v3973 = vld [vmem:[%s2879 + $0xa9] sm:$0xff]
      %v3974 = vld [vmem:[%s2879 + $0xb1] sm:$0xff]
      %v3975 = vld [vmem:[%s2879 + $0xc1] sm:$0xff]
      %v3976 = vld [vmem:[%s2879 + $0xc9] sm:$0xff]
      %v3977 = vld [vmem:[%s2879 + $0xd9] sm:$0xff]
      %v3978 = vld [vmem:[%s2879 + $0xe1] sm:$0xff]
      %v3979 = vld [vmem:[%s2879 + $0xf1] sm:$0xff]
      %v3980 = vld [vmem:[%s2879 + $0xf9] sm:$0xff]
      %v3981 = vld [vmem:[%s2879 + $0x109] sm:$0xff]
      %v3982 = vld [vmem:[%s2879 + $0x111] sm:$0xff]
      %v3983 = vld [vmem:[%s2879 + $0x121] sm:$0xff]
      %v3984 = vld [vmem:[%s2879 + $0x129] sm:$0xff]
      %v3985 = vld [vmem:[%s2879 + $0x139] sm:$0xff]
      %v3986 = vld [vmem:[%s2879 + $0x141] sm:$0xff]
      %v3987 = vld [vmem:[%s2879 + $0x151] sm:$0xff]
      %v3988 = vld [vmem:[%s2879 + $0x159] sm:$0xff]
      %v3989 = vld [vmem:[%s2879 + $0x169] sm:$0xff]
      %v3990 = vld [vmem:[%s2879 + $0x171] sm:$0xff]
      %s3991 = scalar_lea.vmem %s4, 16
      %v3992 = vld [vmem:[%s3991] sm:$0xf]
      %v3994 = vsel %vm346, %v3959, 0
      %v3997 = vsel %vm346, %v3960, 0
      %v4000 = vsel %vm346, %v3961, 0
      %v4003 = vsel %vm346, %v3962, 0
      %v4006 = vsel %vm346, %v3963, 0
      %v4009 = vsel %vm346, %v3964, 0
      %v4012 = vsel %vm346, %v3965, 0
      %v4015 = vsel %vm346, %v3966, 0
      %v4018 = vsel %vm346, %v3967, 0
      %v4021 = vsel %vm346, %v3968, 0
      %v4024 = vsel %vm346, %v3969, 0
      %v4027 = vsel %vm346, %v3970, 0
      %v4030 = vsel %vm346, %v3971, 0
      %v4033 = vsel %vm346, %v3972, 0
      %v4036 = vsel %vm346, %v3973, 0
      %v4039 = vsel %vm346, %v3974, 0
      %v4042 = vsel %vm346, %v3975, 0
      %v4045 = vsel %vm346, %v3976, 0
      %v4048 = vsel %vm346, %v3977, 0
      %v4051 = vsel %vm346, %v3978, 0
      %v4054 = vsel %vm346, %v3979, 0
      %v4057 = vsel %vm346, %v3980, 0
      %v4060 = vsel %vm346, %v3981, 0
      %v4063 = vsel %vm346, %v3982, 0
      %v4066 = vsel %vm346, %v3983, 0
      %v4069 = vsel %vm346, %v3984, 0
      %v4072 = vsel %vm346, %v3985, 0
      %v4075 = vsel %vm346, %v3986, 0
      %v4078 = vsel %vm346, %v3987, 0
      %v4081 = vsel %vm346, %v3988, 0
      %v4084 = vsel %vm346, %v3989, 0
      %v4087 = vsel %vm346, %v3990, 0
      %v4090 = vsel %vm443, %v3992, 0
      %4092 = vmatpush.msra.mxu0 0.0
      %4093 = vmatpush.msra.mxu0 0.0
      %4094 = vmatpush.msra.mxu0 0.0
      %4095 = vmatpush.msra.mxu0 0.0
      %4096 = vmatpush.msra.mxu0 0.0
      %4097 = vmatpush.msra.mxu0 0.0
      %4098 = vmatpush.msra.mxu0 0.0
      %4099 = vmatpush.msra.mxu0 0.0
      %4100 = vmatpush.msra.mxu0 0.0
      %4101 = vmatpush.msra.mxu0 0.0
      %4102 = vmatpush.msra.mxu0 0.0
      %4103 = vmatpush.msra.mxu0 0.0
      %4104 = vmatpush.msra.mxu0 0.0
      %4105 = vmatpush.msra.mxu0 0.0
      %4106 = vmatpush.msra.mxu0 0.0
      %4107 = vmatpush.msra.mxu0 %v4090
      %4108 = vmatmul.f32.gmra.mxu0 %v3994
      %v4109 = vpop.f32.mrf.mxu0
      %v4110 = vadd.f32 0.0, %v4109
      %4111 = vmatmul.f32.gmra.mxu0 %v3997
      %v4112 = vpop.f32.mrf.mxu0
      %v4113 = vadd.f32 0.0, %v4112
      %4114 = vmatmul.f32.gmra.mxu0 %v4000
      %v4115 = vpop.f32.mrf.mxu0
      %v4116 = vadd.f32 0.0, %v4115
      %4117 = vmatmul.f32.gmra.mxu0 %v4003
      %v4118 = vpop.f32.mrf.mxu0
      %v4119 = vadd.f32 0.0, %v4118
      %4120 = vmatmul.f32.gmra.mxu0 %v4006
      %v4121 = vpop.f32.mrf.mxu0
      %v4122 = vadd.f32 0.0, %v4121
      %4123 = vmatmul.f32.gmra.mxu0 %v4009
      %v4124 = vpop.f32.mrf.mxu0
      %v4125 = vadd.f32 0.0, %v4124
      %4126 = vmatmul.f32.gmra.mxu0 %v4012
      %v4127 = vpop.f32.mrf.mxu0
      %v4128 = vadd.f32 0.0, %v4127
      %4129 = vmatmul.f32.gmra.mxu0 %v4015
      %v4130 = vpop.f32.mrf.mxu0
      %v4131 = vadd.f32 0.0, %v4130
      %4132 = vmatmul.f32.gmra.mxu0 %v4018
      %v4133 = vpop.f32.mrf.mxu0
      %v4134 = vadd.f32 0.0, %v4133
      %4135 = vmatmul.f32.gmra.mxu0 %v4021
      %v4136 = vpop.f32.mrf.mxu0
      %v4137 = vadd.f32 0.0, %v4136
      %4138 = vmatmul.f32.gmra.mxu0 %v4024
      %v4139 = vpop.f32.mrf.mxu0
      %v4140 = vadd.f32 0.0, %v4139
      %4141 = vmatmul.f32.gmra.mxu0 %v4027
      %v4142 = vpop.f32.mrf.mxu0
      %v4143 = vadd.f32 0.0, %v4142
      %4144 = vmatmul.f32.gmra.mxu0 %v4030
      %v4145 = vpop.f32.mrf.mxu0
      %v4146 = vadd.f32 0.0, %v4145
      %4147 = vmatmul.f32.gmra.mxu0 %v4033
      %v4148 = vpop.f32.mrf.mxu0
      %v4149 = vadd.f32 0.0, %v4148
      %4150 = vmatmul.f32.gmra.mxu0 %v4036
      %v4151 = vpop.f32.mrf.mxu0
      %v4152 = vadd.f32 0.0, %v4151
      %4153 = vmatmul.f32.gmra.mxu0 %v4039
      %v4154 = vpop.f32.mrf.mxu0
      %v4155 = vadd.f32 0.0, %v4154
      %4156 = vmatmul.f32.gmra.mxu0 %v4042
      %v4157 = vpop.f32.mrf.mxu0
      %v4158 = vadd.f32 0.0, %v4157
      %4159 = vmatmul.f32.gmra.mxu0 %v4045
      %v4160 = vpop.f32.mrf.mxu0
      %v4161 = vadd.f32 0.0, %v4160
      %4162 = vmatmul.f32.gmra.mxu0 %v4048
      %v4163 = vpop.f32.mrf.mxu0
      %v4164 = vadd.f32 0.0, %v4163
      %4165 = vmatmul.f32.gmra.mxu0 %v4051
      %v4166 = vpop.f32.mrf.mxu0
      %v4167 = vadd.f32 0.0, %v4166
      %4168 = vmatmul.f32.gmra.mxu0 %v4054
      %v4169 = vpop.f32.mrf.mxu0
      %v4170 = vadd.f32 0.0, %v4169
      %4171 = vmatmul.f32.gmra.mxu0 %v4057
      %v4172 = vpop.f32.mrf.mxu0
      %v4173 = vadd.f32 0.0, %v4172
      %4174 = vmatmul.f32.gmra.mxu0 %v4060
      %v4175 = vpop.f32.mrf.mxu0
      %v4176 = vadd.f32 0.0, %v4175
      %4177 = vmatmul.f32.gmra.mxu0 %v4063
      %v4178 = vpop.f32.mrf.mxu0
      %v4179 = vadd.f32 0.0, %v4178
      %4180 = vmatmul.f32.gmra.mxu0 %v4066
      %v4181 = vpop.f32.mrf.mxu0
      %v4182 = vadd.f32 0.0, %v4181
      %4183 = vmatmul.f32.gmra.mxu0 %v4069
      %v4184 = vpop.f32.mrf.mxu0
      %v4185 = vadd.f32 0.0, %v4184
      %4186 = vmatmul.f32.gmra.mxu0 %v4072
      %v4187 = vpop.f32.mrf.mxu0
      %v4188 = vadd.f32 0.0, %v4187
      %4189 = vmatmul.f32.gmra.mxu0 %v4075
      %v4190 = vpop.f32.mrf.mxu0
      %v4191 = vadd.f32 0.0, %v4190
      %4192 = vmatmul.f32.gmra.mxu0 %v4078
      %v4193 = vpop.f32.mrf.mxu0
      %v4194 = vadd.f32 0.0, %v4193
      %4195 = vmatmul.f32.gmra.mxu0 %v4081
      %v4196 = vpop.f32.mrf.mxu0
      %v4197 = vadd.f32 0.0, %v4196
      %4198 = vmatmul.f32.gmra.mxu0 %v4084
      %v4199 = vpop.f32.mrf.mxu0
      %v4200 = vadd.f32 0.0, %v4199
      %4201 = vmatmul.f32.gmra.mxu0 %v4087
      %v4202 = vpop.f32.mrf.mxu0
      %v4203 = vadd.f32 0.0, %v4202
      %4204 = vdwg.mxu0
      %v4205 = vadd.f32 %v3927, %v4110
      %v4206 = vadd.f32 %v3928, %v4113
      %v4207 = vadd.f32 %v3929, %v4116
      %v4208 = vadd.f32 %v3930, %v4119
      %v4209 = vadd.f32 %v3931, %v4122
      %v4210 = vadd.f32 %v3932, %v4125
      %v4211 = vadd.f32 %v3933, %v4128
      %v4212 = vadd.f32 %v3934, %v4131
      %v4213 = vadd.f32 %v3935, %v4134
      %v4214 = vadd.f32 %v3936, %v4137
      %v4215 = vadd.f32 %v3937, %v4140
      %v4216 = vadd.f32 %v3938, %v4143
      %v4217 = vadd.f32 %v3939, %v4146
      %v4218 = vadd.f32 %v3940, %v4149
      %v4219 = vadd.f32 %v3941, %v4152
      %v4220 = vadd.f32 %v3942, %v4155
      %v4221 = vadd.f32 %v3943, %v4158
      %v4222 = vadd.f32 %v3944, %v4161
      %v4223 = vadd.f32 %v3945, %v4164
      %v4224 = vadd.f32 %v3946, %v4167
      %v4225 = vadd.f32 %v3947, %v4170
      %v4226 = vadd.f32 %v3948, %v4173
      %v4227 = vadd.f32 %v3949, %v4176
      %v4228 = vadd.f32 %v3950, %v4179
      %v4229 = vadd.f32 %v3951, %v4182
      %v4230 = vadd.f32 %v3952, %v4185
      %v4231 = vadd.f32 %v3953, %v4188
      %v4232 = vadd.f32 %v3954, %v4191
      %v4233 = vadd.f32 %v3955, %v4194
      %v4234 = vadd.f32 %v3956, %v4197
      %v4235 = vadd.f32 %v3957, %v4200
      %v4236 = vadd.f32 %v3958, %v4203
      %v4237 = vld [vmem:[%s2879 + $0x2] sm:$0xff]
      %v4238 = vld [vmem:[%s2879 + $0xa] sm:$0xff]
      %v4239 = vld [vmem:[%s2879 + $0x1a] sm:$0xff]
      %v4240 = vld [vmem:[%s2879 + $0x22] sm:$0xff]
      %v4241 = vld [vmem:[%s2879 + $0x32] sm:$0xff]
      %v4242 = vld [vmem:[%s2879 + $0x3a] sm:$0xff]
      %v4243 = vld [vmem:[%s2879 + $0x4a] sm:$0xff]
      %v4244 = vld [vmem:[%s2879 + $0x52] sm:$0xff]
      %v4245 = vld [vmem:[%s2879 + $0x62] sm:$0xff]
      %v4246 = vld [vmem:[%s2879 + $0x6a] sm:$0xff]
      %v4247 = vld [vmem:[%s2879 + $0x7a] sm:$0xff]
      %v4248 = vld [vmem:[%s2879 + $0x82] sm:$0xff]
      %v4249 = vld [vmem:[%s2879 + $0x92] sm:$0xff]
      %v4250 = vld [vmem:[%s2879 + $0x9a] sm:$0xff]
      %v4251 = vld [vmem:[%s2879 + $0xaa] sm:$0xff]
      %v4252 = vld [vmem:[%s2879 + $0xb2] sm:$0xff]
      %v4253 = vld [vmem:[%s2879 + $0xc2] sm:$0xff]
      %v4254 = vld [vmem:[%s2879 + $0xca] sm:$0xff]
      %v4255 = vld [vmem:[%s2879 + $0xda] sm:$0xff]
      %v4256 = vld [vmem:[%s2879 + $0xe2] sm:$0xff]
      %v4257 = vld [vmem:[%s2879 + $0xf2] sm:$0xff]
      %v4258 = vld [vmem:[%s2879 + $0xfa] sm:$0xff]
      %v4259 = vld [vmem:[%s2879 + $0x10a] sm:$0xff]
      %v4260 = vld [vmem:[%s2879 + $0x112] sm:$0xff]
      %v4261 = vld [vmem:[%s2879 + $0x122] sm:$0xff]
      %v4262 = vld [vmem:[%s2879 + $0x12a] sm:$0xff]
      %v4263 = vld [vmem:[%s2879 + $0x13a] sm:$0xff]
      %v4264 = vld [vmem:[%s2879 + $0x142] sm:$0xff]
      %v4265 = vld [vmem:[%s2879 + $0x152] sm:$0xff]
      %v4266 = vld [vmem:[%s2879 + $0x15a] sm:$0xff]
      %v4267 = vld [vmem:[%s2879 + $0x16a] sm:$0xff]
      %v4268 = vld [vmem:[%s2879 + $0x172] sm:$0xff]
      %s4269 = scalar_lea.vmem %s4, 20
      %v4270 = vld [vmem:[%s4269] sm:$0xf]
      %v4272 = vsel %vm346, %v4237, 0
      %v4275 = vsel %vm346, %v4238, 0
      %v4278 = vsel %vm346, %v4239, 0
      %v4281 = vsel %vm346, %v4240, 0
      %v4284 = vsel %vm346, %v4241, 0
      %v4287 = vsel %vm346, %v4242, 0
      %v4290 = vsel %vm346, %v4243, 0
      %v4293 = vsel %vm346, %v4244, 0
      %v4296 = vsel %vm346, %v4245, 0
      %v4299 = vsel %vm346, %v4246, 0
      %v4302 = vsel %vm346, %v4247, 0
      %v4305 = vsel %vm346, %v4248, 0
      %v4308 = vsel %vm346, %v4249, 0
      %v4311 = vsel %vm346, %v4250, 0
      %v4314 = vsel %vm346, %v4251, 0
      %v4317 = vsel %vm346, %v4252, 0
      %v4320 = vsel %vm346, %v4253, 0
      %v4323 = vsel %vm346, %v4254, 0
      %v4326 = vsel %vm346, %v4255, 0
      %v4329 = vsel %vm346, %v4256, 0
      %v4332 = vsel %vm346, %v4257, 0
      %v4335 = vsel %vm346, %v4258, 0
      %v4338 = vsel %vm346, %v4259, 0
      %v4341 = vsel %vm346, %v4260, 0
      %v4344 = vsel %vm346, %v4261, 0
      %v4347 = vsel %vm346, %v4262, 0
      %v4350 = vsel %vm346, %v4263, 0
      %v4353 = vsel %vm346, %v4264, 0
      %v4356 = vsel %vm346, %v4265, 0
      %v4359 = vsel %vm346, %v4266, 0
      %v4362 = vsel %vm346, %v4267, 0
      %v4365 = vsel %vm346, %v4268, 0
      %v4368 = vsel %vm443, %v4270, 0
      %4370 = vmatpush.msra.mxu0 0.0
      %4371 = vmatpush.msra.mxu0 0.0
      %4372 = vmatpush.msra.mxu0 0.0
      %4373 = vmatpush.msra.mxu0 0.0
      %4374 = vmatpush.msra.mxu0 0.0
      %4375 = vmatpush.msra.mxu0 0.0
      %4376 = vmatpush.msra.mxu0 0.0
      %4377 = vmatpush.msra.mxu0 0.0
      %4378 = vmatpush.msra.mxu0 0.0
      %4379 = vmatpush.msra.mxu0 0.0
      %4380 = vmatpush.msra.mxu0 0.0
      %4381 = vmatpush.msra.mxu0 0.0
      %4382 = vmatpush.msra.mxu0 0.0
      %4383 = vmatpush.msra.mxu0 0.0
      %4384 = vmatpush.msra.mxu0 0.0
      %4385 = vmatpush.msra.mxu0 %v4368
      %4386 = vmatmul.f32.gmra.mxu0 %v4272
      %v4387 = vpop.f32.mrf.mxu0
      %v4388 = vadd.f32 0.0, %v4387
      %4389 = vmatmul.f32.gmra.mxu0 %v4275
      %v4390 = vpop.f32.mrf.mxu0
      %v4391 = vadd.f32 0.0, %v4390
      %4392 = vmatmul.f32.gmra.mxu0 %v4278
      %v4393 = vpop.f32.mrf.mxu0
      %v4394 = vadd.f32 0.0, %v4393
      %4395 = vmatmul.f32.gmra.mxu0 %v4281
      %v4396 = vpop.f32.mrf.mxu0
      %v4397 = vadd.f32 0.0, %v4396
      %4398 = vmatmul.f32.gmra.mxu0 %v4284
      %v4399 = vpop.f32.mrf.mxu0
      %v4400 = vadd.f32 0.0, %v4399
      %4401 = vmatmul.f32.gmra.mxu0 %v4287
      %v4402 = vpop.f32.mrf.mxu0
      %v4403 = vadd.f32 0.0, %v4402
      %4404 = vmatmul.f32.gmra.mxu0 %v4290
      %v4405 = vpop.f32.mrf.mxu0
      %v4406 = vadd.f32 0.0, %v4405
      %4407 = vmatmul.f32.gmra.mxu0 %v4293
      %v4408 = vpop.f32.mrf.mxu0
      %v4409 = vadd.f32 0.0, %v4408
      %4410 = vmatmul.f32.gmra.mxu0 %v4296
      %v4411 = vpop.f32.mrf.mxu0
      %v4412 = vadd.f32 0.0, %v4411
      %4413 = vmatmul.f32.gmra.mxu0 %v4299
      %v4414 = vpop.f32.mrf.mxu0
      %v4415 = vadd.f32 0.0, %v4414
      %4416 = vmatmul.f32.gmra.mxu0 %v4302
      %v4417 = vpop.f32.mrf.mxu0
      %v4418 = vadd.f32 0.0, %v4417
      %4419 = vmatmul.f32.gmra.mxu0 %v4305
      %v4420 = vpop.f32.mrf.mxu0
      %v4421 = vadd.f32 0.0, %v4420
      %4422 = vmatmul.f32.gmra.mxu0 %v4308
      %v4423 = vpop.f32.mrf.mxu0
      %v4424 = vadd.f32 0.0, %v4423
      %4425 = vmatmul.f32.gmra.mxu0 %v4311
      %v4426 = vpop.f32.mrf.mxu0
      %v4427 = vadd.f32 0.0, %v4426
      %4428 = vmatmul.f32.gmra.mxu0 %v4314
      %v4429 = vpop.f32.mrf.mxu0
      %v4430 = vadd.f32 0.0, %v4429
      %4431 = vmatmul.f32.gmra.mxu0 %v4317
      %v4432 = vpop.f32.mrf.mxu0
      %v4433 = vadd.f32 0.0, %v4432
      %4434 = vmatmul.f32.gmra.mxu0 %v4320
      %v4435 = vpop.f32.mrf.mxu0
      %v4436 = vadd.f32 0.0, %v4435
      %4437 = vmatmul.f32.gmra.mxu0 %v4323
      %v4438 = vpop.f32.mrf.mxu0
      %v4439 = vadd.f32 0.0, %v4438
      %4440 = vmatmul.f32.gmra.mxu0 %v4326
      %v4441 = vpop.f32.mrf.mxu0
      %v4442 = vadd.f32 0.0, %v4441
      %4443 = vmatmul.f32.gmra.mxu0 %v4329
      %v4444 = vpop.f32.mrf.mxu0
      %v4445 = vadd.f32 0.0, %v4444
      %4446 = vmatmul.f32.gmra.mxu0 %v4332
      %v4447 = vpop.f32.mrf.mxu0
      %v4448 = vadd.f32 0.0, %v4447
      %4449 = vmatmul.f32.gmra.mxu0 %v4335
      %v4450 = vpop.f32.mrf.mxu0
      %v4451 = vadd.f32 0.0, %v4450
      %4452 = vmatmul.f32.gmra.mxu0 %v4338
      %v4453 = vpop.f32.mrf.mxu0
      %v4454 = vadd.f32 0.0, %v4453
      %4455 = vmatmul.f32.gmra.mxu0 %v4341
      %v4456 = vpop.f32.mrf.mxu0
      %v4457 = vadd.f32 0.0, %v4456
      %4458 = vmatmul.f32.gmra.mxu0 %v4344
      %v4459 = vpop.f32.mrf.mxu0
      %v4460 = vadd.f32 0.0, %v4459
      %4461 = vmatmul.f32.gmra.mxu0 %v4347
      %v4462 = vpop.f32.mrf.mxu0
      %v4463 = vadd.f32 0.0, %v4462
      %4464 = vmatmul.f32.gmra.mxu0 %v4350
      %v4465 = vpop.f32.mrf.mxu0
      %v4466 = vadd.f32 0.0, %v4465
      %4467 = vmatmul.f32.gmra.mxu0 %v4353
      %v4468 = vpop.f32.mrf.mxu0
      %v4469 = vadd.f32 0.0, %v4468
      %4470 = vmatmul.f32.gmra.mxu0 %v4356
      %v4471 = vpop.f32.mrf.mxu0
      %v4472 = vadd.f32 0.0, %v4471
      %4473 = vmatmul.f32.gmra.mxu0 %v4359
      %v4474 = vpop.f32.mrf.mxu0
      %v4475 = vadd.f32 0.0, %v4474
      %4476 = vmatmul.f32.gmra.mxu0 %v4362
      %v4477 = vpop.f32.mrf.mxu0
      %v4478 = vadd.f32 0.0, %v4477
      %4479 = vmatmul.f32.gmra.mxu0 %v4365
      %v4480 = vpop.f32.mrf.mxu0
      %v4481 = vadd.f32 0.0, %v4480
      %4482 = vdwg.mxu0
      %v4483 = vadd.f32 %v4205, %v4388
      %v4484 = vadd.f32 %v4206, %v4391
      %v4485 = vadd.f32 %v4207, %v4394
      %v4486 = vadd.f32 %v4208, %v4397
      %v4487 = vadd.f32 %v4209, %v4400
      %v4488 = vadd.f32 %v4210, %v4403
      %v4489 = vadd.f32 %v4211, %v4406
      %v4490 = vadd.f32 %v4212, %v4409
      %v4491 = vadd.f32 %v4213, %v4412
      %v4492 = vadd.f32 %v4214, %v4415
      %v4493 = vadd.f32 %v4215, %v4418
      %v4494 = vadd.f32 %v4216, %v4421
      %v4495 = vadd.f32 %v4217, %v4424
      %v4496 = vadd.f32 %v4218, %v4427
      %v4497 = vadd.f32 %v4219, %v4430
      %v4498 = vadd.f32 %v4220, %v4433
      %v4499 = vadd.f32 %v4221, %v4436
      %v4500 = vadd.f32 %v4222, %v4439
      %v4501 = vadd.f32 %v4223, %v4442
      %v4502 = vadd.f32 %v4224, %v4445
      %v4503 = vadd.f32 %v4225, %v4448
      %v4504 = vadd.f32 %v4226, %v4451
      %v4505 = vadd.f32 %v4227, %v4454
      %v4506 = vadd.f32 %v4228, %v4457
      %v4507 = vadd.f32 %v4229, %v4460
      %v4508 = vadd.f32 %v4230, %v4463
      %v4509 = vadd.f32 %v4231, %v4466
      %v4510 = vadd.f32 %v4232, %v4469
      %v4511 = vadd.f32 %v4233, %v4472
      %v4512 = vadd.f32 %v4234, %v4475
      %v4513 = vadd.f32 %v4235, %v4478
      %v4514 = vadd.f32 %v4236, %v4481
      %s4515 = scalar_lea.vmem [#allocation2], 48
      %v4516 = vld [vmem:[%s4515] sm:$0xff]
      %v4517 = vld [vmem:[%s4515 + $0x8] sm:$0xff]
      %v4518 = vld [vmem:[%s4515 + $0x18] sm:$0xff]
      %v4519 = vld [vmem:[%s4515 + $0x20] sm:$0xff]
      %v4520 = vld [vmem:[%s4515 + $0x30] sm:$0xff]
      %v4521 = vld [vmem:[%s4515 + $0x38] sm:$0xff]
      %v4522 = vld [vmem:[%s4515 + $0x48] sm:$0xff]
      %v4523 = vld [vmem:[%s4515 + $0x50] sm:$0xff]
      %v4524 = vld [vmem:[%s4515 + $0x60] sm:$0xff]
      %v4525 = vld [vmem:[%s4515 + $0x68] sm:$0xff]
      %v4526 = vld [vmem:[%s4515 + $0x78] sm:$0xff]
      %v4527 = vld [vmem:[%s4515 + $0x80] sm:$0xff]
      %v4528 = vld [vmem:[%s4515 + $0x90] sm:$0xff]
      %v4529 = vld [vmem:[%s4515 + $0x98] sm:$0xff]
      %v4530 = vld [vmem:[%s4515 + $0xa8] sm:$0xff]
      %v4531 = vld [vmem:[%s4515 + $0xb0] sm:$0xff]
      %v4532 = vld [vmem:[%s4515 + $0xc0] sm:$0xff]
      %v4533 = vld [vmem:[%s4515 + $0xc8] sm:$0xff]
      %v4534 = vld [vmem:[%s4515 + $0xd8] sm:$0xff]
      %v4535 = vld [vmem:[%s4515 + $0xe0] sm:$0xff]
      %v4536 = vld [vmem:[%s4515 + $0xf0] sm:$0xff]
      %v4537 = vld [vmem:[%s4515 + $0xf8] sm:$0xff]
      %v4538 = vld [vmem:[%s4515 + $0x108] sm:$0xff]
      %v4539 = vld [vmem:[%s4515 + $0x110] sm:$0xff]
      %v4540 = vld [vmem:[%s4515 + $0x120] sm:$0xff]
      %v4541 = vld [vmem:[%s4515 + $0x128] sm:$0xff]
      %v4542 = vld [vmem:[%s4515 + $0x138] sm:$0xff]
      %v4543 = vld [vmem:[%s4515 + $0x140] sm:$0xff]
      %v4544 = vld [vmem:[%s4515 + $0x150] sm:$0xff]
      %v4545 = vld [vmem:[%s4515 + $0x158] sm:$0xff]
      %v4546 = vld [vmem:[%s4515 + $0x168] sm:$0xff]
      %v4547 = vld [vmem:[%s4515 + $0x170] sm:$0xff]
      %s4548 = scalar_lea.vmem %s4, 24
      %v4549 = vld [vmem:[%s4548] sm:$0xf]
      %v4551 = vsel %vm346, %v4516, 0
      %v4554 = vsel %vm346, %v4517, 0
      %v4557 = vsel %vm346, %v4518, 0
      %v4560 = vsel %vm346, %v4519, 0
      %v4563 = vsel %vm346, %v4520, 0
      %v4566 = vsel %vm346, %v4521, 0
      %v4569 = vsel %vm346, %v4522, 0
      %v4572 = vsel %vm346, %v4523, 0
      %v4575 = vsel %vm346, %v4524, 0
      %v4578 = vsel %vm346, %v4525, 0
      %v4581 = vsel %vm346, %v4526, 0
      %v4584 = vsel %vm346, %v4527, 0
      %v4587 = vsel %vm346, %v4528, 0
      %v4590 = vsel %vm346, %v4529, 0
      %v4593 = vsel %vm346, %v4530, 0
      %v4596 = vsel %vm346, %v4531, 0
      %v4599 = vsel %vm346, %v4532, 0
      %v4602 = vsel %vm346, %v4533, 0
      %v4605 = vsel %vm346, %v4534, 0
      %v4608 = vsel %vm346, %v4535, 0
      %v4611 = vsel %vm346, %v4536, 0
      %v4614 = vsel %vm346, %v4537, 0
      %v4617 = vsel %vm346, %v4538, 0
      %v4620 = vsel %vm346, %v4539, 0
      %v4623 = vsel %vm346, %v4540, 0
      %v4626 = vsel %vm346, %v4541, 0
      %v4629 = vsel %vm346, %v4542, 0
      %v4632 = vsel %vm346, %v4543, 0
      %v4635 = vsel %vm346, %v4544, 0
      %v4638 = vsel %vm346, %v4545, 0
      %v4641 = vsel %vm346, %v4546, 0
      %v4644 = vsel %vm346, %v4547, 0
      %v4647 = vsel %vm443, %v4549, 0
      %4649 = vmatpush.msra.mxu0 0.0
      %4650 = vmatpush.msra.mxu0 0.0
      %4651 = vmatpush.msra.mxu0 0.0
      %4652 = vmatpush.msra.mxu0 0.0
      %4653 = vmatpush.msra.mxu0 0.0
      %4654 = vmatpush.msra.mxu0 0.0
      %4655 = vmatpush.msra.mxu0 0.0
      %4656 = vmatpush.msra.mxu0 0.0
      %4657 = vmatpush.msra.mxu0 0.0
      %4658 = vmatpush.msra.mxu0 0.0
      %4659 = vmatpush.msra.mxu0 0.0
      %4660 = vmatpush.msra.mxu0 0.0
      %4661 = vmatpush.msra.mxu0 0.0
      %4662 = vmatpush.msra.mxu0 0.0
      %4663 = vmatpush.msra.mxu0 0.0
      %4664 = vmatpush.msra.mxu0 %v4647
      %4665 = vmatmul.f32.gmra.mxu0 %v4551
      %v4666 = vpop.f32.mrf.mxu0
      %v4667 = vadd.f32 0.0, %v4666
      %4668 = vmatmul.f32.gmra.mxu0 %v4554
      %v4669 = vpop.f32.mrf.mxu0
      %v4670 = vadd.f32 0.0, %v4669
      %4671 = vmatmul.f32.gmra.mxu0 %v4557
      %v4672 = vpop.f32.mrf.mxu0
      %v4673 = vadd.f32 0.0, %v4672
      %4674 = vmatmul.f32.gmra.mxu0 %v4560
      %v4675 = vpop.f32.mrf.mxu0
      %v4676 = vadd.f32 0.0, %v4675
      %4677 = vmatmul.f32.gmra.mxu0 %v4563
      %v4678 = vpop.f32.mrf.mxu0
      %v4679 = vadd.f32 0.0, %v4678
      %4680 = vmatmul.f32.gmra.mxu0 %v4566
      %v4681 = vpop.f32.mrf.mxu0
      %v4682 = vadd.f32 0.0, %v4681
      %4683 = vmatmul.f32.gmra.mxu0 %v4569
      %v4684 = vpop.f32.mrf.mxu0
      %v4685 = vadd.f32 0.0, %v4684
      %4686 = vmatmul.f32.gmra.mxu0 %v4572
      %v4687 = vpop.f32.mrf.mxu0
      %v4688 = vadd.f32 0.0, %v4687
      %4689 = vmatmul.f32.gmra.mxu0 %v4575
      %v4690 = vpop.f32.mrf.mxu0
      %v4691 = vadd.f32 0.0, %v4690
      %4692 = vmatmul.f32.gmra.mxu0 %v4578
      %v4693 = vpop.f32.mrf.mxu0
      %v4694 = vadd.f32 0.0, %v4693
      %4695 = vmatmul.f32.gmra.mxu0 %v4581
      %v4696 = vpop.f32.mrf.mxu0
      %v4697 = vadd.f32 0.0, %v4696
      %4698 = vmatmul.f32.gmra.mxu0 %v4584
      %v4699 = vpop.f32.mrf.mxu0
      %v4700 = vadd.f32 0.0, %v4699
      %4701 = vmatmul.f32.gmra.mxu0 %v4587
      %v4702 = vpop.f32.mrf.mxu0
      %v4703 = vadd.f32 0.0, %v4702
      %4704 = vmatmul.f32.gmra.mxu0 %v4590
      %v4705 = vpop.f32.mrf.mxu0
      %v4706 = vadd.f32 0.0, %v4705
      %4707 = vmatmul.f32.gmra.mxu0 %v4593
      %v4708 = vpop.f32.mrf.mxu0
      %v4709 = vadd.f32 0.0, %v4708
      %4710 = vmatmul.f32.gmra.mxu0 %v4596
      %v4711 = vpop.f32.mrf.mxu0
      %v4712 = vadd.f32 0.0, %v4711
      %4713 = vmatmul.f32.gmra.mxu0 %v4599
      %v4714 = vpop.f32.mrf.mxu0
      %v4715 = vadd.f32 0.0, %v4714
      %4716 = vmatmul.f32.gmra.mxu0 %v4602
      %v4717 = vpop.f32.mrf.mxu0
      %v4718 = vadd.f32 0.0, %v4717
      %4719 = vmatmul.f32.gmra.mxu0 %v4605
      %v4720 = vpop.f32.mrf.mxu0
      %v4721 = vadd.f32 0.0, %v4720
      %4722 = vmatmul.f32.gmra.mxu0 %v4608
      %v4723 = vpop.f32.mrf.mxu0
      %v4724 = vadd.f32 0.0, %v4723
      %4725 = vmatmul.f32.gmra.mxu0 %v4611
      %v4726 = vpop.f32.mrf.mxu0
      %v4727 = vadd.f32 0.0, %v4726
      %4728 = vmatmul.f32.gmra.mxu0 %v4614
      %v4729 = vpop.f32.mrf.mxu0
      %v4730 = vadd.f32 0.0, %v4729
      %4731 = vmatmul.f32.gmra.mxu0 %v4617
      %v4732 = vpop.f32.mrf.mxu0
      %v4733 = vadd.f32 0.0, %v4732
      %4734 = vmatmul.f32.gmra.mxu0 %v4620
      %v4735 = vpop.f32.mrf.mxu0
      %v4736 = vadd.f32 0.0, %v4735
      %4737 = vmatmul.f32.gmra.mxu0 %v4623
      %v4738 = vpop.f32.mrf.mxu0
      %v4739 = vadd.f32 0.0, %v4738
      %4740 = vmatmul.f32.gmra.mxu0 %v4626
      %v4741 = vpop.f32.mrf.mxu0
      %v4742 = vadd.f32 0.0, %v4741
      %4743 = vmatmul.f32.gmra.mxu0 %v4629
      %v4744 = vpop.f32.mrf.mxu0
      %v4745 = vadd.f32 0.0, %v4744
      %4746 = vmatmul.f32.gmra.mxu0 %v4632
      %v4747 = vpop.f32.mrf.mxu0
      %v4748 = vadd.f32 0.0, %v4747
      %4749 = vmatmul.f32.gmra.mxu0 %v4635
      %v4750 = vpop.f32.mrf.mxu0
      %v4751 = vadd.f32 0.0, %v4750
      %4752 = vmatmul.f32.gmra.mxu0 %v4638
      %v4753 = vpop.f32.mrf.mxu0
      %v4754 = vadd.f32 0.0, %v4753
      %4755 = vmatmul.f32.gmra.mxu0 %v4641
      %v4756 = vpop.f32.mrf.mxu0
      %v4757 = vadd.f32 0.0, %v4756
      %4758 = vmatmul.f32.gmra.mxu0 %v4644
      %v4759 = vpop.f32.mrf.mxu0
      %v4760 = vadd.f32 0.0, %v4759
      %4761 = vdwg.mxu0
      %v4762 = vadd.f32 %v4483, %v4667
      %v4763 = vadd.f32 %v4484, %v4670
      %v4764 = vadd.f32 %v4485, %v4673
      %v4765 = vadd.f32 %v4486, %v4676
      %v4766 = vadd.f32 %v4487, %v4679
      %v4767 = vadd.f32 %v4488, %v4682
      %v4768 = vadd.f32 %v4489, %v4685
      %v4769 = vadd.f32 %v4490, %v4688
      %v4770 = vadd.f32 %v4491, %v4691
      %v4771 = vadd.f32 %v4492, %v4694
      %v4772 = vadd.f32 %v4493, %v4697
      %v4773 = vadd.f32 %v4494, %v4700
      %v4774 = vadd.f32 %v4495, %v4703
      %v4775 = vadd.f32 %v4496, %v4706
      %v4776 = vadd.f32 %v4497, %v4709
      %v4777 = vadd.f32 %v4498, %v4712
      %v4778 = vadd.f32 %v4499, %v4715
      %v4779 = vadd.f32 %v4500, %v4718
      %v4780 = vadd.f32 %v4501, %v4721
      %v4781 = vadd.f32 %v4502, %v4724
      %v4782 = vadd.f32 %v4503, %v4727
      %v4783 = vadd.f32 %v4504, %v4730
      %v4784 = vadd.f32 %v4505, %v4733
      %v4785 = vadd.f32 %v4506, %v4736
      %v4786 = vadd.f32 %v4507, %v4739
      %v4787 = vadd.f32 %v4508, %v4742
      %v4788 = vadd.f32 %v4509, %v4745
      %v4789 = vadd.f32 %v4510, %v4748
      %v4790 = vadd.f32 %v4511, %v4751
      %v4791 = vadd.f32 %v4512, %v4754
      %v4792 = vadd.f32 %v4513, %v4757
      %v4793 = vadd.f32 %v4514, %v4760
      %v4794 = vld [vmem:[%s4515 + $0x1] sm:$0xff]
      %v4795 = vld [vmem:[%s4515 + $0x9] sm:$0xff]
      %v4796 = vld [vmem:[%s4515 + $0x19] sm:$0xff]
      %v4797 = vld [vmem:[%s4515 + $0x21] sm:$0xff]
      %v4798 = vld [vmem:[%s4515 + $0x31] sm:$0xff]
      %v4799 = vld [vmem:[%s4515 + $0x39] sm:$0xff]
      %v4800 = vld [vmem:[%s4515 + $0x49] sm:$0xff]
      %v4801 = vld [vmem:[%s4515 + $0x51] sm:$0xff]
      %v4802 = vld [vmem:[%s4515 + $0x61] sm:$0xff]
      %v4803 = vld [vmem:[%s4515 + $0x69] sm:$0xff]
      %v4804 = vld [vmem:[%s4515 + $0x79] sm:$0xff]
      %v4805 = vld [vmem:[%s4515 + $0x81] sm:$0xff]
      %v4806 = vld [vmem:[%s4515 + $0x91] sm:$0xff]
      %v4807 = vld [vmem:[%s4515 + $0x99] sm:$0xff]
      %v4808 = vld [vmem:[%s4515 + $0xa9] sm:$0xff]
      %v4809 = vld [vmem:[%s4515 + $0xb1] sm:$0xff]
      %v4810 = vld [vmem:[%s4515 + $0xc1] sm:$0xff]
      %v4811 = vld [vmem:[%s4515 + $0xc9] sm:$0xff]
      %v4812 = vld [vmem:[%s4515 + $0xd9] sm:$0xff]
      %v4813 = vld [vmem:[%s4515 + $0xe1] sm:$0xff]
      %v4814 = vld [vmem:[%s4515 + $0xf1] sm:$0xff]
      %v4815 = vld [vmem:[%s4515 + $0xf9] sm:$0xff]
      %v4816 = vld [vmem:[%s4515 + $0x109] sm:$0xff]
      %v4817 = vld [vmem:[%s4515 + $0x111] sm:$0xff]
      %v4818 = vld [vmem:[%s4515 + $0x121] sm:$0xff]
      %v4819 = vld [vmem:[%s4515 + $0x129] sm:$0xff]
      %v4820 = vld [vmem:[%s4515 + $0x139] sm:$0xff]
      %v4821 = vld [vmem:[%s4515 + $0x141] sm:$0xff]
      %v4822 = vld [vmem:[%s4515 + $0x151] sm:$0xff]
      %v4823 = vld [vmem:[%s4515 + $0x159] sm:$0xff]
      %v4824 = vld [vmem:[%s4515 + $0x169] sm:$0xff]
      %v4825 = vld [vmem:[%s4515 + $0x171] sm:$0xff]
      %s4826 = scalar_lea.vmem %s4, 28
      %v4827 = vld [vmem:[%s4826] sm:$0xf]
      %v4829 = vsel %vm346, %v4794, 0
      %v4832 = vsel %vm346, %v4795, 0
      %v4835 = vsel %vm346, %v4796, 0
      %v4838 = vsel %vm346, %v4797, 0
      %v4841 = vsel %vm346, %v4798, 0
      %v4844 = vsel %vm346, %v4799, 0
      %v4847 = vsel %vm346, %v4800, 0
      %v4850 = vsel %vm346, %v4801, 0
      %v4853 = vsel %vm346, %v4802, 0
      %v4856 = vsel %vm346, %v4803, 0
      %v4859 = vsel %vm346, %v4804, 0
      %v4862 = vsel %vm346, %v4805, 0
      %v4865 = vsel %vm346, %v4806, 0
      %v4868 = vsel %vm346, %v4807, 0
      %v4871 = vsel %vm346, %v4808, 0
      %v4874 = vsel %vm346, %v4809, 0
      %v4877 = vsel %vm346, %v4810, 0
      %v4880 = vsel %vm346, %v4811, 0
      %v4883 = vsel %vm346, %v4812, 0
      %v4886 = vsel %vm346, %v4813, 0
      %v4889 = vsel %vm346, %v4814, 0
      %v4892 = vsel %vm346, %v4815, 0
      %v4895 = vsel %vm346, %v4816, 0
      %v4898 = vsel %vm346, %v4817, 0
      %v4901 = vsel %vm346, %v4818, 0
      %v4904 = vsel %vm346, %v4819, 0
      %v4907 = vsel %vm346, %v4820, 0
      %v4910 = vsel %vm346, %v4821, 0
      %v4913 = vsel %vm346, %v4822, 0
      %v4916 = vsel %vm346, %v4823, 0
      %v4919 = vsel %vm346, %v4824, 0
      %v4922 = vsel %vm346, %v4825, 0
      %v4925 = vsel %vm443, %v4827, 0
      %4927 = vmatpush.msra.mxu0 0.0
      %4928 = vmatpush.msra.mxu0 0.0
      %4929 = vmatpush.msra.mxu0 0.0
      %4930 = vmatpush.msra.mxu0 0.0
      %4931 = vmatpush.msra.mxu0 0.0
      %4932 = vmatpush.msra.mxu0 0.0
      %4933 = vmatpush.msra.mxu0 0.0
      %4934 = vmatpush.msra.mxu0 0.0
      %4935 = vmatpush.msra.mxu0 0.0
      %4936 = vmatpush.msra.mxu0 0.0
      %4937 = vmatpush.msra.mxu0 0.0
      %4938 = vmatpush.msra.mxu0 0.0
      %4939 = vmatpush.msra.mxu0 0.0
      %4940 = vmatpush.msra.mxu0 0.0
      %4941 = vmatpush.msra.mxu0 0.0
      %4942 = vmatpush.msra.mxu0 %v4925
      %4943 = vmatmul.f32.gmra.mxu0 %v4829
      %v4944 = vpop.f32.mrf.mxu0
      %v4945 = vadd.f32 0.0, %v4944
      %4946 = vmatmul.f32.gmra.mxu0 %v4832
      %v4947 = vpop.f32.mrf.mxu0
      %v4948 = vadd.f32 0.0, %v4947
      %4949 = vmatmul.f32.gmra.mxu0 %v4835
      %v4950 = vpop.f32.mrf.mxu0
      %v4951 = vadd.f32 0.0, %v4950
      %4952 = vmatmul.f32.gmra.mxu0 %v4838
      %v4953 = vpop.f32.mrf.mxu0
      %v4954 = vadd.f32 0.0, %v4953
      %4955 = vmatmul.f32.gmra.mxu0 %v4841
      %v4956 = vpop.f32.mrf.mxu0
      %v4957 = vadd.f32 0.0, %v4956
      %4958 = vmatmul.f32.gmra.mxu0 %v4844
      %v4959 = vpop.f32.mrf.mxu0
      %v4960 = vadd.f32 0.0, %v4959
      %4961 = vmatmul.f32.gmra.mxu0 %v4847
      %v4962 = vpop.f32.mrf.mxu0
      %v4963 = vadd.f32 0.0, %v4962
      %4964 = vmatmul.f32.gmra.mxu0 %v4850
      %v4965 = vpop.f32.mrf.mxu0
      %v4966 = vadd.f32 0.0, %v4965
      %4967 = vmatmul.f32.gmra.mxu0 %v4853
      %v4968 = vpop.f32.mrf.mxu0
      %v4969 = vadd.f32 0.0, %v4968
      %4970 = vmatmul.f32.gmra.mxu0 %v4856
      %v4971 = vpop.f32.mrf.mxu0
      %v4972 = vadd.f32 0.0, %v4971
      %4973 = vmatmul.f32.gmra.mxu0 %v4859
      %v4974 = vpop.f32.mrf.mxu0
      %v4975 = vadd.f32 0.0, %v4974
      %4976 = vmatmul.f32.gmra.mxu0 %v4862
      %v4977 = vpop.f32.mrf.mxu0
      %v4978 = vadd.f32 0.0, %v4977
      %4979 = vmatmul.f32.gmra.mxu0 %v4865
      %v4980 = vpop.f32.mrf.mxu0
      %v4981 = vadd.f32 0.0, %v4980
      %4982 = vmatmul.f32.gmra.mxu0 %v4868
      %v4983 = vpop.f32.mrf.mxu0
      %v4984 = vadd.f32 0.0, %v4983
      %4985 = vmatmul.f32.gmra.mxu0 %v4871
      %v4986 = vpop.f32.mrf.mxu0
      %v4987 = vadd.f32 0.0, %v4986
      %4988 = vmatmul.f32.gmra.mxu0 %v4874
      %v4989 = vpop.f32.mrf.mxu0
      %v4990 = vadd.f32 0.0, %v4989
      %4991 = vmatmul.f32.gmra.mxu0 %v4877
      %v4992 = vpop.f32.mrf.mxu0
      %v4993 = vadd.f32 0.0, %v4992
      %4994 = vmatmul.f32.gmra.mxu0 %v4880
      %v4995 = vpop.f32.mrf.mxu0
      %v4996 = vadd.f32 0.0, %v4995
      %4997 = vmatmul.f32.gmra.mxu0 %v4883
      %v4998 = vpop.f32.mrf.mxu0
      %v4999 = vadd.f32 0.0, %v4998
      %5000 = vmatmul.f32.gmra.mxu0 %v4886
      %v5001 = vpop.f32.mrf.mxu0
      %v5002 = vadd.f32 0.0, %v5001
      %5003 = vmatmul.f32.gmra.mxu0 %v4889
      %v5004 = vpop.f32.mrf.mxu0
      %v5005 = vadd.f32 0.0, %v5004
      %5006 = vmatmul.f32.gmra.mxu0 %v4892
      %v5007 = vpop.f32.mrf.mxu0
      %v5008 = vadd.f32 0.0, %v5007
      %5009 = vmatmul.f32.gmra.mxu0 %v4895
      %v5010 = vpop.f32.mrf.mxu0
      %v5011 = vadd.f32 0.0, %v5010
      %5012 = vmatmul.f32.gmra.mxu0 %v4898
      %v5013 = vpop.f32.mrf.mxu0
      %v5014 = vadd.f32 0.0, %v5013
      %5015 = vmatmul.f32.gmra.mxu0 %v4901
      %v5016 = vpop.f32.mrf.mxu0
      %v5017 = vadd.f32 0.0, %v5016
      %5018 = vmatmul.f32.gmra.mxu0 %v4904
      %v5019 = vpop.f32.mrf.mxu0
      %v5020 = vadd.f32 0.0, %v5019
      %5021 = vmatmul.f32.gmra.mxu0 %v4907
      %v5022 = vpop.f32.mrf.mxu0
      %v5023 = vadd.f32 0.0, %v5022
      %5024 = vmatmul.f32.gmra.mxu0 %v4910
      %v5025 = vpop.f32.mrf.mxu0
      %v5026 = vadd.f32 0.0, %v5025
      %5027 = vmatmul.f32.gmra.mxu0 %v4913
      %v5028 = vpop.f32.mrf.mxu0
      %v5029 = vadd.f32 0.0, %v5028
      %5030 = vmatmul.f32.gmra.mxu0 %v4916
      %v5031 = vpop.f32.mrf.mxu0
      %v5032 = vadd.f32 0.0, %v5031
      %5033 = vmatmul.f32.gmra.mxu0 %v4919
      %v5034 = vpop.f32.mrf.mxu0
      %v5035 = vadd.f32 0.0, %v5034
      %5036 = vmatmul.f32.gmra.mxu0 %v4922
      %v5037 = vpop.f32.mrf.mxu0
      %v5038 = vadd.f32 0.0, %v5037
      %5039 = vdwg.mxu0
      %v5040 = vadd.f32 %v4762, %v4945
      %v5041 = vadd.f32 %v4763, %v4948
      %v5042 = vadd.f32 %v4764, %v4951
      %v5043 = vadd.f32 %v4765, %v4954
      %v5044 = vadd.f32 %v4766, %v4957
      %v5045 = vadd.f32 %v4767, %v4960
      %v5046 = vadd.f32 %v4768, %v4963
      %v5047 = vadd.f32 %v4769, %v4966
      %v5048 = vadd.f32 %v4770, %v4969
      %v5049 = vadd.f32 %v4771, %v4972
      %v5050 = vadd.f32 %v4772, %v4975
      %v5051 = vadd.f32 %v4773, %v4978
      %v5052 = vadd.f32 %v4774, %v4981
      %v5053 = vadd.f32 %v4775, %v4984
      %v5054 = vadd.f32 %v4776, %v4987
      %v5055 = vadd.f32 %v4777, %v4990
      %v5056 = vadd.f32 %v4778, %v4993
      %v5057 = vadd.f32 %v4779, %v4996
      %v5058 = vadd.f32 %v4780, %v4999
      %v5059 = vadd.f32 %v4781, %v5002
      %v5060 = vadd.f32 %v4782, %v5005
      %v5061 = vadd.f32 %v4783, %v5008
      %v5062 = vadd.f32 %v4784, %v5011
      %v5063 = vadd.f32 %v4785, %v5014
      %v5064 = vadd.f32 %v4786, %v5017
      %v5065 = vadd.f32 %v4787, %v5020
      %v5066 = vadd.f32 %v4788, %v5023
      %v5067 = vadd.f32 %v4789, %v5026
      %v5068 = vadd.f32 %v4790, %v5029
      %v5069 = vadd.f32 %v4791, %v5032
      %v5070 = vadd.f32 %v4792, %v5035
      %v5071 = vadd.f32 %v4793, %v5038
      %v5072 = vld [vmem:[%s4515 + $0x2] sm:$0xff]
      %v5073 = vld [vmem:[%s4515 + $0xa] sm:$0xff]
      %v5074 = vld [vmem:[%s4515 + $0x1a] sm:$0xff]
      %v5075 = vld [vmem:[%s4515 + $0x22] sm:$0xff]
      %v5076 = vld [vmem:[%s4515 + $0x32] sm:$0xff]
      %v5077 = vld [vmem:[%s4515 + $0x3a] sm:$0xff]
      %v5078 = vld [vmem:[%s4515 + $0x4a] sm:$0xff]
      %v5079 = vld [vmem:[%s4515 + $0x52] sm:$0xff]
      %v5080 = vld [vmem:[%s4515 + $0x62] sm:$0xff]
      %v5081 = vld [vmem:[%s4515 + $0x6a] sm:$0xff]
      %v5082 = vld [vmem:[%s4515 + $0x7a] sm:$0xff]
      %v5083 = vld [vmem:[%s4515 + $0x82] sm:$0xff]
      %v5084 = vld [vmem:[%s4515 + $0x92] sm:$0xff]
      %v5085 = vld [vmem:[%s4515 + $0x9a] sm:$0xff]
      %v5086 = vld [vmem:[%s4515 + $0xaa] sm:$0xff]
      %v5087 = vld [vmem:[%s4515 + $0xb2] sm:$0xff]
      %v5088 = vld [vmem:[%s4515 + $0xc2] sm:$0xff]
      %v5089 = vld [vmem:[%s4515 + $0xca] sm:$0xff]
      %v5090 = vld [vmem:[%s4515 + $0xda] sm:$0xff]
      %v5091 = vld [vmem:[%s4515 + $0xe2] sm:$0xff]
      %v5092 = vld [vmem:[%s4515 + $0xf2] sm:$0xff]
      %v5093 = vld [vmem:[%s4515 + $0xfa] sm:$0xff]
      %v5094 = vld [vmem:[%s4515 + $0x10a] sm:$0xff]
      %v5095 = vld [vmem:[%s4515 + $0x112] sm:$0xff]
      %v5096 = vld [vmem:[%s4515 + $0x122] sm:$0xff]
      %v5097 = vld [vmem:[%s4515 + $0x12a] sm:$0xff]
      %v5098 = vld [vmem:[%s4515 + $0x13a] sm:$0xff]
      %v5099 = vld [vmem:[%s4515 + $0x142] sm:$0xff]
      %v5100 = vld [vmem:[%s4515 + $0x152] sm:$0xff]
      %v5101 = vld [vmem:[%s4515 + $0x15a] sm:$0xff]
      %v5102 = vld [vmem:[%s4515 + $0x16a] sm:$0xff]
      %v5103 = vld [vmem:[%s4515 + $0x172] sm:$0xff]
      %s5104 = scalar_lea.vmem %s4, 32
      %v5105 = vld [vmem:[%s5104] sm:$0xf]
      %v5107 = vsel %vm346, %v5072, 0
      %v5110 = vsel %vm346, %v5073, 0
      %v5113 = vsel %vm346, %v5074, 0
      %v5116 = vsel %vm346, %v5075, 0
      %v5119 = vsel %vm346, %v5076, 0
      %v5122 = vsel %vm346, %v5077, 0
      %v5125 = vsel %vm346, %v5078, 0
      %v5128 = vsel %vm346, %v5079, 0
      %v5131 = vsel %vm346, %v5080, 0
      %v5134 = vsel %vm346, %v5081, 0
      %v5137 = vsel %vm346, %v5082, 0
      %v5140 = vsel %vm346, %v5083, 0
      %v5143 = vsel %vm346, %v5084, 0
      %v5146 = vsel %vm346, %v5085, 0
      %v5149 = vsel %vm346, %v5086, 0
      %v5152 = vsel %vm346, %v5087, 0
      %v5155 = vsel %vm346, %v5088, 0
      %v5158 = vsel %vm346, %v5089, 0
      %v5161 = vsel %vm346, %v5090, 0
      %v5164 = vsel %vm346, %v5091, 0
      %v5167 = vsel %vm346, %v5092, 0
      %v5170 = vsel %vm346, %v5093, 0
      %v5173 = vsel %vm346, %v5094, 0
      %v5176 = vsel %vm346, %v5095, 0
      %v5179 = vsel %vm346, %v5096, 0
      %v5182 = vsel %vm346, %v5097, 0
      %v5185 = vsel %vm346, %v5098, 0
      %v5188 = vsel %vm346, %v5099, 0
      %v5191 = vsel %vm346, %v5100, 0
      %v5194 = vsel %vm346, %v5101, 0
      %v5197 = vsel %vm346, %v5102, 0
      %v5200 = vsel %vm346, %v5103, 0
      %v5203 = vsel %vm443, %v5105, 0
      %5205 = vmatpush.msra.mxu0 0.0
      %5206 = vmatpush.msra.mxu0 0.0
      %5207 = vmatpush.msra.mxu0 0.0
      %5208 = vmatpush.msra.mxu0 0.0
      %5209 = vmatpush.msra.mxu0 0.0
      %5210 = vmatpush.msra.mxu0 0.0
      %5211 = vmatpush.msra.mxu0 0.0
      %5212 = vmatpush.msra.mxu0 0.0
      %5213 = vmatpush.msra.mxu0 0.0
      %5214 = vmatpush.msra.mxu0 0.0
      %5215 = vmatpush.msra.mxu0 0.0
      %5216 = vmatpush.msra.mxu0 0.0
      %5217 = vmatpush.msra.mxu0 0.0
      %5218 = vmatpush.msra.mxu0 0.0
      %5219 = vmatpush.msra.mxu0 0.0
      %5220 = vmatpush.msra.mxu0 %v5203
      %5221 = vmatmul.f32.gmra.mxu0 %v5107
      %v5222 = vpop.f32.mrf.mxu0
      %v5223 = vadd.f32 0.0, %v5222
      %5224 = vmatmul.f32.gmra.mxu0 %v5110
      %v5225 = vpop.f32.mrf.mxu0
      %v5226 = vadd.f32 0.0, %v5225
      %5227 = vmatmul.f32.gmra.mxu0 %v5113
      %v5228 = vpop.f32.mrf.mxu0
      %v5229 = vadd.f32 0.0, %v5228
      %5230 = vmatmul.f32.gmra.mxu0 %v5116
      %v5231 = vpop.f32.mrf.mxu0
      %v5232 = vadd.f32 0.0, %v5231
      %5233 = vmatmul.f32.gmra.mxu0 %v5119
      %v5234 = vpop.f32.mrf.mxu0
      %v5235 = vadd.f32 0.0, %v5234
      %5236 = vmatmul.f32.gmra.mxu0 %v5122
      %v5237 = vpop.f32.mrf.mxu0
      %v5238 = vadd.f32 0.0, %v5237
      %5239 = vmatmul.f32.gmra.mxu0 %v5125
      %v5240 = vpop.f32.mrf.mxu0
      %v5241 = vadd.f32 0.0, %v5240
      %5242 = vmatmul.f32.gmra.mxu0 %v5128
      %v5243 = vpop.f32.mrf.mxu0
      %v5244 = vadd.f32 0.0, %v5243
      %5245 = vmatmul.f32.gmra.mxu0 %v5131
      %v5246 = vpop.f32.mrf.mxu0
      %v5247 = vadd.f32 0.0, %v5246
      %5248 = vmatmul.f32.gmra.mxu0 %v5134
      %v5249 = vpop.f32.mrf.mxu0
      %v5250 = vadd.f32 0.0, %v5249
      %5251 = vmatmul.f32.gmra.mxu0 %v5137
      %v5252 = vpop.f32.mrf.mxu0
      %v5253 = vadd.f32 0.0, %v5252
      %5254 = vmatmul.f32.gmra.mxu0 %v5140
      %v5255 = vpop.f32.mrf.mxu0
      %v5256 = vadd.f32 0.0, %v5255
      %5257 = vmatmul.f32.gmra.mxu0 %v5143
      %v5258 = vpop.f32.mrf.mxu0
      %v5259 = vadd.f32 0.0, %v5258
      %5260 = vmatmul.f32.gmra.mxu0 %v5146
      %v5261 = vpop.f32.mrf.mxu0
      %v5262 = vadd.f32 0.0, %v5261
      %5263 = vmatmul.f32.gmra.mxu0 %v5149
      %v5264 = vpop.f32.mrf.mxu0
      %v5265 = vadd.f32 0.0, %v5264
      %5266 = vmatmul.f32.gmra.mxu0 %v5152
      %v5267 = vpop.f32.mrf.mxu0
      %v5268 = vadd.f32 0.0, %v5267
      %5269 = vmatmul.f32.gmra.mxu0 %v5155
      %v5270 = vpop.f32.mrf.mxu0
      %v5271 = vadd.f32 0.0, %v5270
      %5272 = vmatmul.f32.gmra.mxu0 %v5158
      %v5273 = vpop.f32.mrf.mxu0
      %v5274 = vadd.f32 0.0, %v5273
      %5275 = vmatmul.f32.gmra.mxu0 %v5161
      %v5276 = vpop.f32.mrf.mxu0
      %v5277 = vadd.f32 0.0, %v5276
      %5278 = vmatmul.f32.gmra.mxu0 %v5164
      %v5279 = vpop.f32.mrf.mxu0
      %v5280 = vadd.f32 0.0, %v5279
      %5281 = vmatmul.f32.gmra.mxu0 %v5167
      %v5282 = vpop.f32.mrf.mxu0
      %v5283 = vadd.f32 0.0, %v5282
      %5284 = vmatmul.f32.gmra.mxu0 %v5170
      %v5285 = vpop.f32.mrf.mxu0
      %v5286 = vadd.f32 0.0, %v5285
      %5287 = vmatmul.f32.gmra.mxu0 %v5173
      %v5288 = vpop.f32.mrf.mxu0
      %v5289 = vadd.f32 0.0, %v5288
      %5290 = vmatmul.f32.gmra.mxu0 %v5176
      %v5291 = vpop.f32.mrf.mxu0
      %v5292 = vadd.f32 0.0, %v5291
      %5293 = vmatmul.f32.gmra.mxu0 %v5179
      %v5294 = vpop.f32.mrf.mxu0
      %v5295 = vadd.f32 0.0, %v5294
      %5296 = vmatmul.f32.gmra.mxu0 %v5182
      %v5297 = vpop.f32.mrf.mxu0
      %v5298 = vadd.f32 0.0, %v5297
      %5299 = vmatmul.f32.gmra.mxu0 %v5185
      %v5300 = vpop.f32.mrf.mxu0
      %v5301 = vadd.f32 0.0, %v5300
      %5302 = vmatmul.f32.gmra.mxu0 %v5188
      %v5303 = vpop.f32.mrf.mxu0
      %v5304 = vadd.f32 0.0, %v5303
      %5305 = vmatmul.f32.gmra.mxu0 %v5191
      %v5306 = vpop.f32.mrf.mxu0
      %v5307 = vadd.f32 0.0, %v5306
      %5308 = vmatmul.f32.gmra.mxu0 %v5194
      %v5309 = vpop.f32.mrf.mxu0
      %v5310 = vadd.f32 0.0, %v5309
      %5311 = vmatmul.f32.gmra.mxu0 %v5197
      %v5312 = vpop.f32.mrf.mxu0
      %v5313 = vadd.f32 0.0, %v5312
      %5314 = vmatmul.f32.gmra.mxu0 %v5200
      %v5315 = vpop.f32.mrf.mxu0
      %v5316 = vadd.f32 0.0, %v5315
      %5317 = vdwg.mxu0
      %v5318 = vadd.f32 %v5040, %v5223
      %v5319 = vadd.f32 %v5041, %v5226
      %v5320 = vadd.f32 %v5042, %v5229
      %v5321 = vadd.f32 %v5043, %v5232
      %v5322 = vadd.f32 %v5044, %v5235
      %v5323 = vadd.f32 %v5045, %v5238
      %v5324 = vadd.f32 %v5046, %v5241
      %v5325 = vadd.f32 %v5047, %v5244
      %v5326 = vadd.f32 %v5048, %v5247
      %v5327 = vadd.f32 %v5049, %v5250
      %v5328 = vadd.f32 %v5050, %v5253
      %v5329 = vadd.f32 %v5051, %v5256
      %v5330 = vadd.f32 %v5052, %v5259
      %v5331 = vadd.f32 %v5053, %v5262
      %v5332 = vadd.f32 %v5054, %v5265
      %v5333 = vadd.f32 %v5055, %v5268
      %v5334 = vadd.f32 %v5056, %v5271
      %v5335 = vadd.f32 %v5057, %v5274
      %v5336 = vadd.f32 %v5058, %v5277
      %v5337 = vadd.f32 %v5059, %v5280
      %v5338 = vadd.f32 %v5060, %v5283
      %v5339 = vadd.f32 %v5061, %v5286
      %v5340 = vadd.f32 %v5062, %v5289
      %v5341 = vadd.f32 %v5063, %v5292
      %v5342 = vadd.f32 %v5064, %v5295
      %v5343 = vadd.f32 %v5065, %v5298
      %v5344 = vadd.f32 %v5066, %v5301
      %v5345 = vadd.f32 %v5067, %v5304
      %v5346 = vadd.f32 %v5068, %v5307
      %v5347 = vadd.f32 %v5069, %v5310
      %v5348 = vadd.f32 %v5070, %v5313
      %v5349 = vadd.f32 %v5071, %v5316
      %v5350 = vld [vmem:[%s5] sm:$0x1]
      %v5352 = vperm.slane %v5350, 0
      %v5354 = vmul.f32 %v5318, %v5352
      %v5355 = vmul.f32 %v5319, %v5352
      %v5356 = vmul.f32 %v5320, %v5352
      %v5357 = vmul.f32 %v5321, %v5352
      %v5358 = vmul.f32 %v5322, %v5352
      %v5359 = vmul.f32 %v5323, %v5352
      %v5360 = vmul.f32 %v5324, %v5352
      %v5361 = vmul.f32 %v5325, %v5352
      %v5362 = vmul.f32 %v5326, %v5352
      %v5363 = vmul.f32 %v5327, %v5352
      %v5364 = vmul.f32 %v5328, %v5352
      %v5365 = vmul.f32 %v5329, %v5352
      %v5366 = vmul.f32 %v5330, %v5352
      %v5367 = vmul.f32 %v5331, %v5352
      %v5368 = vmul.f32 %v5332, %v5352
      %v5369 = vmul.f32 %v5333, %v5352
      %v5370 = vmul.f32 %v5334, %v5352
      %v5371 = vmul.f32 %v5335, %v5352
      %v5372 = vmul.f32 %v5336, %v5352
      %v5373 = vmul.f32 %v5337, %v5352
      %v5374 = vmul.f32 %v5338, %v5352
      %v5375 = vmul.f32 %v5339, %v5352
      %v5376 = vmul.f32 %v5340, %v5352
      %v5377 = vmul.f32 %v5341, %v5352
      %v5378 = vmul.f32 %v5342, %v5352
      %v5379 = vmul.f32 %v5343, %v5352
      %v5380 = vmul.f32 %v5344, %v5352
      %v5381 = vmul.f32 %v5345, %v5352
      %v5382 = vmul.f32 %v5346, %v5352
      %v5383 = vmul.f32 %v5347, %v5352
      %v5384 = vmul.f32 %v5348, %v5352
      %v5385 = vmul.f32 %v5349, %v5352
      %v5386 = vld [vmem:[%s6] sm:$0x1]
      %v5388 = vperm.slane %v5386, 0
      %v5390 = vadd.f32 %v5354, %v5388
      %v5391 = vadd.f32 %v5355, %v5388
      %v5392 = vadd.f32 %v5356, %v5388
      %v5393 = vadd.f32 %v5357, %v5388
      %v5394 = vadd.f32 %v5358, %v5388
      %v5395 = vadd.f32 %v5359, %v5388
      %v5396 = vadd.f32 %v5360, %v5388
      %v5397 = vadd.f32 %v5361, %v5388
      %v5398 = vadd.f32 %v5362, %v5388
      %v5399 = vadd.f32 %v5363, %v5388
      %v5400 = vadd.f32 %v5364, %v5388
      %v5401 = vadd.f32 %v5365, %v5388
      %v5402 = vadd.f32 %v5366, %v5388
      %v5403 = vadd.f32 %v5367, %v5388
      %v5404 = vadd.f32 %v5368, %v5388
      %v5405 = vadd.f32 %v5369, %v5388
      %v5406 = vadd.f32 %v5370, %v5388
      %v5407 = vadd.f32 %v5371, %v5388
      %v5408 = vadd.f32 %v5372, %v5388
      %v5409 = vadd.f32 %v5373, %v5388
      %v5410 = vadd.f32 %v5374, %v5388
      %v5411 = vadd.f32 %v5375, %v5388
      %v5412 = vadd.f32 %v5376, %v5388
      %v5413 = vadd.f32 %v5377, %v5388
      %v5414 = vadd.f32 %v5378, %v5388
      %v5415 = vadd.f32 %v5379, %v5388
      %v5416 = vadd.f32 %v5380, %v5388
      %v5417 = vadd.f32 %v5381, %v5388
      %v5418 = vadd.f32 %v5382, %v5388
      %v5419 = vadd.f32 %v5383, %v5388
      %v5420 = vadd.f32 %v5384, %v5388
      %v5421 = vadd.f32 %v5385, %v5388
      %v5422 = vld [vmem:[%s1050 + $0x1] sm:$0xff]
      %v5423 = vld [vmem:[%s1050 + $0x9] sm:$0xff]
      %v5424 = vld [vmem:[%s1050 + $0x19] sm:$0xff]
      %v5425 = vld [vmem:[%s1050 + $0x21] sm:$0xff]
      %v5426 = vld [vmem:[%s1050 + $0x31] sm:$0xff]
      %v5427 = vld [vmem:[%s1050 + $0x39] sm:$0xff]
      %v5428 = vld [vmem:[%s1050 + $0x49] sm:$0xff]
      %v5429 = vld [vmem:[%s1050 + $0x51] sm:$0xff]
      %v5430 = vld [vmem:[%s1050 + $0x61] sm:$0xff]
      %v5431 = vld [vmem:[%s1050 + $0x69] sm:$0xff]
      %v5432 = vld [vmem:[%s1050 + $0x79] sm:$0xff]
      %v5433 = vld [vmem:[%s1050 + $0x81] sm:$0xff]
      %v5434 = vld [vmem:[%s1050 + $0x91] sm:$0xff]
      %v5435 = vld [vmem:[%s1050 + $0x99] sm:$0xff]
      %v5436 = vld [vmem:[%s1050 + $0xa9] sm:$0xff]
      %v5437 = vld [vmem:[%s1050 + $0xb1] sm:$0xff]
      %v5438 = vld [vmem:[%s1050 + $0xc1] sm:$0xff]
      %v5439 = vld [vmem:[%s1050 + $0xc9] sm:$0xff]
      %v5440 = vld [vmem:[%s1050 + $0xd9] sm:$0xff]
      %v5441 = vld [vmem:[%s1050 + $0xe1] sm:$0xff]
      %v5442 = vld [vmem:[%s1050 + $0xf1] sm:$0xff]
      %v5443 = vld [vmem:[%s1050 + $0xf9] sm:$0xff]
      %v5444 = vld [vmem:[%s1050 + $0x109] sm:$0xff]
      %v5445 = vld [vmem:[%s1050 + $0x111] sm:$0xff]
      %v5446 = vld [vmem:[%s1050 + $0x121] sm:$0xff]
      %v5447 = vld [vmem:[%s1050 + $0x129] sm:$0xff]
      %v5448 = vld [vmem:[%s1050 + $0x139] sm:$0xff]
      %v5449 = vld [vmem:[%s1050 + $0x141] sm:$0xff]
      %v5450 = vld [vmem:[%s1050 + $0x151] sm:$0xff]
      %v5451 = vld [vmem:[%s1050 + $0x159] sm:$0xff]
      %v5452 = vld [vmem:[%s1050 + $0x169] sm:$0xff]
      %v5453 = vld [vmem:[%s1050 + $0x171] sm:$0xff]
      %v5454 = vadd.f32 %v5390, %v5422
      %v5455 = vadd.f32 %v5391, %v5423
      %v5456 = vadd.f32 %v5392, %v5424
      %v5457 = vadd.f32 %v5393, %v5425
      %v5458 = vadd.f32 %v5394, %v5426
      %v5459 = vadd.f32 %v5395, %v5427
      %v5460 = vadd.f32 %v5396, %v5428
      %v5461 = vadd.f32 %v5397, %v5429
      %v5462 = vadd.f32 %v5398, %v5430
      %v5463 = vadd.f32 %v5399, %v5431
      %v5464 = vadd.f32 %v5400, %v5432
      %v5465 = vadd.f32 %v5401, %v5433
      %v5466 = vadd.f32 %v5402, %v5434
      %v5467 = vadd.f32 %v5403, %v5435
      %v5468 = vadd.f32 %v5404, %v5436
      %v5469 = vadd.f32 %v5405, %v5437
      %v5470 = vadd.f32 %v5406, %v5438
      %v5471 = vadd.f32 %v5407, %v5439
      %v5472 = vadd.f32 %v5408, %v5440
      %v5473 = vadd.f32 %v5409, %v5441
      %v5474 = vadd.f32 %v5410, %v5442
      %v5475 = vadd.f32 %v5411, %v5443
      %v5476 = vadd.f32 %v5412, %v5444
      %v5477 = vadd.f32 %v5413, %v5445
      %v5478 = vadd.f32 %v5414, %v5446
      %v5479 = vadd.f32 %v5415, %v5447
      %v5480 = vadd.f32 %v5416, %v5448
      %v5481 = vadd.f32 %v5417, %v5449
      %v5482 = vadd.f32 %v5418, %v5450
      %v5483 = vadd.f32 %v5419, %v5451
      %v5484 = vadd.f32 %v5420, %v5452
      %v5485 = vadd.f32 %v5421, %v5453
      %v5486 = vmax.f32 %v5454, 0.0
      %v5487 = vmax.f32 %v5455, 0.0
      %v5488 = vmax.f32 %v5456, 0.0
      %v5489 = vmax.f32 %v5457, 0.0
      %v5490 = vmax.f32 %v5458, 0.0
      %v5491 = vmax.f32 %v5459, 0.0
      %v5492 = vmax.f32 %v5460, 0.0
      %v5493 = vmax.f32 %v5461, 0.0
      %v5494 = vmax.f32 %v5462, 0.0
      %v5495 = vmax.f32 %v5463, 0.0
      %v5496 = vmax.f32 %v5464, 0.0
      %v5497 = vmax.f32 %v5465, 0.0
      %v5498 = vmax.f32 %v5466, 0.0
      %v5499 = vmax.f32 %v5467, 0.0
      %v5500 = vmax.f32 %v5468, 0.0
      %v5501 = vmax.f32 %v5469, 0.0
      %v5502 = vmax.f32 %v5470, 0.0
      %v5503 = vmax.f32 %v5471, 0.0
      %v5504 = vmax.f32 %v5472, 0.0
      %v5505 = vmax.f32 %v5473, 0.0
      %v5506 = vmax.f32 %v5474, 0.0
      %v5507 = vmax.f32 %v5475, 0.0
      %v5508 = vmax.f32 %v5476, 0.0
      %v5509 = vmax.f32 %v5477, 0.0
      %v5510 = vmax.f32 %v5478, 0.0
      %v5511 = vmax.f32 %v5479, 0.0
      %v5512 = vmax.f32 %v5480, 0.0
      %v5513 = vmax.f32 %v5481, 0.0
      %v5514 = vmax.f32 %v5482, 0.0
      %v5515 = vmax.f32 %v5483, 0.0
      %v5516 = vmax.f32 %v5484, 0.0
      %v5517 = vmax.f32 %v5485, 0.0
      %5518 = vst.msk [vmem:[%s278] sm:$0xff] %vm346, %v5486
      %5519 = vst.msk [vmem:[%s278 + $0x8] sm:$0xff] %vm346, %v5487
      %5520 = vst.msk [vmem:[%s278 + $0x10] sm:$0xff] %vm346, %v5488
      %5521 = vst.msk [vmem:[%s278 + $0x18] sm:$0xff] %vm346, %v5489
      %5522 = vst.msk [vmem:[%s278 + $0x20] sm:$0xff] %vm346, %v5490
      %5523 = vst.msk [vmem:[%s278 + $0x28] sm:$0xff] %vm346, %v5491
      %5524 = vst.msk [vmem:[%s278 + $0x30] sm:$0xff] %vm346, %v5492
      %5525 = vst.msk [vmem:[%s278 + $0x38] sm:$0xff] %vm346, %v5493
      %5526 = vst.msk [vmem:[%s278 + $0x40] sm:$0xff] %vm346, %v5494
      %5527 = vst.msk [vmem:[%s278 + $0x48] sm:$0xff] %vm346, %v5495
      %5528 = vst.msk [vmem:[%s278 + $0x50] sm:$0xff] %vm346, %v5496
      %5529 = vst.msk [vmem:[%s278 + $0x58] sm:$0xff] %vm346, %v5497
      %5530 = vst.msk [vmem:[%s278 + $0x60] sm:$0xff] %vm346, %v5498
      %5531 = vst.msk [vmem:[%s278 + $0x68] sm:$0xff] %vm346, %v5499
      %5532 = vst.msk [vmem:[%s278 + $0x70] sm:$0xff] %vm346, %v5500
      %5533 = vst.msk [vmem:[%s278 + $0x78] sm:$0xff] %vm346, %v5501
      %5534 = vst.msk [vmem:[%s278 + $0x80] sm:$0xff] %vm346, %v5502
      %5535 = vst.msk [vmem:[%s278 + $0x88] sm:$0xff] %vm346, %v5503
      %5536 = vst.msk [vmem:[%s278 + $0x90] sm:$0xff] %vm346, %v5504
      %5537 = vst.msk [vmem:[%s278 + $0x98] sm:$0xff] %vm346, %v5505
      %5538 = vst.msk [vmem:[%s278 + $0xa0] sm:$0xff] %vm346, %v5506
      %5539 = vst.msk [vmem:[%s278 + $0xa8] sm:$0xff] %vm346, %v5507
      %5540 = vst.msk [vmem:[%s278 + $0xb0] sm:$0xff] %vm346, %v5508
      %5541 = vst.msk [vmem:[%s278 + $0xb8] sm:$0xff] %vm346, %v5509
      %5542 = vst.msk [vmem:[%s278 + $0xc0] sm:$0xff] %vm346, %v5510
      %5543 = vst.msk [vmem:[%s278 + $0xc8] sm:$0xff] %vm346, %v5511
      %5544 = vst.msk [vmem:[%s278 + $0xd0] sm:$0xff] %vm346, %v5512
      %5545 = vst.msk [vmem:[%s278 + $0xd8] sm:$0xff] %vm346, %v5513
      %5546 = vst.msk [vmem:[%s278 + $0xe0] sm:$0xff] %vm346, %v5514
      %5547 = vst.msk [vmem:[%s278 + $0xe8] sm:$0xff] %vm346, %v5515
      %5548 = vst.msk [vmem:[%s278 + $0xf0] sm:$0xff] %vm346, %v5516
      %5549 = vst.msk [vmem:[%s278 + $0xf8] sm:$0xff] %vm346, %v5517
      %p5550 = scmp.lt.s32.totalorder %s18, 1
      %s5551 = scalar_select %p5550, %s18, 1
      %s5552 = smul.addr %s5551, 32
      %s5553 = smul.addr %s5552, 8
      %s5554 = scalar_lea.vmem %s7, %s5553
      // Predicated region
      $region49: #{tpu_custom_call.1} parent=47 // pred_check
        %p5555 = pneg %p188
      $region50: #{tpu_custom_call.1} parent=47 // pred_check_branch
        %5557 = sbr.rel (%p5555) target = $region52
      $region51: #{tpu_custom_call.1} parent=47 // pred_region
        _
      $region52: #{tpu_custom_call.1} parent=47 // pred_fallthru
        _
    $region48: #{tpu_custom_call.1} parent=5 // pred_fallthru
      _
    %p5558 = scmp.le.s32.totalorder 2, %s13
    // Predicated region
    $region53: #{tpu_custom_call.1} parent=5 // pred_check
      %p5559 = pneg %p5558
    $region54: #{tpu_custom_call.1} parent=5 // pred_check_branch
      %5561 = sbr.rel (%p5559) target = $region56
    $region55: #{tpu_custom_call.1} parent=5 // pred_region
      %s5562 = ssub.s32 %s13, 2
      // Predicated region
      $region57: #{tpu_custom_call.1} parent=55 // pred_check
        %p5563 = pneg %p194
      $region58: #{tpu_custom_call.1} parent=55 // pred_check_branch
        %5565 = sbr.rel (%p5563) target = $region60
      $region59: #{tpu_custom_call.1} parent=55 // pred_region
        %p5566 = scmp.lt.s32.totalorder %s19, 1
        %s5567 = scalar_select %p5566, %s19, 1
        %s5568 = smul.addr %s5567, 32
        %s5569 = smul.addr %s5568, 8
        %s5570 = scalar_lea.vmem %s7, %s5569
      $region60: #{tpu_custom_call.1} parent=55 // pred_fallthru
        _
    $region56: #{tpu_custom_call.1} parent=5 // pred_fallthru
      _
  $region6: #{tpu_custom_call.1} parent=0 // loop_footer
    %s17 = sadd.s32 1, %s13
  $region7: #{tpu_custom_call.1} parent=0 // loop_footer_branch
    %12 = sbr.rel target = $region3
  $region8: #{tpu_custom_call.1} parent=0 // loop_exit
    _

</llo_original>
